<compile_context>
chip_gen: v7x
topology: tpu7x:2x2x1
jax: 0.10.0
libtpu: 0.0.40
codegen_flags: <defaults>
</compile_context>

<pallas_src>
import functools

import numpy as np

import jax
import jax.numpy as jnp
from jax.experimental import pallas as pl
from jax.experimental.pallas import tpu as pltpu

BF16 = jnp.bfloat16
F32 = jnp.float32


def _lenet_kernel(x_ref, w1_ref, b1_ref, sel1_ref, w2_ref, b2_ref, sel2_ref,
                  wf1_ref, bf1_ref, wf2_ref, bf2_ref, wf3_ref, bf3_ref,
                  o_ref, *, batch):
    B = batch
    R1 = B * 32          # conv1 rows per step (32 / image, rows 0..27 valid)
    R2 = B * 16          # conv2 rows per step (16 / image, rows 0..9 valid)

    # ---- conv1 (3->6, 5x5, valid): ONE merged-K matmul, K = 5*128 ----------
    # x block: (B*32, 128) bf16, cols = c*32 + w (lanes 96..127 are zero).
    x2d = x_ref[...]
    xz = jnp.concatenate([x2d, jnp.zeros((8, 128), BF16)], axis=0)
    # 5 kh-shifted row windows, lane-concatenated at 128-aligned offsets.
    lhs1 = jnp.concatenate([xz[kh:kh + R1, :] for kh in range(5)], axis=1)
    y1 = jnp.dot(lhs1, w1_ref[...], preferred_element_type=F32) + b1_ref[...]
    y1 = jnp.maximum(y1, 0.0)                       # (R1, 168): col = 6*wo + c

    # ---- 2x2 maxpool: row-pair max, lane-pair max, 0/1 row compaction ------
    hmax1 = jnp.maximum(y1[0:R1 - 1, :], y1[1:R1, :])
    wmax1 = jnp.maximum(hmax1[:, 0:162], hmax1[:, 6:168]).astype(BF16)
    # sel1 picks rows 2*j (j < 14) of each 32-row image block -> 16-row blocks
    p1 = jnp.dot(sel1_ref[...], wmax1, preferred_element_type=F32)
    p1 = p1.astype(BF16)                            # (R2, 162): col = 12*wp + c
    p1z = jnp.concatenate([p1, jnp.zeros((8, 162), BF16)], axis=0)

    # ---- conv2 (6->16, 5x5, valid): 5 accumulated dots, K = 162 ------------
    acc2 = jnp.broadcast_to(b2_ref[...], (R2, 160))         # bias in acc init
    for kh in range(5):
        acc2 = acc2 + jnp.dot(p1z[kh:kh + R2, :], w2_ref[kh],
                              preferred_element_type=F32)
    y2 = jnp.maximum(acc2, 0.0)                     # (R2, 160): col = 16*wo + c

    # ---- 2x2 maxpool fused with the fc1 row gather --------------------------
    hmax2 = jnp.maximum(y2[0:R2 - 1, :], y2[1:R2, :])
    wmax2 = jnp.maximum(hmax2[:, 0:144], hmax2[:, 16:160]).astype(BF16)
    # sel2 row h*B + b = pooled row h of image b  -> (5*B, 144), col = 32*w + c
    pf = jnp.dot(sel2_ref[...], wmax2, preferred_element_type=F32)
    pf = pf.astype(BF16)

    # ---- fc1 -> relu -> fc2 -> relu -> fc3 (lane dims padded to 128) --------
    h1 = jnp.broadcast_to(bf1_ref[...], (B, 128))            # bias in acc init
    for h in range(5):
        h1 = h1 + jnp.dot(pf[h * B:(h + 1) * B, :], wf1_ref[h],
                          preferred_element_type=F32)
    h1 = jnp.maximum(h1, 0.0)

    h2 = jnp.dot(h1.astype(BF16), wf2_ref[...],
                 preferred_element_type=F32) + bf2_ref[...]
    h2 = jnp.maximum(h2, 0.0)

    out = jnp.dot(h2.astype(BF16), wf3_ref[...],
                  preferred_element_type=F32) + bf3_ref[...]
    o_ref[...] = out.astype(o_ref.dtype)            # lane-dense (B, 128) store


def net_forward(x, packed):
    """x: (N, 3, 32, 32) f32 NCHW (PyTorch layout); packed = pack_params(...)."""
    (w1, b1, sel1, w2, b2, sel2, wf1, bf1, wf2, bf2, wf3, bf3) = packed
    B = sel1.shape[0] // 16                         # images per grid step
    n = x.shape[0]
    n_pad = ((n + B - 1) // B) * B
    if n_pad != n:                                  # tail handling (n % B != 0)
        x = jnp.pad(x, ((0, n_pad - n), (0, 0), (0, 0), (0, 0)))

    # Layout plumbing only (no compute hoisted): fold channels into lanes
    # (col = c*32 + w), pad to 128 lanes, cast to bf16 once.
    xs = jnp.transpose(x, (0, 2, 1, 3)).reshape(n_pad, 32, 96)
    xs = jnp.pad(xs, ((0, 0), (0, 0), (0, 32)))
    xs = xs.reshape(n_pad * 32, 128).astype(BF16)

    kernel = functools.partial(_lenet_kernel, batch=B)
    out = pl.pallas_call(
        kernel,
        out_shape=jax.ShapeDtypeStruct((n_pad, 128), F32),
        grid=(n_pad // B,),
        in_specs=[
            pl.BlockSpec((B * 32, 128), lambda i: (i, 0)),        # x slab
            pl.BlockSpec((640, 168), lambda i: (0, 0)),           # w1 (merged K)
            pl.BlockSpec((1, 168), lambda i: (0, 0)),             # b1
            pl.BlockSpec((B * 16, B * 32 - 1), lambda i: (0, 0)),  # sel1
            pl.BlockSpec((5, 162, 160), lambda i: (0, 0, 0)),     # w2
            pl.BlockSpec((1, 160), lambda i: (0, 0)),             # b2
            pl.BlockSpec((5 * B, B * 16 - 1), lambda i: (0, 0)),  # sel2
            pl.BlockSpec((5, 144, 128), lambda i: (0, 0, 0)),     # wf1
            pl.BlockSpec((1, 128), lambda i: (0, 0)),             # bf1
            pl.BlockSpec((128, 128), lambda i: (0, 0)),           # wf2
            pl.BlockSpec((1, 128), lambda i: (0, 0)),             # bf2
            pl.BlockSpec((128, 128), lambda i: (0, 0)),           # wf3
            pl.BlockSpec((1, 128), lambda i: (0, 0)),             # bf3
        ],
        out_specs=pl.BlockSpec((B, 128), lambda i: (i, 0)),
        compiler_params=pltpu.CompilerParams(
            dimension_semantics=("parallel",)),
    )(xs, w1, b1, sel1, w2, b2, sel2, wf1, bf1, wf2, bf2, wf3, bf3)
    return out[:n, :10]


# ----------------------------------------------------------------------------
# One-time host-side weight repacking (numpy, outside the hot path).
# block_batch must be a multiple of 8 (sweep 8 / 16 per generation).
# ----------------------------------------------------------------------------
def pack_params(params, block_batch=8):
    cw1, cb1, cw2, cb2, fw1, fb1, fw2, fb2, fw3, fb3 = [
        np.asarray(p, np.float32) for p in params]
    B = block_batch
    assert B % 8 == 0, "block_batch must be a multiple of 8"

    # conv1 merged-K banded weights: row = kh*128 + c*32 + w_in, col = wo*6 + co
    w1 = np.zeros((5 * 128, 28 * 6), np.float32)
    for kh in range(5):
        for c in range(3):
            for kw in range(5):
                for wo in range(28):
                    w1[kh * 128 + c * 32 + wo + kw,
                       wo * 6:wo * 6 + 6] = cw1[:, c, kh, kw]
    b1 = np.tile(cb1, 28).reshape(1, 28 * 6)

    # pool1 row-compaction selector (rows j=14,15 of each 16-block stay zero).
    sel1 = np.zeros((B * 16, B * 32 - 1), np.float32)
    for b in range(B):
        for j in range(14):
            sel1[b * 16 + j, b * 32 + 2 * j] = 1.0

    # conv2 banded weights (per kh): input col = 12*wp + c, output col = 16*wo + co
    w2 = np.zeros((5, 162, 10 * 16), np.float32)
    for kh in range(5):
        for kw in range(5):
            blk = cw2[:, :, kh, kw].T                        # (6, 16)
            for wo in range(10):
                r0 = (wo + kw) * 12
                w2[kh, r0:r0 + 6, wo * 16:wo * 16 + 16] = blk
    b2 = np.tile(cb2, 10).reshape(1, 10 * 16)

    # pool2 + fc1 row gather: output row h*B + b = pooled row h of image b.
    sel2 = np.zeros((5 * B, B * 16 - 1), np.float32)
    for h in range(5):
        for b in range(B):
            sel2[h * B + b, b * 16 + 2 * h] = 1.0

    # fc1: per-h (144,128) slabs absorbing the spread pooled cols (32*w + c)
    # and PyTorch's NCHW flatten order (idx = c*25 + h*5 + w); pad 120 -> 128.
    wf1 = np.zeros((5, 144, 128), np.float32)
    for h in range(5):
        for w in range(5):
            for c in range(16):
                wf1[h, 32 * w + c, :120] = fw1[c * 25 + h * 5 + w, :]
    bf1 = np.zeros((1, 128), np.float32)
    bf1[0, :120] = fb1

    wf2 = np.zeros((128, 128), np.float32)
    wf2[:120, :84] = fw2
    bf2 = np.zeros((1, 128), np.float32)
    bf2[0, :84] = fb2

    wf3 = np.zeros((128, 128), np.float32)
    wf3[:84, :10] = fw3
    bf3 = np.zeros((1, 128), np.float32)
    bf3[0, :10] = fb3

    def b16(a):
        return jnp.asarray(a, BF16)

    def f32(a):
        return jnp.asarray(a, F32)

    return (b16(w1), f32(b1), b16(sel1), b16(w2), f32(b2), b16(sel2),
            b16(wf1), f32(bf1), b16(wf2), f32(bf2), b16(wf3), f32(bf3))


# ----------------------------------------------------------------------------
# Pure-JAX reference with the same mixed-precision policy (bf16 operands,
# f32 accumulation / bias / ReLU / pooling) for sanity checking.
# ----------------------------------------------------------------------------
def net_forward_reference(x, params):
    cw1, cb1, cw2, cb2, fw1, fb1, fw2, fb2, fw3, fb3 = params

    def conv(x, w, b):
        y = jax.lax.conv_general_dilated(
            x.astype(BF16), w.astype(BF16), window_strides=(1, 1),
            padding="VALID", dimension_numbers=("NCHW", "OIHW", "NCHW"),
            preferred_element_type=F32)
        return jax.nn.relu(y + b[None, :, None, None])

    def pool(x):
        return jax.lax.reduce_window(
            x, -jnp.inf, jax.lax.max, (1, 1, 2, 2), (1, 1, 2, 2), "VALID")

    def dense(x, w, b):
        return jnp.dot(x.astype(BF16), w.astype(BF16),
                       preferred_element_type=F32) + b

    x = pool(conv(x, cw1, cb1))
    x = pool(conv(x, cw2, cb2))
    x = x.reshape(x.shape[0], -1)
    x = jax.nn.relu(dense(x, fw1, fb1))
    x = jax.nn.relu(dense(x, fw2, fb2))
    return dense(x, fw3, fb3)


def init_params(key):
    ks = jax.random.split(key, 10)

    def w_init(k, shape, fan_in):
        return jax.random.normal(k, shape, jnp.float32) / jnp.sqrt(fan_in)

    cw1 = w_init(ks[0], (6, 3, 5, 5), 3 * 5 * 5)
    cb1 = w_init(ks[1], (6,), 3 * 5 * 5)
    cw2 = w_init(ks[2], (16, 6, 5, 5), 6 * 5 * 5)
    cb2 = w_init(ks[3], (16,), 6 * 5 * 5)
    fw1 = w_init(ks[4], (400, 120), 400)   # stored (in, out): y = x @ W + b
    fb1 = w_init(ks[5], (120,), 400)
    fw2 = w_init(ks[6], (120, 84), 120)
    fb2 = w_init(ks[7], (84,), 120)
    fw3 = w_init(ks[8], (84, 10), 84)
    fb3 = w_init(ks[9], (10,), 84)
    return (cw1, cb1, cw2, cb2, fw1, fb1, fw2, fb2, fw3, fb3)


if __name__ == "__main__":
    key = jax.random.PRNGKey(0)
    kx, kp = jax.random.split(key)
    # Input geometry is fixed at 3x32x32 by the 16*5*5 flatten in fc1.
    # N=16 with block_batch=8 -> grid of 2 steps (keeps both v7x TCs fed).
    n = 16
    x = jax.random.normal(kx, (n, 3, 32, 32), jnp.float32)
    params = init_params(kp)
    packed = pack_params(params, block_batch=8)   # one-time host-side repack

    out = jax.block_until_ready(jax.jit(net_forward)(x, packed))
    assert out.shape == (n, 10) and out.dtype == jnp.float32

    ref = jax.block_until_ready(jax.jit(net_forward_reference)(x, params))
    assert jnp.allclose(out, ref, rtol=2e-2, atol=2e-2), "mismatch vs reference"

    print("KERNEL_OK")
</pallas_src>

<mosaic_0001>
module attributes {stable_mosaic.version = 11 : i64} {
  func.func @_lenet_kernel(%arg0: i32, %arg1: memref<256x128xbf16, #tpu.memory_space<vmem>>, %arg2: memref<640x168xbf16, #tpu.memory_space<vmem>>, %arg3: memref<1x168xf32, #tpu.memory_space<vmem>>, %arg4: memref<128x255xbf16, #tpu.memory_space<vmem>>, %arg5: memref<5x162x160xbf16, #tpu.memory_space<vmem>>, %arg6: memref<1x160xf32, #tpu.memory_space<vmem>>, %arg7: memref<40x127xbf16, #tpu.memory_space<vmem>>, %arg8: memref<5x144x128xbf16, #tpu.memory_space<vmem>>, %arg9: memref<1x128xf32, #tpu.memory_space<vmem>>, %arg10: memref<128x128xbf16, #tpu.memory_space<vmem>>, %arg11: memref<1x128xf32, #tpu.memory_space<vmem>>, %arg12: memref<128x128xbf16, #tpu.memory_space<vmem>>, %arg13: memref<1x128xf32, #tpu.memory_space<vmem>>, %arg14: memref<8x128xf32, #tpu.memory_space<vmem>>) attributes {dimension_semantics = [#tpu.dimension_semantics<parallel>], iteration_bounds = array<i64: 2>, scalar_prefetch = 0 : i64, scratch_operands = 0 : i64, tpu.core_type = #tpu.core_type<tc>, window_params = [{transform_indices = @transform_0, window_bounds = array<i64: 256, 128>}, {pipeline_mode = #tpu.pipeline_mode<synchronous>, transform_indices = @transform_1, window_bounds = array<i64: 640, 168>}, {pipeline_mode = #tpu.pipeline_mode<synchronous>, transform_indices = @transform_2, window_bounds = array<i64: 1, 168>}, {pipeline_mode = #tpu.pipeline_mode<synchronous>, transform_indices = @transform_3, window_bounds = array<i64: 128, 255>}, {pipeline_mode = #tpu.pipeline_mode<synchronous>, transform_indices = @transform_4, window_bounds = array<i64: 5, 162, 160>}, {pipeline_mode = #tpu.pipeline_mode<synchronous>, transform_indices = @transform_5, window_bounds = array<i64: 1, 160>}, {pipeline_mode = #tpu.pipeline_mode<synchronous>, transform_indices = @transform_6, window_bounds = array<i64: 40, 127>}, {pipeline_mode = #tpu.pipeline_mode<synchronous>, transform_indices = @transform_7, window_bounds = array<i64: 5, 144, 128>}, {pipeline_mode = #tpu.pipeline_mode<synchronous>, transform_indices = @transform_8, window_bounds = array<i64: 1, 128>}, {pipeline_mode = #tpu.pipeline_mode<synchronous>, transform_indices = @transform_9, window_bounds = array<i64: 128, 128>}, {pipeline_mode = #tpu.pipeline_mode<synchronous>, transform_indices = @transform_10, window_bounds = array<i64: 1, 128>}, {pipeline_mode = #tpu.pipeline_mode<synchronous>, transform_indices = @transform_11, window_bounds = array<i64: 128, 128>}, {pipeline_mode = #tpu.pipeline_mode<synchronous>, transform_indices = @transform_12, window_bounds = array<i64: 1, 128>}, {transform_indices = @transform_13, window_bounds = array<i64: 8, 128>}]} {
    %c0 = arith.constant 0 : index
    %c0_0 = arith.constant 0 : index
    %0 = vector.load %arg1[%c0, %c0_0] : memref<256x128xbf16, #tpu.memory_space<vmem>>, vector<256x128xbf16>
    %cst = arith.constant 0.000000e+00 : bf16
    %1 = vector.broadcast %cst : bf16 to vector<8x128xbf16>
    %2 = tpu.concatenate %0, %1 in 0 : vector<256x128xbf16>, vector<8x128xbf16> -> vector<264x128xbf16>
    %3 = vector.extract_strided_slice %2 {offsets = [0, 0], sizes = [256, 128], strides = [1, 1]} : vector<264x128xbf16> to vector<256x128xbf16>
    %4 = vector.extract_strided_slice %2 {offsets = [1, 0], sizes = [256, 128], strides = [1, 1]} : vector<264x128xbf16> to vector<256x128xbf16>
    %5 = vector.extract_strided_slice %2 {offsets = [2, 0], sizes = [256, 128], strides = [1, 1]} : vector<264x128xbf16> to vector<256x128xbf16>
    %6 = vector.extract_strided_slice %2 {offsets = [3, 0], sizes = [256, 128], strides = [1, 1]} : vector<264x128xbf16> to vector<256x128xbf16>
    %7 = vector.extract_strided_slice %2 {offsets = [4, 0], sizes = [256, 128], strides = [1, 1]} : vector<264x128xbf16> to vector<256x128xbf16>
    %8 = tpu.concatenate %3, %4, %5, %6, %7 in 1 : vector<256x128xbf16>, vector<256x128xbf16>, vector<256x128xbf16>, vector<256x128xbf16>, vector<256x128xbf16> -> vector<256x640xbf16>
    %c0_1 = arith.constant 0 : index
    %c0_2 = arith.constant 0 : index
    %9 = vector.load %arg2[%c0_1, %c0_2] : memref<640x168xbf16, #tpu.memory_space<vmem>>, vector<640x168xbf16>
    %cst_3 = arith.constant dense<0.000000e+00> : vector<256x168xf32>
    %10 = tpu.matmul %8, %9, %cst_3 {dimension_numbers = #tpu.dot_dimension_numbers<[1], [0], [0], [1], [0, 0, 1, 1], [], []>} : vector<256x640xbf16>, vector<640x168xbf16>, vector<256x168xf32> -> vector<256x168xf32>
    %c0_4 = arith.constant 0 : index
    %c0_5 = arith.constant 0 : index
    %11 = vector.load %arg3[%c0_4, %c0_5] : memref<1x168xf32, #tpu.memory_space<vmem>>, vector<1x168xf32>
    %12 = vector.broadcast %11 : vector<1x168xf32> to vector<256x168xf32>
    %13 = arith.addf %10, %12 : vector<256x168xf32>
    %cst_6 = arith.constant 0.000000e+00 : f32
    %14 = vector.broadcast %cst_6 : f32 to vector<256x168xf32>
    %15 = arith.maximumf %13, %14 : vector<256x168xf32>
    %16 = vector.extract_strided_slice %15 {offsets = [0, 0], sizes = [255, 168], strides = [1, 1]} : vector<256x168xf32> to vector<255x168xf32>
    %17 = vector.extract_strided_slice %15 {offsets = [1, 0], sizes = [255, 168], strides = [1, 1]} : vector<256x168xf32> to vector<255x168xf32>
    %18 = arith.maximumf %16, %17 : vector<255x168xf32>
    %19 = vector.extract_strided_slice %18 {offsets = [0, 0], sizes = [255, 162], strides = [1, 1]} : vector<255x168xf32> to vector<255x162xf32>
    %20 = vector.extract_strided_slice %18 {offsets = [0, 6], sizes = [255, 162], strides = [1, 1]} : vector<255x168xf32> to vector<255x162xf32>
    %21 = arith.maximumf %19, %20 : vector<255x162xf32>
    %22 = arith.truncf %21 : vector<255x162xf32> to vector<255x162xbf16>
    %c0_7 = arith.constant 0 : index
    %c0_8 = arith.constant 0 : index
    %23 = vector.load %arg4[%c0_7, %c0_8] : memref<128x255xbf16, #tpu.memory_space<vmem>>, vector<128x255xbf16>
    %cst_9 = arith.constant dense<0.000000e+00> : vector<128x162xf32>
    %24 = tpu.matmul %23, %22, %cst_9 {dimension_numbers = #tpu.dot_dimension_numbers<[1], [0], [0], [1], [0, 0, 1, 1], [], []>} : vector<128x255xbf16>, vector<255x162xbf16>, vector<128x162xf32> -> vector<128x162xf32>
    %25 = arith.truncf %24 : vector<128x162xf32> to vector<128x162xbf16>
    %cst_10 = arith.constant 0.000000e+00 : bf16
    %26 = vector.broadcast %cst_10 : bf16 to vector<8x162xbf16>
    %27 = tpu.concatenate %25, %26 in 0 : vector<128x162xbf16>, vector<8x162xbf16> -> vector<136x162xbf16>
    %c0_11 = arith.constant 0 : index
    %c0_12 = arith.constant 0 : index
    %28 = vector.load %arg6[%c0_11, %c0_12] : memref<1x160xf32, #tpu.memory_space<vmem>>, vector<1x160xf32>
    %29 = vector.shape_cast %28 : vector<1x160xf32> to vector<1x160xf32>
    %30 = vector.broadcast %29 : vector<1x160xf32> to vector<128x160xf32>
    %31 = vector.extract_strided_slice %27 {offsets = [0, 0], sizes = [128, 162], strides = [1, 1]} : vector<136x162xbf16> to vector<128x162xbf16>
    %c0_13 = arith.constant 0 : index
    %c0_14 = arith.constant 0 : index
    %c0_15 = arith.constant 0 : index
    %32 = vector.load %arg5[%c0_13, %c0_14, %c0_15] : memref<5x162x160xbf16, #tpu.memory_space<vmem>>, vector<1x162x160xbf16>
    %33 = vector.shape_cast %32 : vector<1x162x160xbf16> to vector<162x160xbf16>
    %cst_16 = arith.constant dense<0.000000e+00> : vector<128x160xf32>
    %34 = tpu.matmul %31, %33, %cst_16 {dimension_numbers = #tpu.dot_dimension_numbers<[1], [0], [0], [1], [0, 0, 1, 1], [], []>} : vector<128x162xbf16>, vector<162x160xbf16>, vector<128x160xf32> -> vector<128x160xf32>
    %35 = arith.addf %30, %34 : vector<128x160xf32>
    %36 = vector.extract_strided_slice %27 {offsets = [1, 0], sizes = [128, 162], strides = [1, 1]} : vector<136x162xbf16> to vector<128x162xbf16>
    %c1 = arith.constant 1 : index
    %c0_17 = arith.constant 0 : index
    %c0_18 = arith.constant 0 : index
    %37 = vector.load %arg5[%c1, %c0_17, %c0_18] : memref<5x162x160xbf16, #tpu.memory_space<vmem>>, vector<1x162x160xbf16>
    %38 = vector.shape_cast %37 : vector<1x162x160xbf16> to vector<162x160xbf16>
    %cst_19 = arith.constant dense<0.000000e+00> : vector<128x160xf32>
    %39 = tpu.matmul %36, %38, %cst_19 {dimension_numbers = #tpu.dot_dimension_numbers<[1], [0], [0], [1], [0, 0, 1, 1], [], []>} : vector<128x162xbf16>, vector<162x160xbf16>, vector<128x160xf32> -> vector<128x160xf32>
    %40 = arith.addf %35, %39 : vector<128x160xf32>
    %41 = vector.extract_strided_slice %27 {offsets = [2, 0], sizes = [128, 162], strides = [1, 1]} : vector<136x162xbf16> to vector<128x162xbf16>
    %c2 = arith.constant 2 : index
    %c0_20 = arith.constant 0 : index
    %c0_21 = arith.constant 0 : index
    %42 = vector.load %arg5[%c2, %c0_20, %c0_21] : memref<5x162x160xbf16, #tpu.memory_space<vmem>>, vector<1x162x160xbf16>
    %43 = vector.shape_cast %42 : vector<1x162x160xbf16> to vector<162x160xbf16>
    %cst_22 = arith.constant dense<0.000000e+00> : vector<128x160xf32>
    %44 = tpu.matmul %41, %43, %cst_22 {dimension_numbers = #tpu.dot_dimension_numbers<[1], [0], [0], [1], [0, 0, 1, 1], [], []>} : vector<128x162xbf16>, vector<162x160xbf16>, vector<128x160xf32> -> vector<128x160xf32>
    %45 = arith.addf %40, %44 : vector<128x160xf32>
    %46 = vector.extract_strided_slice %27 {offsets = [3, 0], sizes = [128, 162], strides = [1, 1]} : vector<136x162xbf16> to vector<128x162xbf16>
    %c3 = arith.constant 3 : index
    %c0_23 = arith.constant 0 : index
    %c0_24 = arith.constant 0 : index
    %47 = vector.load %arg5[%c3, %c0_23, %c0_24] : memref<5x162x160xbf16, #tpu.memory_space<vmem>>, vector<1x162x160xbf16>
    %48 = vector.shape_cast %47 : vector<1x162x160xbf16> to vector<162x160xbf16>
    %cst_25 = arith.constant dense<0.000000e+00> : vector<128x160xf32>
    %49 = tpu.matmul %46, %48, %cst_25 {dimension_numbers = #tpu.dot_dimension_numbers<[1], [0], [0], [1], [0, 0, 1, 1], [], []>} : vector<128x162xbf16>, vector<162x160xbf16>, vector<128x160xf32> -> vector<128x160xf32>
    %50 = arith.addf %45, %49 : vector<128x160xf32>
    %51 = vector.extract_strided_slice %27 {offsets = [4, 0], sizes = [128, 162], strides = [1, 1]} : vector<136x162xbf16> to vector<128x162xbf16>
    %c4 = arith.constant 4 : index
    %c0_26 = arith.constant 0 : index
    %c0_27 = arith.constant 0 : index
    %52 = vector.load %arg5[%c4, %c0_26, %c0_27] : memref<5x162x160xbf16, #tpu.memory_space<vmem>>, vector<1x162x160xbf16>
    %53 = vector.shape_cast %52 : vector<1x162x160xbf16> to vector<162x160xbf16>
    %cst_28 = arith.constant dense<0.000000e+00> : vector<128x160xf32>
    %54 = tpu.matmul %51, %53, %cst_28 {dimension_numbers = #tpu.dot_dimension_numbers<[1], [0], [0], [1], [0, 0, 1, 1], [], []>} : vector<128x162xbf16>, vector<162x160xbf16>, vector<128x160xf32> -> vector<128x160xf32>
    %55 = arith.addf %50, %54 : vector<128x160xf32>
    %cst_29 = arith.constant 0.000000e+00 : f32
    %56 = vector.broadcast %cst_29 : f32 to vector<128x160xf32>
    %57 = arith.maximumf %55, %56 : vector<128x160xf32>
    %58 = vector.extract_strided_slice %57 {offsets = [0, 0], sizes = [127, 160], strides = [1, 1]} : vector<128x160xf32> to vector<127x160xf32>
    %59 = vector.extract_strided_slice %57 {offsets = [1, 0], sizes = [127, 160], strides = [1, 1]} : vector<128x160xf32> to vector<127x160xf32>
    %60 = arith.maximumf %58, %59 : vector<127x160xf32>
    %61 = vector.extract_strided_slice %60 {offsets = [0, 0], sizes = [127, 144], strides = [1, 1]} : vector<127x160xf32> to vector<127x144xf32>
    %62 = vector.extract_strided_slice %60 {offsets = [0, 16], sizes = [127, 144], strides = [1, 1]} : vector<127x160xf32> to vector<127x144xf32>
    %63 = arith.maximumf %61, %62 : vector<127x144xf32>
    %64 = arith.truncf %63 : vector<127x144xf32> to vector<127x144xbf16>
    %c0_30 = arith.constant 0 : index
    %c0_31 = arith.constant 0 : index
    %65 = vector.load %arg7[%c0_30, %c0_31] : memref<40x127xbf16, #tpu.memory_space<vmem>>, vector<40x127xbf16>
    %cst_32 = arith.constant dense<0.000000e+00> : vector<40x144xf32>
    %66 = tpu.matmul %65, %64, %cst_32 {dimension_numbers = #tpu.dot_dimension_numbers<[1], [0], [0], [1], [0, 0, 1, 1], [], []>} : vector<40x127xbf16>, vector<127x144xbf16>, vector<40x144xf32> -> vector<40x144xf32>
    %67 = arith.truncf %66 : vector<40x144xf32> to vector<40x144xbf16>
    %c0_33 = arith.constant 0 : index
    %c0_34 = arith.constant 0 : index
    %68 = vector.load %arg9[%c0_33, %c0_34] : memref<1x128xf32, #tpu.memory_space<vmem>>, vector<1x128xf32>
    %69 = vector.shape_cast %68 : vector<1x128xf32> to vector<1x128xf32>
    %70 = vector.broadcast %69 : vector<1x128xf32> to vector<8x128xf32>
    %71 = vector.extract_strided_slice %67 {offsets = [0, 0], sizes = [8, 144], strides = [1, 1]} : vector<40x144xbf16> to vector<8x144xbf16>
    %c0_35 = arith.constant 0 : index
    %c0_36 = arith.constant 0 : index
    %c0_37 = arith.constant 0 : index
    %72 = vector.load %arg8[%c0_35, %c0_36, %c0_37] : memref<5x144x128xbf16, #tpu.memory_space<vmem>>, vector<1x144x128xbf16>
    %73 = vector.shape_cast %72 : vector<1x144x128xbf16> to vector<144x128xbf16>
    %cst_38 = arith.constant dense<0.000000e+00> : vector<8x128xf32>
    %74 = tpu.matmul %71, %73, %cst_38 {dimension_numbers = #tpu.dot_dimension_numbers<[1], [0], [0], [1], [0, 0, 1, 1], [], []>} : vector<8x144xbf16>, vector<144x128xbf16>, vector<8x128xf32> -> vector<8x128xf32>
    %75 = arith.addf %70, %74 : vector<8x128xf32>
    %76 = vector.extract_strided_slice %67 {offsets = [8, 0], sizes = [8, 144], strides = [1, 1]} : vector<40x144xbf16> to vector<8x144xbf16>
    %c1_39 = arith.constant 1 : index
    %c0_40 = arith.constant 0 : index
    %c0_41 = arith.constant 0 : index
    %77 = vector.load %arg8[%c1_39, %c0_40, %c0_41] : memref<5x144x128xbf16, #tpu.memory_space<vmem>>, vector<1x144x128xbf16>
    %78 = vector.shape_cast %77 : vector<1x144x128xbf16> to vector<144x128xbf16>
    %cst_42 = arith.constant dense<0.000000e+00> : vector<8x128xf32>
    %79 = tpu.matmul %76, %78, %cst_42 {dimension_numbers = #tpu.dot_dimension_numbers<[1], [0], [0], [1], [0, 0, 1, 1], [], []>} : vector<8x144xbf16>, vector<144x128xbf16>, vector<8x128xf32> -> vector<8x128xf32>
    %80 = arith.addf %75, %79 : vector<8x128xf32>
    %81 = vector.extract_strided_slice %67 {offsets = [16, 0], sizes = [8, 144], strides = [1, 1]} : vector<40x144xbf16> to vector<8x144xbf16>
    %c2_43 = arith.constant 2 : index
    %c0_44 = arith.constant 0 : index
    %c0_45 = arith.constant 0 : index
    %82 = vector.load %arg8[%c2_43, %c0_44, %c0_45] : memref<5x144x128xbf16, #tpu.memory_space<vmem>>, vector<1x144x128xbf16>
    %83 = vector.shape_cast %82 : vector<1x144x128xbf16> to vector<144x128xbf16>
    %cst_46 = arith.constant dense<0.000000e+00> : vector<8x128xf32>
    %84 = tpu.matmul %81, %83, %cst_46 {dimension_numbers = #tpu.dot_dimension_numbers<[1], [0], [0], [1], [0, 0, 1, 1], [], []>} : vector<8x144xbf16>, vector<144x128xbf16>, vector<8x128xf32> -> vector<8x128xf32>
    %85 = arith.addf %80, %84 : vector<8x128xf32>
    %86 = vector.extract_strided_slice %67 {offsets = [24, 0], sizes = [8, 144], strides = [1, 1]} : vector<40x144xbf16> to vector<8x144xbf16>
    %c3_47 = arith.constant 3 : index
    %c0_48 = arith.constant 0 : index
    %c0_49 = arith.constant 0 : index
    %87 = vector.load %arg8[%c3_47, %c0_48, %c0_49] : memref<5x144x128xbf16, #tpu.memory_space<vmem>>, vector<1x144x128xbf16>
    %88 = vector.shape_cast %87 : vector<1x144x128xbf16> to vector<144x128xbf16>
    %cst_50 = arith.constant dense<0.000000e+00> : vector<8x128xf32>
    %89 = tpu.matmul %86, %88, %cst_50 {dimension_numbers = #tpu.dot_dimension_numbers<[1], [0], [0], [1], [0, 0, 1, 1], [], []>} : vector<8x144xbf16>, vector<144x128xbf16>, vector<8x128xf32> -> vector<8x128xf32>
    %90 = arith.addf %85, %89 : vector<8x128xf32>
    %91 = vector.extract_strided_slice %67 {offsets = [32, 0], sizes = [8, 144], strides = [1, 1]} : vector<40x144xbf16> to vector<8x144xbf16>
    %c4_51 = arith.constant 4 : index
    %c0_52 = arith.constant 0 : index
    %c0_53 = arith.constant 0 : index
    %92 = vector.load %arg8[%c4_51, %c0_52, %c0_53] : memref<5x144x128xbf16, #tpu.memory_space<vmem>>, vector<1x144x128xbf16>
    %93 = vector.shape_cast %92 : vector<1x144x128xbf16> to vector<144x128xbf16>
    %cst_54 = arith.constant dense<0.000000e+00> : vector<8x128xf32>
    %94 = tpu.matmul %91, %93, %cst_54 {dimension_numbers = #tpu.dot_dimension_numbers<[1], [0], [0], [1], [0, 0, 1, 1], [], []>} : vector<8x144xbf16>, vector<144x128xbf16>, vector<8x128xf32> -> vector<8x128xf32>
    %95 = arith.addf %90, %94 : vector<8x128xf32>
    %cst_55 = arith.constant 0.000000e+00 : f32
    %96 = vector.broadcast %cst_55 : f32 to vector<8x128xf32>
    %97 = arith.maximumf %95, %96 : vector<8x128xf32>
    %98 = arith.truncf %97 : vector<8x128xf32> to vector<8x128xbf16>
    %c0_56 = arith.constant 0 : index
    %c0_57 = arith.constant 0 : index
    %99 = vector.load %arg10[%c0_56, %c0_57] : memref<128x128xbf16, #tpu.memory_space<vmem>>, vector<128x128xbf16>
    %cst_58 = arith.constant dense<0.000000e+00> : vector<8x128xf32>
    %100 = tpu.matmul %98, %99, %cst_58 {dimension_numbers = #tpu.dot_dimension_numbers<[1], [0], [0], [1], [0, 0, 1, 1], [], []>} : vector<8x128xbf16>, vector<128x128xbf16>, vector<8x128xf32> -> vector<8x128xf32>
    %c0_59 = arith.constant 0 : index
    %c0_60 = arith.constant 0 : index
    %101 = vector.load %arg11[%c0_59, %c0_60] : memref<1x128xf32, #tpu.memory_space<vmem>>, vector<1x128xf32>
    %102 = vector.broadcast %101 : vector<1x128xf32> to vector<8x128xf32>
    %103 = arith.addf %100, %102 : vector<8x128xf32>
    %cst_61 = arith.constant 0.000000e+00 : f32
    %104 = vector.broadcast %cst_61 : f32 to vector<8x128xf32>
    %105 = arith.maximumf %103, %104 : vector<8x128xf32>
    %106 = arith.truncf %105 : vector<8x128xf32> to vector<8x128xbf16>
    %c0_62 = arith.constant 0 : index
    %c0_63 = arith.constant 0 : index
    %107 = vector.load %arg12[%c0_62, %c0_63] : memref<128x128xbf16, #tpu.memory_space<vmem>>, vector<128x128xbf16>
    %cst_64 = arith.constant dense<0.000000e+00> : vector<8x128xf32>
    %108 = tpu.matmul %106, %107, %cst_64 {dimension_numbers = #tpu.dot_dimension_numbers<[1], [0], [0], [1], [0, 0, 1, 1], [], []>} : vector<8x128xbf16>, vector<128x128xbf16>, vector<8x128xf32> -> vector<8x128xf32>
    %c0_65 = arith.constant 0 : index
    %c0_66 = arith.constant 0 : index
    %109 = vector.load %arg13[%c0_65, %c0_66] : memref<1x128xf32, #tpu.memory_space<vmem>>, vector<1x128xf32>
    %110 = vector.broadcast %109 : vector<1x128xf32> to vector<8x128xf32>
    %111 = arith.addf %108, %110 : vector<8x128xf32>
    %c0_67 = arith.constant 0 : index
    %c0_68 = arith.constant 0 : index
    %112 = vector.load %arg14[%c0_67, %c0_68] : memref<8x128xf32, #tpu.memory_space<vmem>>, vector<8x128xf32>
    tpu.vector_store %arg14[%c0_67, %c0_68], %111 {strides = array<i32>} : memref<8x128xf32, #tpu.memory_space<vmem>>, vector<8x128xf32>,
    return
  }
  func.func @transform_0(%arg0: i32) -> (i32, i32) {
    %c0_i32 = arith.constant 0 : i32
    %c0_i32_0 = arith.constant 0 : i32
    return %arg0, %c0_i32 : i32, i32
  }
  func.func @transform_1(%arg0: i32) -> (i32, i32) {
    %c0_i32 = arith.constant 0 : i32
    %c0_i32_0 = arith.constant 0 : i32
    %c0_i32_1 = arith.constant 0 : i32
    return %c0_i32, %c0_i32_0 : i32, i32
  }
  func.func @transform_2(%arg0: i32) -> (i32, i32) {
    %c0_i32 = arith.constant 0 : i32
    %c0_i32_0 = arith.constant 0 : i32
    %c0_i32_1 = arith.constant 0 : i32
    return %c0_i32, %c0_i32_0 : i32, i32
  }
  func.func @transform_3(%arg0: i32) -> (i32, i32) {
    %c0_i32 = arith.constant 0 : i32
    %c0_i32_0 = arith.constant 0 : i32
    %c0_i32_1 = arith.constant 0 : i32
    return %c0_i32, %c0_i32_0 : i32, i32
  }
  func.func @transform_4(%arg0: i32) -> (i32, i32, i32) {
    %c0_i32 = arith.constant 0 : i32
    %c0_i32_0 = arith.constant 0 : i32
    %c0_i32_1 = arith.constant 0 : i32
    %c0_i32_2 = arith.constant 0 : i32
    return %c0_i32, %c0_i32_0, %c0_i32_1 : i32, i32, i32
  }
  func.func @transform_5(%arg0: i32) -> (i32, i32) {
    %c0_i32 = arith.constant 0 : i32
    %c0_i32_0 = arith.constant 0 : i32
    %c0_i32_1 = arith.constant 0 : i32
    return %c0_i32, %c0_i32_0 : i32, i32
  }
  func.func @transform_6(%arg0: i32) -> (i32, i32) {
    %c0_i32 = arith.constant 0 : i32
    %c0_i32_0 = arith.constant 0 : i32
    %c0_i32_1 = arith.constant 0 : i32
    return %c0_i32, %c0_i32_0 : i32, i32
  }
  func.func @transform_7(%arg0: i32) -> (i32, i32, i32) {
    %c0_i32 = arith.constant 0 : i32
    %c0_i32_0 = arith.constant 0 : i32
    %c0_i32_1 = arith.constant 0 : i32
    %c0_i32_2 = arith.constant 0 : i32
    return %c0_i32, %c0_i32_0, %c0_i32_1 : i32, i32, i32
  }
  func.func @transform_8(%arg0: i32) -> (i32, i32) {
    %c0_i32 = arith.constant 0 : i32
    %c0_i32_0 = arith.constant 0 : i32
    %c0_i32_1 = arith.constant 0 : i32
    return %c0_i32, %c0_i32_0 : i32, i32
  }
  func.func @transform_9(%arg0: i32) -> (i32, i32) {
    %c0_i32 = arith.constant 0 : i32
    %c0_i32_0 = arith.constant 0 : i32
    %c0_i32_1 = arith.constant 0 : i32
    return %c0_i32, %c0_i32_0 : i32, i32
  }
  func.func @transform_10(%arg0: i32) -> (i32, i32) {
    %c0_i32 = arith.constant 0 : i32
    %c0_i32_0 = arith.constant 0 : i32
    %c0_i32_1 = arith.constant 0 : i32
    return %c0_i32, %c0_i32_0 : i32, i32
  }
  func.func @transform_11(%arg0: i32) -> (i32, i32) {
    %c0_i32 = arith.constant 0 : i32
    %c0_i32_0 = arith.constant 0 : i32
    %c0_i32_1 = arith.constant 0 : i32
    return %c0_i32, %c0_i32_0 : i32, i32
  }
  func.func @transform_12(%arg0: i32) -> (i32, i32) {
    %c0_i32 = arith.constant 0 : i32
    %c0_i32_0 = arith.constant 0 : i32
    %c0_i32_1 = arith.constant 0 : i32
    return %c0_i32, %c0_i32_0 : i32, i32
  }
  func.func @transform_13(%arg0: i32) -> (i32, i32) {
    %c0_i32 = arith.constant 0 : i32
    %c0_i32_0 = arith.constant 0 : i32
    return %arg0, %c0_i32 : i32, i32
  }
}

</mosaic_0001>

<llo_original>
// kernel: net_forward.1
$region0: #{net_forward.1}
  #allocation0 [shape = 'u32[]', space=smem, size = 0x4, offset = 0x4, fixed_abs, tag = 'smem constant byte address 0x4 - core index']
  #allocation1 [shape = 'u32[144,128]{1,0:T(1,128)}', space=vmem, size = 0x12000, scoped, tag = 'internal scratch']
  %s0 = inlined_call_operand.vmem [shape: bf16[512,128], index: 0, kind: input, shape index: {}]
  %s1 = inlined_call_operand.vmem [shape: bf16[640,168], index: 1, kind: input, shape index: {}]
  %s2 = inlined_call_operand.vmem [shape: f32[1,168], index: 2, kind: input, shape index: {}]
  %s3 = inlined_call_operand.vmem [shape: bf16[128,255], index: 3, kind: input, shape index: {}]
  %s4 = inlined_call_operand.vmem [shape: bf16[5,162,160], index: 4, kind: input, shape index: {}]
  %s5 = inlined_call_operand.vmem [shape: f32[1,160], index: 5, kind: input, shape index: {}]
  %s6 = inlined_call_operand.vmem [shape: bf16[40,127], index: 6, kind: input, shape index: {}]
  %s7 = inlined_call_operand.vmem [shape: bf16[5,144,128], index: 7, kind: input, shape index: {}]
  %s8 = inlined_call_operand.vmem [shape: f32[1,128], index: 8, kind: input, shape index: {}]
  %s9 = inlined_call_operand.vmem [shape: bf16[128,128], index: 9, kind: input, shape index: {}]
  %s10 = inlined_call_operand.vmem [shape: f32[1,128], index: 10, kind: input, shape index: {}]
  %s11 = inlined_call_operand.vmem [shape: bf16[128,128], index: 11, kind: input, shape index: {}]
  %s12 = inlined_call_operand.vmem [shape: f32[1,128], index: 12, kind: input, shape index: {}]
  %s13 = inlined_call_operand.hbm [shape: f32[16,128], index: 13, kind: output, shape index: {}]
  %s14 = sld [smem:[#allocation0]]
  $region85: #{net_forward.1} parent=0
    _
  %s16 = ssub.s32 1, %s14
  %s17 = scalar_select 0, %s16, %s14
  $region1: #{net_forward.1} parent=0
    #allocation2 [shape = 'u8[8192]{0}', space=vmem, size = 0x2000, scoped, tag = 'output window, operand 0']
    #allocation3 [shape = 's32[2]{0}', space=sflag, size = 0x8, scoped, tag = 'scoped memory for net_forward.1']
    %18 = vsyncpa [#allocation3], 0
    %s19 = scalar_lea.sflag [#allocation3], 1
    %20 = vsyncpa %s19, 0
    loop: start=0, step=1, limit=4
    $region2: #{net_forward.1} parent=1 // loop_pre_header
      _
    $region3: #{net_forward.1} parent=1 // loop_header
      %s22 = sphi 0, %s26
      %p23 = scmp.ge.s32.totalorder %s22, 4
      %s32 = sphi 0, %s34
      %s35 = sphi 0, %s32
      %s36 = sphi 0, %s35
      %s52 = sphi 0, %s36
      %s56 = sphi 0, %s56
      %s58 = sphi 0, %s56
      %s59 = sphi 0, %s58
      %s73 = sphi 0, %s59
      %s77 = sphi 0, %s77
      %s79 = sphi 0, %s77
      %s80 = sphi 0, %s79
      %s94 = sphi 0, %s80
      %s98 = sphi 0, %s98
      %s100 = sphi 0, %s98
      %s101 = sphi 0, %s100
      %s115 = sphi 0, %s101
      %s119 = sphi 0, %s119
      %s121 = sphi 0, %s119
      %s122 = sphi 0, %s121
      %s136 = sphi 0, %s122
      %s140 = sphi 0, %s140
      %s142 = sphi 0, %s140
      %s143 = sphi 0, %s142
      %s157 = sphi 0, %s143
      %s161 = sphi 0, %s161
      %s163 = sphi 0, %s161
      %s164 = sphi 0, %s163
      %s178 = sphi 0, %s164
      %s182 = sphi 0, %s182
      %s184 = sphi 0, %s182
      %s185 = sphi 0, %s184
      %s199 = sphi 0, %s185
      %s203 = sphi 0, %s203
      %s205 = sphi 0, %s203
      %s206 = sphi 0, %s205
      %s220 = sphi 0, %s206
      %s224 = sphi 0, %s224
      %s226 = sphi 0, %s224
      %s227 = sphi 0, %s226
      %s241 = sphi 0, %s227
      %s245 = sphi 0, %s245
      %s247 = sphi 0, %s245
      %s248 = sphi 0, %s247
      %s262 = sphi 0, %s248
      %s266 = sphi 0, %s266
      %s268 = sphi 0, %s266
      %s269 = sphi 0, %s268
      %s283 = sphi 0, %s269
      %s287 = sphi 0, %s287
      %s289 = sphi 0, %s287
      %s290 = sphi 0, %s289
      %s304 = sphi 0, %s290
      %s310 = sphi 0, %s312
      %s313 = sphi 0, %s310
      %s314 = sphi 0, %s313
      %s330 = sphi 0, %s314
    $region4: #{net_forward.1} parent=1 // loop_header_branch
      %25 = sbr.rel (%p23) target = $region8
    $region5: #{net_forward.1} parent=1 // loop_body
      %s27 = ssub.s32 %s22, 1
      %s28 = ssub.s32 %s22, 2
      %s29 = sadd.s32 %s22, 1
      %s30 = ssub.s32 %s22, %s29
      %p31 = scmp.eq.s32.totalorder %s30, 0
      %s33 = sadd.s32 %s32, 1
      %s34 = scalar_select %p31, %s32, %s33
      %p37 = pneg %p31
      %p38 = scmp.eq.s32.totalorder %s22, 1
      %p39 = por %p37, %p38
      %p40 = scmp.ne.s32.totalorder %s32, %s35
      %p41 = scmp.eq.s32.totalorder %s22, 0
      %p42 = por %p40, %p41
      %p43 = scmp.ne.s32.totalorder %s32, %s35
      %p44 = scmp.eq.s32.totalorder %s27, 1
      %p45 = por %p43, %p44
      %p46 = scmp.ne.s32.totalorder %s35, %s36
      %p47 = scmp.eq.s32.totalorder %s27, 0
      %p48 = por %p46, %p47
      %p49 = scmp.ne.s32.totalorder %s35, %s36
      %p50 = scmp.eq.s32.totalorder %s28, 1
      %p51 = por %p49, %p50
      %p53 = scmp.ne.s32.totalorder %s36, %s52
      %p54 = scmp.eq.s32.totalorder %s28, 0
      %p55 = por %p53, %p54
      %s57 = sadd.s32 %s56, 1
      %p60 = scmp.eq.s32.totalorder %s22, 1
      %p61 = scmp.ne.s32.totalorder %s56, %s58
      %p62 = scmp.eq.s32.totalorder %s22, 0
      %p63 = por %p61, %p62
      %p64 = scmp.ne.s32.totalorder %s56, %s58
      %p65 = scmp.eq.s32.totalorder %s27, 1
      %p66 = por %p64, %p65
      %p67 = scmp.ne.s32.totalorder %s58, %s59
      %p68 = scmp.eq.s32.totalorder %s27, 0
      %p69 = por %p67, %p68
      %p70 = scmp.ne.s32.totalorder %s58, %s59
      %p71 = scmp.eq.s32.totalorder %s28, 1
      %p72 = por %p70, %p71
      %p74 = scmp.ne.s32.totalorder %s59, %s73
      %p75 = scmp.eq.s32.totalorder %s28, 0
      %p76 = por %p74, %p75
      %s78 = sadd.s32 %s77, 1
      %p81 = scmp.eq.s32.totalorder %s22, 1
      %p82 = scmp.ne.s32.totalorder %s77, %s79
      %p83 = scmp.eq.s32.totalorder %s22, 0
      %p84 = por %p82, %p83
      %p85 = scmp.ne.s32.totalorder %s77, %s79
      %p86 = scmp.eq.s32.totalorder %s27, 1
      %p87 = por %p85, %p86
      %p88 = scmp.ne.s32.totalorder %s79, %s80
      %p89 = scmp.eq.s32.totalorder %s27, 0
      %p90 = por %p88, %p89
      %p91 = scmp.ne.s32.totalorder %s79, %s80
      %p92 = scmp.eq.s32.totalorder %s28, 1
      %p93 = por %p91, %p92
      %p95 = scmp.ne.s32.totalorder %s80, %s94
      %p96 = scmp.eq.s32.totalorder %s28, 0
      %p97 = por %p95, %p96
      %s99 = sadd.s32 %s98, 1
      %p102 = scmp.eq.s32.totalorder %s22, 1
      %p103 = scmp.ne.s32.totalorder %s98, %s100
      %p104 = scmp.eq.s32.totalorder %s22, 0
      %p105 = por %p103, %p104
      %p106 = scmp.ne.s32.totalorder %s98, %s100
      %p107 = scmp.eq.s32.totalorder %s27, 1
      %p108 = por %p106, %p107
      %p109 = scmp.ne.s32.totalorder %s100, %s101
      %p110 = scmp.eq.s32.totalorder %s27, 0
      %p111 = por %p109, %p110
      %p112 = scmp.ne.s32.totalorder %s100, %s101
      %p113 = scmp.eq.s32.totalorder %s28, 1
      %p114 = por %p112, %p113
      %p116 = scmp.ne.s32.totalorder %s101, %s115
      %p117 = scmp.eq.s32.totalorder %s28, 0
      %p118 = por %p116, %p117
      %s120 = sadd.s32 %s119, 1
      %p123 = scmp.eq.s32.totalorder %s22, 1
      %p124 = scmp.ne.s32.totalorder %s119, %s121
      %p125 = scmp.eq.s32.totalorder %s22, 0
      %p126 = por %p124, %p125
      %p127 = scmp.ne.s32.totalorder %s119, %s121
      %p128 = scmp.eq.s32.totalorder %s27, 1
      %p129 = por %p127, %p128
      %p130 = scmp.ne.s32.totalorder %s121, %s122
      %p131 = scmp.eq.s32.totalorder %s27, 0
      %p132 = por %p130, %p131
      %p133 = scmp.ne.s32.totalorder %s121, %s122
      %p134 = scmp.eq.s32.totalorder %s28, 1
      %p135 = por %p133, %p134
      %p137 = scmp.ne.s32.totalorder %s122, %s136
      %p138 = scmp.eq.s32.totalorder %s28, 0
      %p139 = por %p137, %p138
      %s141 = sadd.s32 %s140, 1
      %p144 = scmp.eq.s32.totalorder %s22, 1
      %p145 = scmp.ne.s32.totalorder %s140, %s142
      %p146 = scmp.eq.s32.totalorder %s22, 0
      %p147 = por %p145, %p146
      %p148 = scmp.ne.s32.totalorder %s140, %s142
      %p149 = scmp.eq.s32.totalorder %s27, 1
      %p150 = por %p148, %p149
      %p151 = scmp.ne.s32.totalorder %s142, %s143
      %p152 = scmp.eq.s32.totalorder %s27, 0
      %p153 = por %p151, %p152
      %p154 = scmp.ne.s32.totalorder %s142, %s143
      %p155 = scmp.eq.s32.totalorder %s28, 1
      %p156 = por %p154, %p155
      %p158 = scmp.ne.s32.totalorder %s143, %s157
      %p159 = scmp.eq.s32.totalorder %s28, 0
      %p160 = por %p158, %p159
      %s162 = sadd.s32 %s161, 1
      %p165 = scmp.eq.s32.totalorder %s22, 1
      %p166 = scmp.ne.s32.totalorder %s161, %s163
      %p167 = scmp.eq.s32.totalorder %s22, 0
      %p168 = por %p166, %p167
      %p169 = scmp.ne.s32.totalorder %s161, %s163
      %p170 = scmp.eq.s32.totalorder %s27, 1
      %p171 = por %p169, %p170
      %p172 = scmp.ne.s32.totalorder %s163, %s164
      %p173 = scmp.eq.s32.totalorder %s27, 0
      %p174 = por %p172, %p173
      %p175 = scmp.ne.s32.totalorder %s163, %s164
      %p176 = scmp.eq.s32.totalorder %s28, 1
      %p177 = por %p175, %p176
      %p179 = scmp.ne.s32.totalorder %s164, %s178
      %p180 = scmp.eq.s32.totalorder %s28, 0
      %p181 = por %p179, %p180
      %s183 = sadd.s32 %s182, 1
      %p186 = scmp.eq.s32.totalorder %s22, 1
      %p187 = scmp.ne.s32.totalorder %s182, %s184
      %p188 = scmp.eq.s32.totalorder %s22, 0
      %p189 = por %p187, %p188
      %p190 = scmp.ne.s32.totalorder %s182, %s184
      %p191 = scmp.eq.s32.totalorder %s27, 1
      %p192 = por %p190, %p191
      %p193 = scmp.ne.s32.totalorder %s184, %s185
      %p194 = scmp.eq.s32.totalorder %s27, 0
      %p195 = por %p193, %p194
      %p196 = scmp.ne.s32.totalorder %s184, %s185
      %p197 = scmp.eq.s32.totalorder %s28, 1
      %p198 = por %p196, %p197
      %p200 = scmp.ne.s32.totalorder %s185, %s199
      %p201 = scmp.eq.s32.totalorder %s28, 0
      %p202 = por %p200, %p201
      %s204 = sadd.s32 %s203, 1
      %p207 = scmp.eq.s32.totalorder %s22, 1
      %p208 = scmp.ne.s32.totalorder %s203, %s205
      %p209 = scmp.eq.s32.totalorder %s22, 0
      %p210 = por %p208, %p209
      %p211 = scmp.ne.s32.totalorder %s203, %s205
      %p212 = scmp.eq.s32.totalorder %s27, 1
      %p213 = por %p211, %p212
      %p214 = scmp.ne.s32.totalorder %s205, %s206
      %p215 = scmp.eq.s32.totalorder %s27, 0
      %p216 = por %p214, %p215
      %p217 = scmp.ne.s32.totalorder %s205, %s206
      %p218 = scmp.eq.s32.totalorder %s28, 1
      %p219 = por %p217, %p218
      %p221 = scmp.ne.s32.totalorder %s206, %s220
      %p222 = scmp.eq.s32.totalorder %s28, 0
      %p223 = por %p221, %p222
      %s225 = sadd.s32 %s224, 1
      %p228 = scmp.eq.s32.totalorder %s22, 1
      %p229 = scmp.ne.s32.totalorder %s224, %s226
      %p230 = scmp.eq.s32.totalorder %s22, 0
      %p231 = por %p229, %p230
      %p232 = scmp.ne.s32.totalorder %s224, %s226
      %p233 = scmp.eq.s32.totalorder %s27, 1
      %p234 = por %p232, %p233
      %p235 = scmp.ne.s32.totalorder %s226, %s227
      %p236 = scmp.eq.s32.totalorder %s27, 0
      %p237 = por %p235, %p236
      %p238 = scmp.ne.s32.totalorder %s226, %s227
      %p239 = scmp.eq.s32.totalorder %s28, 1
      %p240 = por %p238, %p239
      %p242 = scmp.ne.s32.totalorder %s227, %s241
      %p243 = scmp.eq.s32.totalorder %s28, 0
      %p244 = por %p242, %p243
      %s246 = sadd.s32 %s245, 1
      %p249 = scmp.eq.s32.totalorder %s22, 1
      %p250 = scmp.ne.s32.totalorder %s245, %s247
      %p251 = scmp.eq.s32.totalorder %s22, 0
      %p252 = por %p250, %p251
      %p253 = scmp.ne.s32.totalorder %s245, %s247
      %p254 = scmp.eq.s32.totalorder %s27, 1
      %p255 = por %p253, %p254
      %p256 = scmp.ne.s32.totalorder %s247, %s248
      %p257 = scmp.eq.s32.totalorder %s27, 0
      %p258 = por %p256, %p257
      %p259 = scmp.ne.s32.totalorder %s247, %s248
      %p260 = scmp.eq.s32.totalorder %s28, 1
      %p261 = por %p259, %p260
      %p263 = scmp.ne.s32.totalorder %s248, %s262
      %p264 = scmp.eq.s32.totalorder %s28, 0
      %p265 = por %p263, %p264
      %s267 = sadd.s32 %s266, 1
      %p270 = scmp.eq.s32.totalorder %s22, 1
      %p271 = scmp.ne.s32.totalorder %s266, %s268
      %p272 = scmp.eq.s32.totalorder %s22, 0
      %p273 = por %p271, %p272
      %p274 = scmp.ne.s32.totalorder %s266, %s268
      %p275 = scmp.eq.s32.totalorder %s27, 1
      %p276 = por %p274, %p275
      %p277 = scmp.ne.s32.totalorder %s268, %s269
      %p278 = scmp.eq.s32.totalorder %s27, 0
      %p279 = por %p277, %p278
      %p280 = scmp.ne.s32.totalorder %s268, %s269
      %p281 = scmp.eq.s32.totalorder %s28, 1
      %p282 = por %p280, %p281
      %p284 = scmp.ne.s32.totalorder %s269, %s283
      %p285 = scmp.eq.s32.totalorder %s28, 0
      %p286 = por %p284, %p285
      %s288 = sadd.s32 %s287, 1
      %p291 = scmp.eq.s32.totalorder %s22, 1
      %p292 = scmp.ne.s32.totalorder %s287, %s289
      %p293 = scmp.eq.s32.totalorder %s22, 0
      %p294 = por %p292, %p293
      %p295 = scmp.ne.s32.totalorder %s287, %s289
      %p296 = scmp.eq.s32.totalorder %s27, 1
      %p297 = por %p295, %p296
      %p298 = scmp.ne.s32.totalorder %s289, %s290
      %p299 = scmp.eq.s32.totalorder %s27, 0
      %p300 = por %p298, %p299
      %p301 = scmp.ne.s32.totalorder %s289, %s290
      %p302 = scmp.eq.s32.totalorder %s28, 1
      %p303 = por %p301, %p302
      %p305 = scmp.ne.s32.totalorder %s290, %s304
      %p306 = scmp.eq.s32.totalorder %s28, 0
      %p307 = por %p305, %p306
      %s308 = ssub.s32 %s22, %s29
      %p309 = scmp.eq.s32.totalorder %s308, 0
      %s311 = sadd.s32 %s310, 1
      %s312 = scalar_select %p309, %s310, %s311
      %p315 = pneg %p309
      %p316 = scmp.eq.s32.totalorder %s22, 1
      %p317 = por %p315, %p316
      %p318 = scmp.ne.s32.totalorder %s310, %s313
      %p319 = scmp.eq.s32.totalorder %s22, 0
      %p320 = por %p318, %p319
      %p321 = scmp.ne.s32.totalorder %s310, %s313
      %p322 = scmp.eq.s32.totalorder %s27, 1
      %p323 = por %p321, %p322
      %p324 = scmp.ne.s32.totalorder %s313, %s314
      %p325 = scmp.eq.s32.totalorder %s27, 0
      %p326 = por %p324, %p325
      %p327 = scmp.ne.s32.totalorder %s313, %s314
      %p328 = scmp.eq.s32.totalorder %s28, 1
      %p329 = por %p327, %p328
      %p331 = scmp.ne.s32.totalorder %s314, %s330
      %p332 = scmp.eq.s32.totalorder %s28, 0
      %p333 = por %p331, %p332
      %p334 = scmp.le.s32.totalorder 1, %s22
      %p335 = scmp.lt.s32.totalorder %s22, 3
      %p336 = pnand %p334, %p335
      %p337 = pneg %p336
      // Predicated region
      $region9: #{net_forward.1} parent=5 // pred_check
        _
      $region10: #{net_forward.1} parent=5 // pred_check_branch
        %339 = sbr.rel (%p336) target = $region12
      $region11: #{net_forward.1} parent=5 // pred_region
        %s340 = ssub.s32 %s22, 1
        // Predicated region
        $region13: #{net_forward.1} parent=11 // pred_check
          %p341 = pneg %p69
        $region14: #{net_forward.1} parent=11 // pred_check_branch
          %343 = sbr.rel (%p341) target = $region16
        $region15: #{net_forward.1} parent=11 // pred_region
          _
        $region16: #{net_forward.1} parent=11 // pred_fallthru
          _
        // Predicated region
        $region17: #{net_forward.1} parent=11 // pred_check
          %p344 = pneg %p90
        $region18: #{net_forward.1} parent=11 // pred_check_branch
          %346 = sbr.rel (%p344) target = $region20
        $region19: #{net_forward.1} parent=11 // pred_region
          _
        $region20: #{net_forward.1} parent=11 // pred_fallthru
          _
        // Predicated region
        $region21: #{net_forward.1} parent=11 // pred_check
          %p347 = pneg %p111
        $region22: #{net_forward.1} parent=11 // pred_check_branch
          %349 = sbr.rel (%p347) target = $region24
        $region23: #{net_forward.1} parent=11 // pred_region
          _
        $region24: #{net_forward.1} parent=11 // pred_fallthru
          _
        // Predicated region
        $region25: #{net_forward.1} parent=11 // pred_check
          %p350 = pneg %p132
        $region26: #{net_forward.1} parent=11 // pred_check_branch
          %352 = sbr.rel (%p350) target = $region28
        $region27: #{net_forward.1} parent=11 // pred_region
          _
        $region28: #{net_forward.1} parent=11 // pred_fallthru
          _
        // Predicated region
        $region29: #{net_forward.1} parent=11 // pred_check
          %p353 = pneg %p153
        $region30: #{net_forward.1} parent=11 // pred_check_branch
          %355 = sbr.rel (%p353) target = $region32
        $region31: #{net_forward.1} parent=11 // pred_region
          _
        $region32: #{net_forward.1} parent=11 // pred_fallthru
          _
        // Predicated region
        $region33: #{net_forward.1} parent=11 // pred_check
          %p356 = pneg %p174
        $region34: #{net_forward.1} parent=11 // pred_check_branch
          %358 = sbr.rel (%p356) target = $region36
        $region35: #{net_forward.1} parent=11 // pred_region
          _
        $region36: #{net_forward.1} parent=11 // pred_fallthru
          _
        // Predicated region
        $region37: #{net_forward.1} parent=11 // pred_check
          %p359 = pneg %p195
        $region38: #{net_forward.1} parent=11 // pred_check_branch
          %361 = sbr.rel (%p359) target = $region40
        $region39: #{net_forward.1} parent=11 // pred_region
          _
        $region40: #{net_forward.1} parent=11 // pred_fallthru
          _
        // Predicated region
        $region41: #{net_forward.1} parent=11 // pred_check
          %p362 = pneg %p216
        $region42: #{net_forward.1} parent=11 // pred_check_branch
          %364 = sbr.rel (%p362) target = $region44
        $region43: #{net_forward.1} parent=11 // pred_region
          _
        $region44: #{net_forward.1} parent=11 // pred_fallthru
          _
        // Predicated region
        $region45: #{net_forward.1} parent=11 // pred_check
          %p365 = pneg %p237
        $region46: #{net_forward.1} parent=11 // pred_check_branch
          %367 = sbr.rel (%p365) target = $region48
        $region47: #{net_forward.1} parent=11 // pred_region
          _
        $region48: #{net_forward.1} parent=11 // pred_fallthru
          _
        // Predicated region
        $region49: #{net_forward.1} parent=11 // pred_check
          %p368 = pneg %p258
        $region50: #{net_forward.1} parent=11 // pred_check_branch
          %370 = sbr.rel (%p368) target = $region52
        $region51: #{net_forward.1} parent=11 // pred_region
          _
        $region52: #{net_forward.1} parent=11 // pred_fallthru
          _
        // Predicated region
        $region53: #{net_forward.1} parent=11 // pred_check
          %p371 = pneg %p279
        $region54: #{net_forward.1} parent=11 // pred_check_branch
          %373 = sbr.rel (%p371) target = $region56
        $region55: #{net_forward.1} parent=11 // pred_region
          _
        $region56: #{net_forward.1} parent=11 // pred_fallthru
          _
        // Predicated region
        $region57: #{net_forward.1} parent=11 // pred_check
          %p374 = pneg %p300
        $region58: #{net_forward.1} parent=11 // pred_check_branch
          %376 = sbr.rel (%p374) target = $region60
        $region59: #{net_forward.1} parent=11 // pred_region
          _
        $region60: #{net_forward.1} parent=11 // pred_fallthru
          _
      $region12: #{net_forward.1} parent=5 // pred_fallthru
        _
      %p377 = scmp.lt.s32.totalorder %s22, 2
      // Predicated region
      $region61: #{net_forward.1} parent=5 // pred_check
        %p378 = pneg %p377
      $region62: #{net_forward.1} parent=5 // pred_check_branch
        %380 = sbr.rel (%p378) target = $region64
      $region63: #{net_forward.1} parent=5 // pred_region
        // Predicated region
        $region65: #{net_forward.1} parent=63 // pred_check
          %p381 = pneg %p42
        $region66: #{net_forward.1} parent=63 // pred_check_branch
          %383 = sbr.rel (%p381) target = $region68
        $region67: #{net_forward.1} parent=63 // pred_region
          %s384 = smul.u32 32, %s22
          %p385 = scmp.lt.s32.totalorder %s384, 63
          %s386 = scalar_select %p385, %s384, 63
          %s387 = smul.addr %s386, 4
          %s388 = scalar_lea.vmem %s0, %s387
          %s389 = smul.u32 32, %s22
        $region68: #{net_forward.1} parent=63 // pred_fallthru
          _
      $region64: #{net_forward.1} parent=5 // pred_fallthru
        _
      %p390 = scmp.le.s32.totalorder 1, %s22
      %p391 = scmp.lt.s32.totalorder %s22, 3
      %p392 = pnand %p390, %p391
      %p393 = pneg %p392
      // Predicated region
      $region69: #{net_forward.1} parent=5 // pred_check
        _
      $region70: #{net_forward.1} parent=5 // pred_check_branch
        %395 = sbr.rel (%p392) target = $region72
      $region71: #{net_forward.1} parent=5 // pred_region
        %s396 = ssub.s32 %s22, 1
        %s397 = smul.u32 32, %s27
        %p398 = scmp.lt.s32.totalorder %s397, 63
        %s399 = scalar_select %p398, %s397, 63
        %s400 = smul.addr %s399, 4
        %s401 = scalar_lea.vmem %s0, %s400
        %p402 = pneg %p48
        %p403 = pneg %p45
        %p404 = pneg %p69
        %p405 = pneg %p66
        %p406 = pneg %p90
        %p407 = pneg %p87
        %p408 = pneg %p111
        %p409 = pneg %p108
        %p410 = pneg %p132
        %p411 = pneg %p129
        %p412 = pneg %p153
        %p413 = pneg %p150
        %p414 = pneg %p174
        %p415 = pneg %p171
        %p416 = pneg %p195
        %p417 = pneg %p192
        %p418 = pneg %p216
        %p419 = pneg %p213
        %p420 = pneg %p237
        %p421 = pneg %p234
        %p422 = pneg %p258
        %p423 = pneg %p255
        %p424 = pneg %p279
        %p425 = pneg %p276
        %p426 = pneg %p300
        %p427 = pneg %p297
        %p428 = pneg %p326
        %p429 = pneg %p323
        %s430 = sand.u32 %s313, 1
        %s431 = scalar_lea.sflag [#allocation3], %s430
        %s432 = sand.u32 %s313, 1
        %s433 = smul.addr %s432, 8
        %s434 = scalar_lea.vmem [#allocation2], %s433
        %s435 = smul.u32 32, %s27
        %p436 = scmp.lt.s32.totalorder %s435, 63
        %s437 = scalar_select %p436, %s435, 63
        %s438 = smul.addr %s437, 4
        %s439 = scalar_lea.vmem %s0, %s438
        %s440 = smul.u32 32, %s27
        %v442 = vld [vmem:[%s439] sm:$0xf]
        %v443 = vld [vmem:[%s439 + $0x4] sm:$0xf]
        %v444 = vld [vmem:[%s439 + $0x8] sm:$0xf]
        %v445 = vld [vmem:[%s439 + $0xc] sm:$0xf]
        %v446 = vld [vmem:[%s439 + $0x10] sm:$0xf]
        %v447 = vld [vmem:[%s439 + $0x14] sm:$0xf]
        %v448 = vld [vmem:[%s439 + $0x18] sm:$0xf]
        %v449 = vld [vmem:[%s439 + $0x1c] sm:$0xf]
        %v450 = vld [vmem:[%s439 + $0x20] sm:$0xf]
        %v451 = vld [vmem:[%s439 + $0x24] sm:$0xf]
        %v452 = vld [vmem:[%s439 + $0x28] sm:$0xf]
        %v453 = vld [vmem:[%s439 + $0x2c] sm:$0xf]
        %v454 = vld [vmem:[%s439 + $0x30] sm:$0xf]
        %v455 = vld [vmem:[%s439 + $0x34] sm:$0xf]
        %v456 = vld [vmem:[%s439 + $0x38] sm:$0xf]
        %v457 = vld [vmem:[%s439 + $0x3c] sm:$0xf]
        %v458 = vld [vmem:[%s439 + $0x40] sm:$0xf]
        %v459 = vld [vmem:[%s439 + $0x44] sm:$0xf]
        %v460 = vld [vmem:[%s439 + $0x48] sm:$0xf]
        %v461 = vld [vmem:[%s439 + $0x4c] sm:$0xf]
        %v462 = vld [vmem:[%s439 + $0x50] sm:$0xf]
        %v463 = vld [vmem:[%s439 + $0x54] sm:$0xf]
        %v464 = vld [vmem:[%s439 + $0x58] sm:$0xf]
        %v465 = vld [vmem:[%s439 + $0x5c] sm:$0xf]
        %v466 = vld [vmem:[%s439 + $0x60] sm:$0xf]
        %v467 = vld [vmem:[%s439 + $0x64] sm:$0xf]
        %v468 = vld [vmem:[%s439 + $0x68] sm:$0xf]
        %v469 = vld [vmem:[%s439 + $0x6c] sm:$0xf]
        %v470 = vld [vmem:[%s439 + $0x70] sm:$0xf]
        %v471 = vld [vmem:[%s439 + $0x74] sm:$0xf]
        %v472 = vld [vmem:[%s439 + $0x78] sm:$0xf]
        %v473 = vld [vmem:[%s439 + $0x7c] sm:$0xf]
        %v506 = vunpack.c.l.b16 %v442
        %v507 = vunpack.c.l.b16 %v443
        %v508 = vunpack.c.l.b16 %v444
        %v509 = vunpack.c.l.b16 %v445
        %v510 = vunpack.c.l.b16 %v446
        %v511 = vunpack.c.l.b16 %v447
        %v512 = vunpack.c.l.b16 %v448
        %v513 = vunpack.c.l.b16 %v449
        %v514 = vunpack.c.l.b16 %v450
        %v515 = vunpack.c.l.b16 %v451
        %v516 = vunpack.c.l.b16 %v452
        %v517 = vunpack.c.l.b16 %v453
        %v518 = vunpack.c.l.b16 %v454
        %v519 = vunpack.c.l.b16 %v455
        %v520 = vunpack.c.l.b16 %v456
        %v521 = vunpack.c.l.b16 %v457
        %v522 = vunpack.c.l.b16 %v458
        %v523 = vunpack.c.l.b16 %v459
        %v524 = vunpack.c.l.b16 %v460
        %v525 = vunpack.c.l.b16 %v461
        %v526 = vunpack.c.l.b16 %v462
        %v527 = vunpack.c.l.b16 %v463
        %v528 = vunpack.c.l.b16 %v464
        %v529 = vunpack.c.l.b16 %v465
        %v530 = vunpack.c.l.b16 %v466
        %v531 = vunpack.c.l.b16 %v467
        %v532 = vunpack.c.l.b16 %v468
        %v533 = vunpack.c.l.b16 %v469
        %v534 = vunpack.c.l.b16 %v470
        %v535 = vunpack.c.l.b16 %v471
        %v536 = vunpack.c.l.b16 %v472
        %v537 = vunpack.c.l.b16 %v473
        %v538 = vpack.c.b16 %v507, %v506
        %v539 = vpack.c.b16 %v509, %v508
        %v540 = vpack.c.b16 %v511, %v510
        %v541 = vpack.c.b16 %v513, %v512
        %v542 = vpack.c.b16 %v515, %v514
        %v543 = vpack.c.b16 %v517, %v516
        %v544 = vpack.c.b16 %v519, %v518
        %v545 = vpack.c.b16 %v521, %v520
        %v546 = vpack.c.b16 %v523, %v522
        %v547 = vpack.c.b16 %v525, %v524
        %v548 = vpack.c.b16 %v527, %v526
        %v549 = vpack.c.b16 %v529, %v528
        %v550 = vpack.c.b16 %v531, %v530
        %v551 = vpack.c.b16 %v533, %v532
        %v552 = vpack.c.b16 %v535, %v534
        %v553 = vpack.c.b16 %v537, %v536
        %vm570 = vsmask.f32 7424
        %v572 = vshrl.u32 %v538, 16
        %v574 = vshll.u32 %v538, 16
        %v576 = vrot.slane %v574, 1
        %v577 = vor.u32 %v572, %v576
        %v579 = vshll.u32 %v539, 16
        %v581 = vrot.slane %v579, 1
        %v582 = vsel %vm570, %v577, %v581
        %v583 = vshrl.u32 %v539, 16
        %v585 = vor.u32 %v583, %v581
        %v587 = vshll.u32 %v540, 16
        %v589 = vrot.slane %v587, 1
        %v590 = vsel %vm570, %v585, %v589
        %v591 = vshrl.u32 %v540, 16
        %v593 = vor.u32 %v591, %v589
        %v595 = vshll.u32 %v541, 16
        %v597 = vrot.slane %v595, 1
        %v598 = vsel %vm570, %v593, %v597
        %v599 = vshrl.u32 %v541, 16
        %v601 = vor.u32 %v599, %v597
        %v603 = vshll.u32 %v542, 16
        %v605 = vrot.slane %v603, 1
        %v606 = vsel %vm570, %v601, %v605
        %v607 = vshrl.u32 %v542, 16
        %v609 = vor.u32 %v607, %v605
        %v611 = vshll.u32 %v543, 16
        %v613 = vrot.slane %v611, 1
        %v614 = vsel %vm570, %v609, %v613
        %v615 = vshrl.u32 %v543, 16
        %v617 = vor.u32 %v615, %v613
        %v619 = vshll.u32 %v544, 16
        %v621 = vrot.slane %v619, 1
        %v622 = vsel %vm570, %v617, %v621
        %v623 = vshrl.u32 %v544, 16
        %v625 = vor.u32 %v623, %v621
        %v627 = vshll.u32 %v545, 16
        %v629 = vrot.slane %v627, 1
        %v630 = vsel %vm570, %v625, %v629
        %v631 = vshrl.u32 %v545, 16
        %v633 = vor.u32 %v631, %v629
        %v635 = vshll.u32 %v546, 16
        %v637 = vrot.slane %v635, 1
        %v638 = vsel %vm570, %v633, %v637
        %v639 = vshrl.u32 %v546, 16
        %v641 = vor.u32 %v639, %v637
        %v643 = vshll.u32 %v547, 16
        %v645 = vrot.slane %v643, 1
        %v646 = vsel %vm570, %v641, %v645
        %v647 = vshrl.u32 %v547, 16
        %v649 = vor.u32 %v647, %v645
        %v651 = vshll.u32 %v548, 16
        %v653 = vrot.slane %v651, 1
        %v654 = vsel %vm570, %v649, %v653
        %v655 = vshrl.u32 %v548, 16
        %v657 = vor.u32 %v655, %v653
        %v659 = vshll.u32 %v549, 16
        %v661 = vrot.slane %v659, 1
        %v662 = vsel %vm570, %v657, %v661
        %v663 = vshrl.u32 %v549, 16
        %v665 = vor.u32 %v663, %v661
        %v667 = vshll.u32 %v550, 16
        %v669 = vrot.slane %v667, 1
        %v670 = vsel %vm570, %v665, %v669
        %v671 = vshrl.u32 %v550, 16
        %v673 = vor.u32 %v671, %v669
        %v675 = vshll.u32 %v551, 16
        %v677 = vrot.slane %v675, 1
        %v678 = vsel %vm570, %v673, %v677
        %v679 = vshrl.u32 %v551, 16
        %v681 = vor.u32 %v679, %v677
        %v683 = vshll.u32 %v552, 16
        %v685 = vrot.slane %v683, 1
        %v686 = vsel %vm570, %v681, %v685
        %v687 = vshrl.u32 %v552, 16
        %v689 = vor.u32 %v687, %v685
        %v691 = vshll.u32 %v553, 16
        %v693 = vrot.slane %v691, 1
        %v694 = vsel %vm570, %v689, %v693
        %v695 = vshrl.u32 %v553, 16
        %v697 = vor.u32 %v695, %v693
        %v699 = vshll.u32 0, 16
        %v701 = vrot.slane %v699, 1
        %v702 = vsel %vm570, %v697, %v701
        %vm720 = vcmask 1046528
        %v721 = vrot.slane %v538, 1
        %v722 = vrot.slane %v539, 1
        %v723 = vsel %vm720, %v721, %v722
        %v724 = vrot.slane %v540, 1
        %v725 = vsel %vm720, %v722, %v724
        %v726 = vrot.slane %v541, 1
        %v727 = vsel %vm720, %v724, %v726
        %v728 = vrot.slane %v542, 1
        %v729 = vsel %vm720, %v726, %v728
        %v730 = vrot.slane %v543, 1
        %v731 = vsel %vm720, %v728, %v730
        %v732 = vrot.slane %v544, 1
        %v733 = vsel %vm720, %v730, %v732
        %v734 = vrot.slane %v545, 1
        %v735 = vsel %vm720, %v732, %v734
        %v736 = vrot.slane %v546, 1
        %v737 = vsel %vm720, %v734, %v736
        %v738 = vrot.slane %v547, 1
        %v739 = vsel %vm720, %v736, %v738
        %v740 = vrot.slane %v548, 1
        %v741 = vsel %vm720, %v738, %v740
        %v742 = vrot.slane %v549, 1
        %v743 = vsel %vm720, %v740, %v742
        %v744 = vrot.slane %v550, 1
        %v745 = vsel %vm720, %v742, %v744
        %v746 = vrot.slane %v551, 1
        %v747 = vsel %vm720, %v744, %v746
        %v748 = vrot.slane %v552, 1
        %v749 = vsel %vm720, %v746, %v748
        %v750 = vrot.slane %v553, 1
        %v751 = vsel %vm720, %v748, %v750
        %v752 = vrot.slane 0, 1
        %v753 = vsel %vm720, %v750, %v752
        %vm770 = vsmask.f32 6400
        %v771 = vrot.slane %v572, 1
        %v772 = vrot.slane %v574, 2
        %v773 = vor.u32 %v771, %v772
        %v774 = vrot.slane %v583, 1
        %v775 = vrot.slane %v579, 2
        %v776 = vor.u32 %v774, %v775
        %v777 = vsel %vm770, %v773, %v776
        %v778 = vrot.slane %v591, 1
        %v779 = vrot.slane %v587, 2
        %v780 = vor.u32 %v778, %v779
        %v781 = vsel %vm770, %v776, %v780
        %v782 = vrot.slane %v599, 1
        %v783 = vrot.slane %v595, 2
        %v784 = vor.u32 %v782, %v783
        %v785 = vsel %vm770, %v780, %v784
        %v786 = vrot.slane %v607, 1
        %v787 = vrot.slane %v603, 2
        %v788 = vor.u32 %v786, %v787
        %v789 = vsel %vm770, %v784, %v788
        %v790 = vrot.slane %v615, 1
        %v791 = vrot.slane %v611, 2
        %v792 = vor.u32 %v790, %v791
        %v793 = vsel %vm770, %v788, %v792
        %v794 = vrot.slane %v623, 1
        %v795 = vrot.slane %v619, 2
        %v796 = vor.u32 %v794, %v795
        %v797 = vsel %vm770, %v792, %v796
        %v798 = vrot.slane %v631, 1
        %v799 = vrot.slane %v627, 2
        %v800 = vor.u32 %v798, %v799
        %v801 = vsel %vm770, %v796, %v800
        %v802 = vrot.slane %v639, 1
        %v803 = vrot.slane %v635, 2
        %v804 = vor.u32 %v802, %v803
        %v805 = vsel %vm770, %v800, %v804
        %v806 = vrot.slane %v647, 1
        %v807 = vrot.slane %v643, 2
        %v808 = vor.u32 %v806, %v807
        %v809 = vsel %vm770, %v804, %v808
        %v810 = vrot.slane %v655, 1
        %v811 = vrot.slane %v651, 2
        %v812 = vor.u32 %v810, %v811
        %v813 = vsel %vm770, %v808, %v812
        %v814 = vrot.slane %v663, 1
        %v815 = vrot.slane %v659, 2
        %v816 = vor.u32 %v814, %v815
        %v817 = vsel %vm770, %v812, %v816
        %v818 = vrot.slane %v671, 1
        %v819 = vrot.slane %v667, 2
        %v820 = vor.u32 %v818, %v819
        %v821 = vsel %vm770, %v816, %v820
        %v822 = vrot.slane %v679, 1
        %v823 = vrot.slane %v675, 2
        %v824 = vor.u32 %v822, %v823
        %v825 = vsel %vm770, %v820, %v824
        %v826 = vrot.slane %v687, 1
        %v827 = vrot.slane %v683, 2
        %v828 = vor.u32 %v826, %v827
        %v829 = vsel %vm770, %v824, %v828
        %v830 = vrot.slane %v695, 1
        %v831 = vrot.slane %v691, 2
        %v832 = vor.u32 %v830, %v831
        %v833 = vsel %vm770, %v828, %v832
        %v834 = vshrl.u32 0, 16
        %v836 = vrot.slane %v834, 1
        %v837 = vrot.slane %v699, 2
        %v838 = vor.u32 %v836, %v837
        %v839 = vsel %vm770, %v832, %v838
        %vm856 = vcmask 1045504
        %v857 = vrot.slane %v538, 2
        %v858 = vrot.slane %v539, 2
        %v859 = vsel %vm856, %v857, %v858
        %v860 = vrot.slane %v540, 2
        %v861 = vsel %vm856, %v858, %v860
        %v862 = vrot.slane %v541, 2
        %v863 = vsel %vm856, %v860, %v862
        %v864 = vrot.slane %v542, 2
        %v865 = vsel %vm856, %v862, %v864
        %v866 = vrot.slane %v543, 2
        %v867 = vsel %vm856, %v864, %v866
        %v868 = vrot.slane %v544, 2
        %v869 = vsel %vm856, %v866, %v868
        %v870 = vrot.slane %v545, 2
        %v871 = vsel %vm856, %v868, %v870
        %v872 = vrot.slane %v546, 2
        %v873 = vsel %vm856, %v870, %v872
        %v874 = vrot.slane %v547, 2
        %v875 = vsel %vm856, %v872, %v874
        %v876 = vrot.slane %v548, 2
        %v877 = vsel %vm856, %v874, %v876
        %v878 = vrot.slane %v549, 2
        %v879 = vsel %vm856, %v876, %v878
        %v880 = vrot.slane %v550, 2
        %v881 = vsel %vm856, %v878, %v880
        %v882 = vrot.slane %v551, 2
        %v883 = vsel %vm856, %v880, %v882
        %v884 = vrot.slane %v552, 2
        %v885 = vsel %vm856, %v882, %v884
        %v886 = vrot.slane %v553, 2
        %v887 = vsel %vm856, %v884, %v886
        %v888 = vrot.slane 0, 2
        %v889 = vsel %vm856, %v886, %v888
        %v906 = vld [vmem:[%s1] sm:$0xff]
        %v907 = vld [vmem:[%s1 + $0x8] sm:$0xff]
        %v908 = vld [vmem:[%s1 + $0x10] sm:$0xff]
        %v909 = vld [vmem:[%s1 + $0x18] sm:$0xff]
        %v910 = vld [vmem:[%s1 + $0x20] sm:$0xff]
        %v911 = vld [vmem:[%s1 + $0x28] sm:$0xff]
        %v912 = vld [vmem:[%s1 + $0x30] sm:$0xff]
        %v913 = vld [vmem:[%s1 + $0x38] sm:$0xff]
        %v914 = vld [vmem:[%s1 + $0x40] sm:$0xff]
        %v915 = vld [vmem:[%s1 + $0x48] sm:$0xff]
        %v916 = vld [vmem:[%s1 + $0x50] sm:$0xff]
        %v917 = vld [vmem:[%s1 + $0x58] sm:$0xff]
        %v918 = vld [vmem:[%s1 + $0x60] sm:$0xff]
        %v919 = vld [vmem:[%s1 + $0x68] sm:$0xff]
        %v920 = vld [vmem:[%s1 + $0x70] sm:$0xff]
        %v921 = vld [vmem:[%s1 + $0x78] sm:$0xff]
        %v922 = vld [vmem:[%s1 + $0x80] sm:$0xff]
        %v923 = vld [vmem:[%s1 + $0x88] sm:$0xff]
        %v924 = vld [vmem:[%s1 + $0x90] sm:$0xff]
        %v925 = vld [vmem:[%s1 + $0x98] sm:$0xff]
        %v926 = vld [vmem:[%s1 + $0xa0] sm:$0xff]
        %v927 = vld [vmem:[%s1 + $0xa8] sm:$0xff]
        %v928 = vld [vmem:[%s1 + $0xb0] sm:$0xff]
        %v929 = vld [vmem:[%s1 + $0xb8] sm:$0xff]
        %v930 = vld [vmem:[%s1 + $0xc0] sm:$0xff]
        %v931 = vld [vmem:[%s1 + $0xc8] sm:$0xff]
        %v932 = vld [vmem:[%s1 + $0xd0] sm:$0xff]
        %v933 = vld [vmem:[%s1 + $0xd8] sm:$0xff]
        %v934 = vld [vmem:[%s1 + $0xe0] sm:$0xff]
        %v935 = vld [vmem:[%s1 + $0xe8] sm:$0xff]
        %v936 = vld [vmem:[%s1 + $0xf0] sm:$0xff]
        %v937 = vld [vmem:[%s1 + $0xf8] sm:$0xff]
        %v938 = vld [vmem:[%s1 + $0x100] sm:$0xff]
        %v939 = vld [vmem:[%s1 + $0x108] sm:$0xff]
        %v940 = vld [vmem:[%s1 + $0x110] sm:$0xff]
        %v941 = vld [vmem:[%s1 + $0x118] sm:$0xff]
        %v942 = vld [vmem:[%s1 + $0x120] sm:$0xff]
        %v943 = vld [vmem:[%s1 + $0x128] sm:$0xff]
        %v944 = vld [vmem:[%s1 + $0x130] sm:$0xff]
        %v945 = vld [vmem:[%s1 + $0x138] sm:$0xff]
        %v946 = vld [vmem:[%s1 + $0x140] sm:$0xff]
        %v947 = vld [vmem:[%s1 + $0x148] sm:$0xff]
        %v948 = vld [vmem:[%s1 + $0x150] sm:$0xff]
        %v949 = vld [vmem:[%s1 + $0x158] sm:$0xff]
        %v950 = vld [vmem:[%s1 + $0x160] sm:$0xff]
        %v951 = vld [vmem:[%s1 + $0x168] sm:$0xff]
        %v952 = vld [vmem:[%s1 + $0x170] sm:$0xff]
        %v953 = vld [vmem:[%s1 + $0x178] sm:$0xff]
        %v954 = vld [vmem:[%s1 + $0x180] sm:$0xff]
        %v955 = vld [vmem:[%s1 + $0x188] sm:$0xff]
        %v956 = vld [vmem:[%s1 + $0x190] sm:$0xff]
        %v957 = vld [vmem:[%s1 + $0x198] sm:$0xff]
        %v958 = vld [vmem:[%s1 + $0x1a0] sm:$0xff]
        %v959 = vld [vmem:[%s1 + $0x1a8] sm:$0xff]
        %v960 = vld [vmem:[%s1 + $0x1b0] sm:$0xff]
        %v961 = vld [vmem:[%s1 + $0x1b8] sm:$0xff]
        %v962 = vld [vmem:[%s1 + $0x1c0] sm:$0xff]
        %v963 = vld [vmem:[%s1 + $0x1c8] sm:$0xff]
        %v964 = vld [vmem:[%s1 + $0x1d0] sm:$0xff]
        %v965 = vld [vmem:[%s1 + $0x1d8] sm:$0xff]
        %v966 = vld [vmem:[%s1 + $0x1e0] sm:$0xff]
        %v967 = vld [vmem:[%s1 + $0x1e8] sm:$0xff]
        %v968 = vld [vmem:[%s1 + $0x1f0] sm:$0xff]
        %v969 = vld [vmem:[%s1 + $0x1f8] sm:$0xff]
        %v970 = vld [vmem:[%s1 + $0x200] sm:$0xff]
        %v971 = vld [vmem:[%s1 + $0x208] sm:$0xff]
        %v972 = vld [vmem:[%s1 + $0x210] sm:$0xff]
        %v973 = vld [vmem:[%s1 + $0x218] sm:$0xff]
        %v974 = vld [vmem:[%s1 + $0x220] sm:$0xff]
        %v975 = vld [vmem:[%s1 + $0x228] sm:$0xff]
        %v976 = vld [vmem:[%s1 + $0x230] sm:$0xff]
        %v977 = vld [vmem:[%s1 + $0x238] sm:$0xff]
        %v978 = vld [vmem:[%s1 + $0x240] sm:$0xff]
        %v979 = vld [vmem:[%s1 + $0x248] sm:$0xff]
        %v980 = vld [vmem:[%s1 + $0x250] sm:$0xff]
        %v981 = vld [vmem:[%s1 + $0x258] sm:$0xff]
        %v982 = vld [vmem:[%s1 + $0x260] sm:$0xff]
        %v983 = vld [vmem:[%s1 + $0x268] sm:$0xff]
        %v984 = vld [vmem:[%s1 + $0x270] sm:$0xff]
        %v985 = vld [vmem:[%s1 + $0x278] sm:$0xff]
        %v986 = vld [vmem:[%s2] sm:$0x3]
        %v988 = vlaneseq
        %v989 = vshrl.u32 %v988, 7
        %v990 = vsub.s32 0, %v989
        %v991 = vrot.slane %v986, %v990
        %v992 = vlaneseq
        %v993 = vshrl.u32 %v992, 7
        %v994 = vsub.s32 1, %v993
        %v995 = vrot.slane %v986, %v994
        %v1078 = vunpack.c.l.b16 %v906
        %v1079 = vunpack.c.h.b16 %v906
        %v1080 = vunpack.c.l.b16 %v907
        %v1081 = vunpack.c.h.b16 %v907
        %v1082 = vunpack.c.l.b16 %v908
        %v1083 = vunpack.c.h.b16 %v908
        %v1084 = vunpack.c.l.b16 %v909
        %v1085 = vunpack.c.h.b16 %v909
        %v1086 = vunpack.c.l.b16 %v910
        %v1087 = vunpack.c.h.b16 %v910
        %v1088 = vunpack.c.l.b16 %v911
        %v1089 = vunpack.c.h.b16 %v911
        %v1090 = vunpack.c.l.b16 %v912
        %v1091 = vunpack.c.h.b16 %v912
        %v1092 = vunpack.c.l.b16 %v913
        %v1093 = vunpack.c.h.b16 %v913
        %v1094 = vunpack.c.l.b16 %v914
        %v1095 = vunpack.c.h.b16 %v914
        %v1096 = vunpack.c.l.b16 %v915
        %v1097 = vunpack.c.h.b16 %v915
        %v1098 = vunpack.c.l.b16 %v916
        %v1099 = vunpack.c.h.b16 %v916
        %v1100 = vunpack.c.l.b16 %v917
        %v1101 = vunpack.c.h.b16 %v917
        %v1102 = vunpack.c.l.b16 %v918
        %v1103 = vunpack.c.h.b16 %v918
        %v1104 = vunpack.c.l.b16 %v919
        %v1105 = vunpack.c.h.b16 %v919
        %v1106 = vunpack.c.l.b16 %v920
        %v1107 = vunpack.c.h.b16 %v920
        %v1108 = vunpack.c.l.b16 %v921
        %v1109 = vunpack.c.h.b16 %v921
        %v1110 = vunpack.c.l.b16 %v922
        %v1111 = vunpack.c.h.b16 %v922
        %v1112 = vunpack.c.l.b16 %v923
        %v1113 = vunpack.c.h.b16 %v923
        %v1114 = vunpack.c.l.b16 %v924
        %v1115 = vunpack.c.h.b16 %v924
        %v1116 = vunpack.c.l.b16 %v925
        %v1117 = vunpack.c.h.b16 %v925
        %v1118 = vunpack.c.l.b16 %v926
        %v1119 = vunpack.c.h.b16 %v926
        %v1120 = vunpack.c.l.b16 %v927
        %v1121 = vunpack.c.h.b16 %v927
        %v1122 = vunpack.c.l.b16 %v928
        %v1123 = vunpack.c.h.b16 %v928
        %v1124 = vunpack.c.l.b16 %v929
        %v1125 = vunpack.c.h.b16 %v929
        %v1126 = vunpack.c.l.b16 %v930
        %v1127 = vunpack.c.h.b16 %v930
        %v1128 = vunpack.c.l.b16 %v931
        %v1129 = vunpack.c.h.b16 %v931
        %v1130 = vunpack.c.l.b16 %v932
        %v1131 = vunpack.c.h.b16 %v932
        %v1132 = vunpack.c.l.b16 %v933
        %v1133 = vunpack.c.h.b16 %v933
        %v1134 = vunpack.c.l.b16 %v934
        %v1135 = vunpack.c.h.b16 %v934
        %v1136 = vunpack.c.l.b16 %v935
        %v1137 = vunpack.c.h.b16 %v935
        %v1138 = vunpack.c.l.b16 %v936
        %v1139 = vunpack.c.h.b16 %v936
        %v1140 = vunpack.c.l.b16 %v937
        %v1141 = vunpack.c.h.b16 %v937
        %v1142 = vunpack.c.l.b16 %v938
        %v1143 = vunpack.c.h.b16 %v938
        %v1144 = vunpack.c.l.b16 %v939
        %v1145 = vunpack.c.h.b16 %v939
        %v1146 = vunpack.c.l.b16 %v940
        %v1147 = vunpack.c.h.b16 %v940
        %v1148 = vunpack.c.l.b16 %v941
        %v1149 = vunpack.c.h.b16 %v941
        %v1150 = vunpack.c.l.b16 %v942
        %v1151 = vunpack.c.h.b16 %v942
        %v1152 = vunpack.c.l.b16 %v943
        %v1153 = vunpack.c.h.b16 %v943
        %v1154 = vunpack.c.l.b16 %v944
        %v1155 = vunpack.c.h.b16 %v944
        %v1156 = vunpack.c.l.b16 %v945
        %v1157 = vunpack.c.h.b16 %v945
        %v1158 = vunpack.c.l.b16 %v946
        %v1159 = vunpack.c.h.b16 %v946
        %v1160 = vunpack.c.l.b16 %v947
        %v1161 = vunpack.c.h.b16 %v947
        %v1162 = vunpack.c.l.b16 %v948
        %v1163 = vunpack.c.h.b16 %v948
        %v1164 = vunpack.c.l.b16 %v949
        %v1165 = vunpack.c.h.b16 %v949
        %v1166 = vunpack.c.l.b16 %v950
        %v1167 = vunpack.c.h.b16 %v950
        %v1168 = vunpack.c.l.b16 %v951
        %v1169 = vunpack.c.h.b16 %v951
        %v1170 = vunpack.c.l.b16 %v952
        %v1171 = vunpack.c.h.b16 %v952
        %v1172 = vunpack.c.l.b16 %v953
        %v1173 = vunpack.c.h.b16 %v953
        %v1174 = vunpack.c.l.b16 %v954
        %v1175 = vunpack.c.h.b16 %v954
        %v1176 = vunpack.c.l.b16 %v955
        %v1177 = vunpack.c.h.b16 %v955
        %v1178 = vunpack.c.l.b16 %v956
        %v1179 = vunpack.c.h.b16 %v956
        %v1180 = vunpack.c.l.b16 %v957
        %v1181 = vunpack.c.h.b16 %v957
        %v1182 = vunpack.c.l.b16 %v958
        %v1183 = vunpack.c.h.b16 %v958
        %v1184 = vunpack.c.l.b16 %v959
        %v1185 = vunpack.c.h.b16 %v959
        %v1186 = vunpack.c.l.b16 %v960
        %v1187 = vunpack.c.h.b16 %v960
        %v1188 = vunpack.c.l.b16 %v961
        %v1189 = vunpack.c.h.b16 %v961
        %v1190 = vunpack.c.l.b16 %v962
        %v1191 = vunpack.c.h.b16 %v962
        %v1192 = vunpack.c.l.b16 %v963
        %v1193 = vunpack.c.h.b16 %v963
        %v1194 = vunpack.c.l.b16 %v964
        %v1195 = vunpack.c.h.b16 %v964
        %v1196 = vunpack.c.l.b16 %v965
        %v1197 = vunpack.c.h.b16 %v965
        %v1198 = vunpack.c.l.b16 %v966
        %v1199 = vunpack.c.h.b16 %v966
        %v1200 = vunpack.c.l.b16 %v967
        %v1201 = vunpack.c.h.b16 %v967
        %v1202 = vunpack.c.l.b16 %v968
        %v1203 = vunpack.c.h.b16 %v968
        %v1204 = vunpack.c.l.b16 %v969
        %v1205 = vunpack.c.h.b16 %v969
        %v1206 = vunpack.c.l.b16 %v970
        %v1207 = vunpack.c.h.b16 %v970
        %v1208 = vunpack.c.l.b16 %v971
        %v1209 = vunpack.c.h.b16 %v971
        %v1210 = vunpack.c.l.b16 %v972
        %v1211 = vunpack.c.h.b16 %v972
        %v1212 = vunpack.c.l.b16 %v973
        %v1213 = vunpack.c.h.b16 %v973
        %v1214 = vunpack.c.l.b16 %v974
        %v1215 = vunpack.c.h.b16 %v974
        %v1216 = vunpack.c.l.b16 %v975
        %v1217 = vunpack.c.h.b16 %v975
        %v1218 = vunpack.c.l.b16 %v976
        %v1219 = vunpack.c.h.b16 %v976
        %v1220 = vunpack.c.l.b16 %v977
        %v1221 = vunpack.c.h.b16 %v977
        %v1222 = vunpack.c.l.b16 %v978
        %v1223 = vunpack.c.h.b16 %v978
        %v1224 = vunpack.c.l.b16 %v979
        %v1225 = vunpack.c.h.b16 %v979
        %v1226 = vunpack.c.l.b16 %v980
        %v1227 = vunpack.c.h.b16 %v980
        %v1228 = vunpack.c.l.b16 %v981
        %v1229 = vunpack.c.h.b16 %v981
        %v1230 = vunpack.c.l.b16 %v982
        %v1231 = vunpack.c.h.b16 %v982
        %v1232 = vunpack.c.l.b16 %v983
        %v1233 = vunpack.c.h.b16 %v983
        %v1234 = vunpack.c.l.b16 %v984
        %v1235 = vunpack.c.h.b16 %v984
        %v1236 = vunpack.c.l.b16 %v985
        %v1237 = vunpack.c.h.b16 %v985
        %v1238 = vpack.c.b16 %v1080, %v1078
        %v1239 = vpack.c.b16 %v1081, %v1079
        %v1240 = vpack.c.b16 %v1084, %v1082
        %v1241 = vpack.c.b16 %v1085, %v1083
        %v1242 = vpack.c.b16 %v1088, %v1086
        %v1243 = vpack.c.b16 %v1089, %v1087
        %v1244 = vpack.c.b16 %v1092, %v1090
        %v1245 = vpack.c.b16 %v1093, %v1091
        %v1246 = vpack.c.b16 %v1096, %v1094
        %v1247 = vpack.c.b16 %v1097, %v1095
        %v1248 = vpack.c.b16 %v1100, %v1098
        %v1249 = vpack.c.b16 %v1101, %v1099
        %v1250 = vpack.c.b16 %v1104, %v1102
        %v1251 = vpack.c.b16 %v1105, %v1103
        %v1252 = vpack.c.b16 %v1108, %v1106
        %v1253 = vpack.c.b16 %v1109, %v1107
        %v1254 = vpack.c.b16 %v1112, %v1110
        %v1255 = vpack.c.b16 %v1113, %v1111
        %v1256 = vpack.c.b16 %v1116, %v1114
        %v1257 = vpack.c.b16 %v1117, %v1115
        %v1258 = vpack.c.b16 %v1120, %v1118
        %v1259 = vpack.c.b16 %v1121, %v1119
        %v1260 = vpack.c.b16 %v1124, %v1122
        %v1261 = vpack.c.b16 %v1125, %v1123
        %v1262 = vpack.c.b16 %v1128, %v1126
        %v1263 = vpack.c.b16 %v1129, %v1127
        %v1264 = vpack.c.b16 %v1132, %v1130
        %v1265 = vpack.c.b16 %v1133, %v1131
        %v1266 = vpack.c.b16 %v1136, %v1134
        %v1267 = vpack.c.b16 %v1137, %v1135
        %v1268 = vpack.c.b16 %v1140, %v1138
        %v1269 = vpack.c.b16 %v1141, %v1139
        %v1270 = vpack.c.b16 %v1144, %v1142
        %v1271 = vpack.c.b16 %v1145, %v1143
        %v1272 = vpack.c.b16 %v1148, %v1146
        %v1273 = vpack.c.b16 %v1149, %v1147
        %v1274 = vpack.c.b16 %v1152, %v1150
        %v1275 = vpack.c.b16 %v1153, %v1151
        %v1276 = vpack.c.b16 %v1156, %v1154
        %v1277 = vpack.c.b16 %v1157, %v1155
        %v1278 = vpack.c.b16 %v1160, %v1158
        %v1279 = vpack.c.b16 %v1161, %v1159
        %v1280 = vpack.c.b16 %v1164, %v1162
        %v1281 = vpack.c.b16 %v1165, %v1163
        %v1282 = vpack.c.b16 %v1168, %v1166
        %v1283 = vpack.c.b16 %v1169, %v1167
        %v1284 = vpack.c.b16 %v1172, %v1170
        %v1285 = vpack.c.b16 %v1173, %v1171
        %v1286 = vpack.c.b16 %v1176, %v1174
        %v1287 = vpack.c.b16 %v1177, %v1175
        %v1288 = vpack.c.b16 %v1180, %v1178
        %v1289 = vpack.c.b16 %v1181, %v1179
        %v1290 = vpack.c.b16 %v1184, %v1182
        %v1291 = vpack.c.b16 %v1185, %v1183
        %v1292 = vpack.c.b16 %v1188, %v1186
        %v1293 = vpack.c.b16 %v1189, %v1187
        %v1294 = vpack.c.b16 %v1192, %v1190
        %v1295 = vpack.c.b16 %v1193, %v1191
        %v1296 = vpack.c.b16 %v1196, %v1194
        %v1297 = vpack.c.b16 %v1197, %v1195
        %v1298 = vpack.c.b16 %v1200, %v1198
        %v1299 = vpack.c.b16 %v1201, %v1199
        %v1300 = vpack.c.b16 %v1204, %v1202
        %v1301 = vpack.c.b16 %v1205, %v1203
        %v1302 = vpack.c.b16 %v1208, %v1206
        %v1303 = vpack.c.b16 %v1209, %v1207
        %v1304 = vpack.c.b16 %v1212, %v1210
        %v1305 = vpack.c.b16 %v1213, %v1211
        %v1306 = vpack.c.b16 %v1216, %v1214
        %v1307 = vpack.c.b16 %v1217, %v1215
        %v1308 = vpack.c.b16 %v1220, %v1218
        %v1309 = vpack.c.b16 %v1221, %v1219
        %v1310 = vpack.c.b16 %v1224, %v1222
        %v1311 = vpack.c.b16 %v1225, %v1223
        %v1312 = vpack.c.b16 %v1228, %v1226
        %v1313 = vpack.c.b16 %v1229, %v1227
        %v1314 = vpack.c.b16 %v1232, %v1230
        %v1315 = vpack.c.b16 %v1233, %v1231
        %v1316 = vpack.c.b16 %v1236, %v1234
        %v1317 = vpack.c.b16 %v1237, %v1235
        %1398 = vmatprep.subr.bf16.mxu0 %v1239
        %1399 = vmatpush1.bf16.msra.mxu0 %v1238
        %1400 = vmatprep.subr.bf16.mxu0 %v1241
        %1401 = vmatpush1.bf16.msra.mxu0 %v1240
        %1402 = vmatprep.subr.bf16.mxu0 %v1243
        %1403 = vmatpush1.bf16.msra.mxu0 %v1242
        %1404 = vmatprep.subr.bf16.mxu0 %v1245
        %1405 = vmatpush1.bf16.msra.mxu0 %v1244
        %1406 = vmatprep.subr.bf16.mxu0 %v1247
        %1407 = vmatpush1.bf16.msra.mxu0 %v1246
        %1408 = vmatprep.subr.bf16.mxu0 %v1249
        %1409 = vmatpush1.bf16.msra.mxu0 %v1248
        %1410 = vmatprep.subr.bf16.mxu0 %v1251
        %1411 = vmatpush1.bf16.msra.mxu0 %v1250
        %1412 = vmatprep.subr.bf16.mxu0 %v1253
        %1413 = vmatpush1.bf16.msra.mxu0 %v1252
        %1414 = vmatprep.subr.bf16.mxu0 %v1255
        %1415 = vmatpush1.bf16.msra.mxu0 %v1254
        %1416 = vmatprep.subr.bf16.mxu0 %v1257
        %1417 = vmatpush1.bf16.msra.mxu0 %v1256
        %1418 = vmatprep.subr.bf16.mxu0 %v1259
        %1419 = vmatpush1.bf16.msra.mxu0 %v1258
        %1420 = vmatprep.subr.bf16.mxu0 %v1261
        %1421 = vmatpush1.bf16.msra.mxu0 %v1260
        %1422 = vmatprep.subr.bf16.mxu0 %v1263
        %1423 = vmatpush1.bf16.msra.mxu0 %v1262
        %1424 = vmatprep.subr.bf16.mxu0 %v1265
        %1425 = vmatpush1.bf16.msra.mxu0 %v1264
        %1426 = vmatprep.subr.bf16.mxu0 %v1267
        %1427 = vmatpush1.bf16.msra.mxu0 %v1266
        %1428 = vmatprep.subr.bf16.mxu0 %v1269
        %1429 = vmatpush1.bf16.msra.mxu0 %v1268
        %1430 = vmatprep.mubr.bf16.mxu0 %v582
        %1431 = vmatmul.mubr.bf16.gmra.mrb[0].mxu0 %v538
        %v1432 = vpop.f32.mrb[0].mxu0
        %v1433 = vadd.f32 %v991, %v1432
        %v1434 = vpop.f32.mrb[0].mxu0
        %v1435 = vadd.f32 %v995, %v1434
        %v1436 = vpop.f32.mrb[0].mxu0
        %v1437 = vadd.f32 %v991, %v1436
        %v1438 = vpop.f32.mrb[0].mxu0
        %v1439 = vadd.f32 %v995, %v1438
        %1440 = vmatprep.mubr.bf16.mxu0 %v590
        %1441 = vmatmul.mubr.bf16.gmra.mrb[0].mxu0 %v539
        %v1442 = vpop.f32.mrb[0].mxu0
        %v1443 = vadd.f32 %v991, %v1442
        %v1444 = vpop.f32.mrb[0].mxu0
        %v1445 = vadd.f32 %v995, %v1444
        %v1446 = vpop.f32.mrb[0].mxu0
        %v1447 = vadd.f32 %v991, %v1446
        %v1448 = vpop.f32.mrb[0].mxu0
        %v1449 = vadd.f32 %v995, %v1448
        %1450 = vmatprep.mubr.bf16.mxu0 %v598
        %1451 = vmatmul.mubr.bf16.gmra.mrb[0].mxu0 %v540
        %v1452 = vpop.f32.mrb[0].mxu0
        %v1453 = vadd.f32 %v991, %v1452
        %v1454 = vpop.f32.mrb[0].mxu0
        %v1455 = vadd.f32 %v995, %v1454
        %v1456 = vpop.f32.mrb[0].mxu0
        %v1457 = vadd.f32 %v991, %v1456
        %v1458 = vpop.f32.mrb[0].mxu0
        %v1459 = vadd.f32 %v995, %v1458
        %1460 = vmatprep.mubr.bf16.mxu0 %v606
        %1461 = vmatmul.mubr.bf16.gmra.mrb[0].mxu0 %v541
        %v1462 = vpop.f32.mrb[0].mxu0
        %v1463 = vadd.f32 %v991, %v1462
        %v1464 = vpop.f32.mrb[0].mxu0
        %v1465 = vadd.f32 %v995, %v1464
        %v1466 = vpop.f32.mrb[0].mxu0
        %v1467 = vadd.f32 %v991, %v1466
        %v1468 = vpop.f32.mrb[0].mxu0
        %v1469 = vadd.f32 %v995, %v1468
        %1470 = vmatprep.mubr.bf16.mxu0 %v614
        %1471 = vmatmul.mubr.bf16.gmra.mrb[0].mxu0 %v542
        %v1472 = vpop.f32.mrb[0].mxu0
        %v1473 = vadd.f32 %v991, %v1472
        %v1474 = vpop.f32.mrb[0].mxu0
        %v1475 = vadd.f32 %v995, %v1474
        %v1476 = vpop.f32.mrb[0].mxu0
        %v1477 = vadd.f32 %v991, %v1476
        %v1478 = vpop.f32.mrb[0].mxu0
        %v1479 = vadd.f32 %v995, %v1478
        %1480 = vmatprep.mubr.bf16.mxu0 %v622
        %1481 = vmatmul.mubr.bf16.gmra.mrb[0].mxu0 %v543
        %v1482 = vpop.f32.mrb[0].mxu0
        %v1483 = vadd.f32 %v991, %v1482
        %v1484 = vpop.f32.mrb[0].mxu0
        %v1485 = vadd.f32 %v995, %v1484
        %v1486 = vpop.f32.mrb[0].mxu0
        %v1487 = vadd.f32 %v991, %v1486
        %v1488 = vpop.f32.mrb[0].mxu0
        %v1489 = vadd.f32 %v995, %v1488
        %1490 = vmatprep.mubr.bf16.mxu0 %v630
        %1491 = vmatmul.mubr.bf16.gmra.mrb[0].mxu0 %v544
        %v1492 = vpop.f32.mrb[0].mxu0
        %v1493 = vadd.f32 %v991, %v1492
        %v1494 = vpop.f32.mrb[0].mxu0
        %v1495 = vadd.f32 %v995, %v1494
        %v1496 = vpop.f32.mrb[0].mxu0
        %v1497 = vadd.f32 %v991, %v1496
        %v1498 = vpop.f32.mrb[0].mxu0
        %v1499 = vadd.f32 %v995, %v1498
        %1500 = vmatprep.mubr.bf16.mxu0 %v638
        %1501 = vmatmul.mubr.bf16.gmra.mrb[0].mxu0 %v545
        %v1502 = vpop.f32.mrb[0].mxu0
        %v1503 = vadd.f32 %v991, %v1502
        %v1504 = vpop.f32.mrb[0].mxu0
        %v1505 = vadd.f32 %v995, %v1504
        %v1506 = vpop.f32.mrb[0].mxu0
        %v1507 = vadd.f32 %v991, %v1506
        %v1508 = vpop.f32.mrb[0].mxu0
        %v1509 = vadd.f32 %v995, %v1508
        %1510 = vmatprep.mubr.bf16.mxu0 %v646
        %1511 = vmatmul.mubr.bf16.gmra.mrb[0].mxu0 %v546
        %v1512 = vpop.f32.mrb[0].mxu0
        %v1513 = vadd.f32 %v991, %v1512
        %v1514 = vpop.f32.mrb[0].mxu0
        %v1515 = vadd.f32 %v995, %v1514
        %v1516 = vpop.f32.mrb[0].mxu0
        %v1517 = vadd.f32 %v991, %v1516
        %v1518 = vpop.f32.mrb[0].mxu0
        %v1519 = vadd.f32 %v995, %v1518
        %1520 = vmatprep.mubr.bf16.mxu0 %v654
        %1521 = vmatmul.mubr.bf16.gmra.mrb[0].mxu0 %v547
        %v1522 = vpop.f32.mrb[0].mxu0
        %v1523 = vadd.f32 %v991, %v1522
        %v1524 = vpop.f32.mrb[0].mxu0
        %v1525 = vadd.f32 %v995, %v1524
        %v1526 = vpop.f32.mrb[0].mxu0
        %v1527 = vadd.f32 %v991, %v1526
        %v1528 = vpop.f32.mrb[0].mxu0
        %v1529 = vadd.f32 %v995, %v1528
        %1530 = vmatprep.mubr.bf16.mxu0 %v662
        %1531 = vmatmul.mubr.bf16.gmra.mrb[0].mxu0 %v548
        %v1532 = vpop.f32.mrb[0].mxu0
        %v1533 = vadd.f32 %v991, %v1532
        %v1534 = vpop.f32.mrb[0].mxu0
        %v1535 = vadd.f32 %v995, %v1534
        %v1536 = vpop.f32.mrb[0].mxu0
        %v1537 = vadd.f32 %v991, %v1536
        %v1538 = vpop.f32.mrb[0].mxu0
        %v1539 = vadd.f32 %v995, %v1538
        %1540 = vmatprep.mubr.bf16.mxu0 %v670
        %1541 = vmatmul.mubr.bf16.gmra.mrb[0].mxu0 %v549
        %v1542 = vpop.f32.mrb[0].mxu0
        %v1543 = vadd.f32 %v991, %v1542
        %v1544 = vpop.f32.mrb[0].mxu0
        %v1545 = vadd.f32 %v995, %v1544
        %v1546 = vpop.f32.mrb[0].mxu0
        %v1547 = vadd.f32 %v991, %v1546
        %v1548 = vpop.f32.mrb[0].mxu0
        %v1549 = vadd.f32 %v995, %v1548
        %1550 = vmatprep.mubr.bf16.mxu0 %v678
        %1551 = vmatmul.mubr.bf16.gmra.mrb[0].mxu0 %v550
        %v1552 = vpop.f32.mrb[0].mxu0
        %v1553 = vadd.f32 %v991, %v1552
        %v1554 = vpop.f32.mrb[0].mxu0
        %v1555 = vadd.f32 %v995, %v1554
        %v1556 = vpop.f32.mrb[0].mxu0
        %v1557 = vadd.f32 %v991, %v1556
        %v1558 = vpop.f32.mrb[0].mxu0
        %v1559 = vadd.f32 %v995, %v1558
        %1560 = vmatprep.mubr.bf16.mxu0 %v686
        %1561 = vmatmul.mubr.bf16.gmra.mrb[0].mxu0 %v551
        %v1562 = vpop.f32.mrb[0].mxu0
        %v1563 = vadd.f32 %v991, %v1562
        %v1564 = vpop.f32.mrb[0].mxu0
        %v1565 = vadd.f32 %v995, %v1564
        %v1566 = vpop.f32.mrb[0].mxu0
        %v1567 = vadd.f32 %v991, %v1566
        %v1568 = vpop.f32.mrb[0].mxu0
        %v1569 = vadd.f32 %v995, %v1568
        %1570 = vmatprep.mubr.bf16.mxu0 %v694
        %1571 = vmatmul.mubr.bf16.gmra.mrb[0].mxu0 %v552
        %v1572 = vpop.f32.mrb[0].mxu0
        %v1573 = vadd.f32 %v991, %v1572
        %v1574 = vpop.f32.mrb[0].mxu0
        %v1575 = vadd.f32 %v995, %v1574
        %v1576 = vpop.f32.mrb[0].mxu0
        %v1577 = vadd.f32 %v991, %v1576
        %v1578 = vpop.f32.mrb[0].mxu0
        %v1579 = vadd.f32 %v995, %v1578
        %1580 = vmatprep.mubr.bf16.mxu0 %v702
        %1581 = vmatmul.mubr.bf16.gmra.mrb[0].mxu0 %v553
        %v1582 = vpop.f32.mrb[0].mxu0
        %v1583 = vadd.f32 %v991, %v1582
        %v1584 = vpop.f32.mrb[0].mxu0
        %v1585 = vadd.f32 %v995, %v1584
        %v1586 = vpop.f32.mrb[0].mxu0
        %v1587 = vadd.f32 %v991, %v1586
        %v1588 = vpop.f32.mrb[0].mxu0
        %v1589 = vadd.f32 %v995, %v1588
        %1590 = vdwg.mxu0
        %1591 = vmatprep.subr.bf16.mxu0 %v1271
        %1592 = vmatpush1.bf16.msra.mxu0 %v1270
        %1593 = vmatprep.subr.bf16.mxu0 %v1273
        %1594 = vmatpush1.bf16.msra.mxu0 %v1272
        %1595 = vmatprep.subr.bf16.mxu0 %v1275
        %1596 = vmatpush1.bf16.msra.mxu0 %v1274
        %1597 = vmatprep.subr.bf16.mxu0 %v1277
        %1598 = vmatpush1.bf16.msra.mxu0 %v1276
        %1599 = vmatprep.subr.bf16.mxu0 %v1279
        %1600 = vmatpush1.bf16.msra.mxu0 %v1278
        %1601 = vmatprep.subr.bf16.mxu0 %v1281
        %1602 = vmatpush1.bf16.msra.mxu0 %v1280
        %1603 = vmatprep.subr.bf16.mxu0 %v1283
        %1604 = vmatpush1.bf16.msra.mxu0 %v1282
        %1605 = vmatprep.subr.bf16.mxu0 %v1285
        %1606 = vmatpush1.bf16.msra.mxu0 %v1284
        %1607 = vmatprep.subr.bf16.mxu0 %v1287
        %1608 = vmatpush1.bf16.msra.mxu0 %v1286
        %1609 = vmatprep.subr.bf16.mxu0 %v1289
        %1610 = vmatpush1.bf16.msra.mxu0 %v1288
        %1611 = vmatprep.subr.bf16.mxu0 %v1291
        %1612 = vmatpush1.bf16.msra.mxu0 %v1290
        %1613 = vmatprep.subr.bf16.mxu0 %v1293
        %1614 = vmatpush1.bf16.msra.mxu0 %v1292
        %1615 = vmatprep.subr.bf16.mxu0 %v1295
        %1616 = vmatpush1.bf16.msra.mxu0 %v1294
        %1617 = vmatprep.subr.bf16.mxu0 %v1297
        %1618 = vmatpush1.bf16.msra.mxu0 %v1296
        %1619 = vmatprep.subr.bf16.mxu0 %v1299
        %1620 = vmatpush1.bf16.msra.mxu0 %v1298
        %1621 = vmatprep.subr.bf16.mxu0 %v1301
        %1622 = vmatpush1.bf16.msra.mxu0 %v1300
        %1623 = vmatprep.mubr.bf16.mxu0 %v777
        %1624 = vmatmul.mubr.bf16.gmra.mrb[0].mxu0 %v723
        %v1625 = vpop.f32.mrb[0].mxu0
        %v1626 = vadd.f32 %v1433, %v1625
        %v1627 = vpop.f32.mrb[0].mxu0
        %v1628 = vadd.f32 %v1435, %v1627
        %v1629 = vpop.f32.mrb[0].mxu0
        %v1630 = vadd.f32 %v1437, %v1629
        %v1631 = vpop.f32.mrb[0].mxu0
        %v1632 = vadd.f32 %v1439, %v1631
        %1633 = vmatprep.mubr.bf16.mxu0 %v781
        %1634 = vmatmul.mubr.bf16.gmra.mrb[0].mxu0 %v725
        %v1635 = vpop.f32.mrb[0].mxu0
        %v1636 = vadd.f32 %v1443, %v1635
        %v1637 = vpop.f32.mrb[0].mxu0
        %v1638 = vadd.f32 %v1445, %v1637
        %v1639 = vpop.f32.mrb[0].mxu0
        %v1640 = vadd.f32 %v1447, %v1639
        %v1641 = vpop.f32.mrb[0].mxu0
        %v1642 = vadd.f32 %v1449, %v1641
        %1643 = vmatprep.mubr.bf16.mxu0 %v785
        %1644 = vmatmul.mubr.bf16.gmra.mrb[0].mxu0 %v727
        %v1645 = vpop.f32.mrb[0].mxu0
        %v1646 = vadd.f32 %v1453, %v1645
        %v1647 = vpop.f32.mrb[0].mxu0
        %v1648 = vadd.f32 %v1455, %v1647
        %v1649 = vpop.f32.mrb[0].mxu0
        %v1650 = vadd.f32 %v1457, %v1649
        %v1651 = vpop.f32.mrb[0].mxu0
        %v1652 = vadd.f32 %v1459, %v1651
        %1653 = vmatprep.mubr.bf16.mxu0 %v789
        %1654 = vmatmul.mubr.bf16.gmra.mrb[0].mxu0 %v729
        %v1655 = vpop.f32.mrb[0].mxu0
        %v1656 = vadd.f32 %v1463, %v1655
        %v1657 = vpop.f32.mrb[0].mxu0
        %v1658 = vadd.f32 %v1465, %v1657
        %v1659 = vpop.f32.mrb[0].mxu0
        %v1660 = vadd.f32 %v1467, %v1659
        %v1661 = vpop.f32.mrb[0].mxu0
        %v1662 = vadd.f32 %v1469, %v1661
        %1663 = vmatprep.mubr.bf16.mxu0 %v793
        %1664 = vmatmul.mubr.bf16.gmra.mrb[0].mxu0 %v731
        %v1665 = vpop.f32.mrb[0].mxu0
        %v1666 = vadd.f32 %v1473, %v1665
        %v1667 = vpop.f32.mrb[0].mxu0
        %v1668 = vadd.f32 %v1475, %v1667
        %v1669 = vpop.f32.mrb[0].mxu0
        %v1670 = vadd.f32 %v1477, %v1669
        %v1671 = vpop.f32.mrb[0].mxu0
        %v1672 = vadd.f32 %v1479, %v1671
        %1673 = vmatprep.mubr.bf16.mxu0 %v797
        %1674 = vmatmul.mubr.bf16.gmra.mrb[0].mxu0 %v733
        %v1675 = vpop.f32.mrb[0].mxu0
        %v1676 = vadd.f32 %v1483, %v1675
        %v1677 = vpop.f32.mrb[0].mxu0
        %v1678 = vadd.f32 %v1485, %v1677
        %v1679 = vpop.f32.mrb[0].mxu0
        %v1680 = vadd.f32 %v1487, %v1679
        %v1681 = vpop.f32.mrb[0].mxu0
        %v1682 = vadd.f32 %v1489, %v1681
        %1683 = vmatprep.mubr.bf16.mxu0 %v801
        %1684 = vmatmul.mubr.bf16.gmra.mrb[0].mxu0 %v735
        %v1685 = vpop.f32.mrb[0].mxu0
        %v1686 = vadd.f32 %v1493, %v1685
        %v1687 = vpop.f32.mrb[0].mxu0
        %v1688 = vadd.f32 %v1495, %v1687
        %v1689 = vpop.f32.mrb[0].mxu0
        %v1690 = vadd.f32 %v1497, %v1689
        %v1691 = vpop.f32.mrb[0].mxu0
        %v1692 = vadd.f32 %v1499, %v1691
        %1693 = vmatprep.mubr.bf16.mxu0 %v805
        %1694 = vmatmul.mubr.bf16.gmra.mrb[0].mxu0 %v737
        %v1695 = vpop.f32.mrb[0].mxu0
        %v1696 = vadd.f32 %v1503, %v1695
        %v1697 = vpop.f32.mrb[0].mxu0
        %v1698 = vadd.f32 %v1505, %v1697
        %v1699 = vpop.f32.mrb[0].mxu0
        %v1700 = vadd.f32 %v1507, %v1699
        %v1701 = vpop.f32.mrb[0].mxu0
        %v1702 = vadd.f32 %v1509, %v1701
        %1703 = vmatprep.mubr.bf16.mxu0 %v809
        %1704 = vmatmul.mubr.bf16.gmra.mrb[0].mxu0 %v739
        %v1705 = vpop.f32.mrb[0].mxu0
        %v1706 = vadd.f32 %v1513, %v1705
        %v1707 = vpop.f32.mrb[0].mxu0
        %v1708 = vadd.f32 %v1515, %v1707
        %v1709 = vpop.f32.mrb[0].mxu0
        %v1710 = vadd.f32 %v1517, %v1709
        %v1711 = vpop.f32.mrb[0].mxu0
        %v1712 = vadd.f32 %v1519, %v1711
        %1713 = vmatprep.mubr.bf16.mxu0 %v813
        %1714 = vmatmul.mubr.bf16.gmra.mrb[0].mxu0 %v741
        %v1715 = vpop.f32.mrb[0].mxu0
        %v1716 = vadd.f32 %v1523, %v1715
        %v1717 = vpop.f32.mrb[0].mxu0
        %v1718 = vadd.f32 %v1525, %v1717
        %v1719 = vpop.f32.mrb[0].mxu0
        %v1720 = vadd.f32 %v1527, %v1719
        %v1721 = vpop.f32.mrb[0].mxu0
        %v1722 = vadd.f32 %v1529, %v1721
        %1723 = vmatprep.mubr.bf16.mxu0 %v817
        %1724 = vmatmul.mubr.bf16.gmra.mrb[0].mxu0 %v743
        %v1725 = vpop.f32.mrb[0].mxu0
        %v1726 = vadd.f32 %v1533, %v1725
        %v1727 = vpop.f32.mrb[0].mxu0
        %v1728 = vadd.f32 %v1535, %v1727
        %v1729 = vpop.f32.mrb[0].mxu0
        %v1730 = vadd.f32 %v1537, %v1729
        %v1731 = vpop.f32.mrb[0].mxu0
        %v1732 = vadd.f32 %v1539, %v1731
        %1733 = vmatprep.mubr.bf16.mxu0 %v821
        %1734 = vmatmul.mubr.bf16.gmra.mrb[0].mxu0 %v745
        %v1735 = vpop.f32.mrb[0].mxu0
        %v1736 = vadd.f32 %v1543, %v1735
        %v1737 = vpop.f32.mrb[0].mxu0
        %v1738 = vadd.f32 %v1545, %v1737
        %v1739 = vpop.f32.mrb[0].mxu0
        %v1740 = vadd.f32 %v1547, %v1739
        %v1741 = vpop.f32.mrb[0].mxu0
        %v1742 = vadd.f32 %v1549, %v1741
        %1743 = vmatprep.mubr.bf16.mxu0 %v825
        %1744 = vmatmul.mubr.bf16.gmra.mrb[0].mxu0 %v747
        %v1745 = vpop.f32.mrb[0].mxu0
        %v1746 = vadd.f32 %v1553, %v1745
        %v1747 = vpop.f32.mrb[0].mxu0
        %v1748 = vadd.f32 %v1555, %v1747
        %v1749 = vpop.f32.mrb[0].mxu0
        %v1750 = vadd.f32 %v1557, %v1749
        %v1751 = vpop.f32.mrb[0].mxu0
        %v1752 = vadd.f32 %v1559, %v1751
        %1753 = vmatprep.mubr.bf16.mxu0 %v829
        %1754 = vmatmul.mubr.bf16.gmra.mrb[0].mxu0 %v749
        %v1755 = vpop.f32.mrb[0].mxu0
        %v1756 = vadd.f32 %v1563, %v1755
        %v1757 = vpop.f32.mrb[0].mxu0
        %v1758 = vadd.f32 %v1565, %v1757
        %v1759 = vpop.f32.mrb[0].mxu0
        %v1760 = vadd.f32 %v1567, %v1759
        %v1761 = vpop.f32.mrb[0].mxu0
        %v1762 = vadd.f32 %v1569, %v1761
        %1763 = vmatprep.mubr.bf16.mxu0 %v833
        %1764 = vmatmul.mubr.bf16.gmra.mrb[0].mxu0 %v751
        %v1765 = vpop.f32.mrb[0].mxu0
        %v1766 = vadd.f32 %v1573, %v1765
        %v1767 = vpop.f32.mrb[0].mxu0
        %v1768 = vadd.f32 %v1575, %v1767
        %v1769 = vpop.f32.mrb[0].mxu0
        %v1770 = vadd.f32 %v1577, %v1769
        %v1771 = vpop.f32.mrb[0].mxu0
        %v1772 = vadd.f32 %v1579, %v1771
        %1773 = vmatprep.mubr.bf16.mxu0 %v839
        %1774 = vmatmul.mubr.bf16.gmra.mrb[0].mxu0 %v753
        %v1775 = vpop.f32.mrb[0].mxu0
        %v1776 = vadd.f32 %v1583, %v1775
        %v1777 = vpop.f32.mrb[0].mxu0
        %v1778 = vadd.f32 %v1585, %v1777
        %v1779 = vpop.f32.mrb[0].mxu0
        %v1780 = vadd.f32 %v1587, %v1779
        %v1781 = vpop.f32.mrb[0].mxu0
        %v1782 = vadd.f32 %v1589, %v1781
        %1783 = vdwg.mxu0
        %1784 = vmatprep.subr.bf16.mxu0 %v1303
        %1785 = vmatpush1.bf16.msra.mxu0 %v1302
        %1786 = vmatprep.subr.bf16.mxu0 %v1305
        %1787 = vmatpush1.bf16.msra.mxu0 %v1304
        %1788 = vmatprep.subr.bf16.mxu0 %v1307
        %1789 = vmatpush1.bf16.msra.mxu0 %v1306
        %1790 = vmatprep.subr.bf16.mxu0 %v1309
        %1791 = vmatpush1.bf16.msra.mxu0 %v1308
        %1792 = vmatprep.subr.bf16.mxu0 %v1311
        %1793 = vmatpush1.bf16.msra.mxu0 %v1310
        %1794 = vmatprep.subr.bf16.mxu0 %v1313
        %1795 = vmatpush1.bf16.msra.mxu0 %v1312
        %1796 = vmatprep.subr.bf16.mxu0 %v1315
        %1797 = vmatpush1.bf16.msra.mxu0 %v1314
        %1798 = vmatprep.subr.bf16.mxu0 %v1317
        %1799 = vmatpush1.bf16.msra.mxu0 %v1316
        %1800 = vmatprep.subr.bf16.mxu0 0
        %1801 = vmatpush1.bf16.msra.mxu0 0
        %1802 = vmatprep.subr.bf16.mxu0 0
        %1803 = vmatpush1.bf16.msra.mxu0 0
        %1804 = vmatprep.subr.bf16.mxu0 0
        %1805 = vmatpush1.bf16.msra.mxu0 0
        %1806 = vmatprep.subr.bf16.mxu0 0
        %1807 = vmatpush1.bf16.msra.mxu0 0
        %1808 = vmatprep.subr.bf16.mxu0 0
        %1809 = vmatpush1.bf16.msra.mxu0 0
        %1810 = vmatprep.subr.bf16.mxu0 0
        %1811 = vmatpush1.bf16.msra.mxu0 0
        %1812 = vmatprep.subr.bf16.mxu0 0
        %1813 = vmatpush1.bf16.msra.mxu0 0
        %1814 = vmatprep.subr.bf16.mxu0 0
        %1815 = vmatpush1.bf16.msra.mxu0 0
        %1816 = vmatprep.mubr.bf16.mxu0 0
        %1817 = vmatmul.mubr.bf16.gmra.mrb[0].mxu0 %v859
        %v1818 = vpop.f32.mrb[0].mxu0
        %v1819 = vadd.f32 %v1626, %v1818
        %v1820 = vpop.f32.mrb[0].mxu0
        %v1821 = vadd.f32 %v1628, %v1820
        %v1822 = vpop.f32.mrb[0].mxu0
        %v1823 = vadd.f32 %v1630, %v1822
        %v1824 = vpop.f32.mrb[0].mxu0
        %v1825 = vadd.f32 %v1632, %v1824
        %1826 = vmatprep.mubr.bf16.mxu0 0
        %1827 = vmatmul.mubr.bf16.gmra.mrb[0].mxu0 %v861
        %v1828 = vpop.f32.mrb[0].mxu0
        %v1829 = vadd.f32 %v1636, %v1828
        %v1830 = vpop.f32.mrb[0].mxu0
        %v1831 = vadd.f32 %v1638, %v1830
        %v1832 = vpop.f32.mrb[0].mxu0
        %v1833 = vadd.f32 %v1640, %v1832
        %v1834 = vpop.f32.mrb[0].mxu0
        %v1835 = vadd.f32 %v1642, %v1834
        %1836 = vmatprep.mubr.bf16.mxu0 0
        %1837 = vmatmul.mubr.bf16.gmra.mrb[0].mxu0 %v863
        %v1838 = vpop.f32.mrb[0].mxu0
        %v1839 = vadd.f32 %v1646, %v1838
        %v1840 = vpop.f32.mrb[0].mxu0
        %v1841 = vadd.f32 %v1648, %v1840
        %v1842 = vpop.f32.mrb[0].mxu0
        %v1843 = vadd.f32 %v1650, %v1842
        %v1844 = vpop.f32.mrb[0].mxu0
        %v1845 = vadd.f32 %v1652, %v1844
        %1846 = vmatprep.mubr.bf16.mxu0 0
        %1847 = vmatmul.mubr.bf16.gmra.mrb[0].mxu0 %v865
        %v1848 = vpop.f32.mrb[0].mxu0
        %v1849 = vadd.f32 %v1656, %v1848
        %v1850 = vpop.f32.mrb[0].mxu0
        %v1851 = vadd.f32 %v1658, %v1850
        %v1852 = vpop.f32.mrb[0].mxu0
        %v1853 = vadd.f32 %v1660, %v1852
        %v1854 = vpop.f32.mrb[0].mxu0
        %v1855 = vadd.f32 %v1662, %v1854
        %1856 = vmatprep.mubr.bf16.mxu0 0
        %1857 = vmatmul.mubr.bf16.gmra.mrb[0].mxu0 %v867
        %v1858 = vpop.f32.mrb[0].mxu0
        %v1859 = vadd.f32 %v1666, %v1858
        %v1860 = vpop.f32.mrb[0].mxu0
        %v1861 = vadd.f32 %v1668, %v1860
        %v1862 = vpop.f32.mrb[0].mxu0
        %v1863 = vadd.f32 %v1670, %v1862
        %v1864 = vpop.f32.mrb[0].mxu0
        %v1865 = vadd.f32 %v1672, %v1864
        %1866 = vmatprep.mubr.bf16.mxu0 0
        %1867 = vmatmul.mubr.bf16.gmra.mrb[0].mxu0 %v869
        %v1868 = vpop.f32.mrb[0].mxu0
        %v1869 = vadd.f32 %v1676, %v1868
        %v1870 = vpop.f32.mrb[0].mxu0
        %v1871 = vadd.f32 %v1678, %v1870
        %v1872 = vpop.f32.mrb[0].mxu0
        %v1873 = vadd.f32 %v1680, %v1872
        %v1874 = vpop.f32.mrb[0].mxu0
        %v1875 = vadd.f32 %v1682, %v1874
        %1876 = vmatprep.mubr.bf16.mxu0 0
        %1877 = vmatmul.mubr.bf16.gmra.mrb[0].mxu0 %v871
        %v1878 = vpop.f32.mrb[0].mxu0
        %v1879 = vadd.f32 %v1686, %v1878
        %v1880 = vpop.f32.mrb[0].mxu0
        %v1881 = vadd.f32 %v1688, %v1880
        %v1882 = vpop.f32.mrb[0].mxu0
        %v1883 = vadd.f32 %v1690, %v1882
        %v1884 = vpop.f32.mrb[0].mxu0
        %v1885 = vadd.f32 %v1692, %v1884
        %1886 = vmatprep.mubr.bf16.mxu0 0
        %1887 = vmatmul.mubr.bf16.gmra.mrb[0].mxu0 %v873
        %v1888 = vpop.f32.mrb[0].mxu0
        %v1889 = vadd.f32 %v1696, %v1888
        %v1890 = vpop.f32.mrb[0].mxu0
        %v1891 = vadd.f32 %v1698, %v1890
        %v1892 = vpop.f32.mrb[0].mxu0
        %v1893 = vadd.f32 %v1700, %v1892
        %v1894 = vpop.f32.mrb[0].mxu0
        %v1895 = vadd.f32 %v1702, %v1894
        %1896 = vmatprep.mubr.bf16.mxu0 0
        %1897 = vmatmul.mubr.bf16.gmra.mrb[0].mxu0 %v875
        %v1898 = vpop.f32.mrb[0].mxu0
        %v1899 = vadd.f32 %v1706, %v1898
        %v1900 = vpop.f32.mrb[0].mxu0
        %v1901 = vadd.f32 %v1708, %v1900
        %v1902 = vpop.f32.mrb[0].mxu0
        %v1903 = vadd.f32 %v1710, %v1902
        %v1904 = vpop.f32.mrb[0].mxu0
        %v1905 = vadd.f32 %v1712, %v1904
        %1906 = vmatprep.mubr.bf16.mxu0 0
        %1907 = vmatmul.mubr.bf16.gmra.mrb[0].mxu0 %v877
        %v1908 = vpop.f32.mrb[0].mxu0
        %v1909 = vadd.f32 %v1716, %v1908
        %v1910 = vpop.f32.mrb[0].mxu0
        %v1911 = vadd.f32 %v1718, %v1910
        %v1912 = vpop.f32.mrb[0].mxu0
        %v1913 = vadd.f32 %v1720, %v1912
        %v1914 = vpop.f32.mrb[0].mxu0
        %v1915 = vadd.f32 %v1722, %v1914
        %1916 = vmatprep.mubr.bf16.mxu0 0
        %1917 = vmatmul.mubr.bf16.gmra.mrb[0].mxu0 %v879
        %v1918 = vpop.f32.mrb[0].mxu0
        %v1919 = vadd.f32 %v1726, %v1918
        %v1920 = vpop.f32.mrb[0].mxu0
        %v1921 = vadd.f32 %v1728, %v1920
        %v1922 = vpop.f32.mrb[0].mxu0
        %v1923 = vadd.f32 %v1730, %v1922
        %v1924 = vpop.f32.mrb[0].mxu0
        %v1925 = vadd.f32 %v1732, %v1924
        %1926 = vmatprep.mubr.bf16.mxu0 0
        %1927 = vmatmul.mubr.bf16.gmra.mrb[0].mxu0 %v881
        %v1928 = vpop.f32.mrb[0].mxu0
        %v1929 = vadd.f32 %v1736, %v1928
        %v1930 = vpop.f32.mrb[0].mxu0
        %v1931 = vadd.f32 %v1738, %v1930
        %v1932 = vpop.f32.mrb[0].mxu0
        %v1933 = vadd.f32 %v1740, %v1932
        %v1934 = vpop.f32.mrb[0].mxu0
        %v1935 = vadd.f32 %v1742, %v1934
        %1936 = vmatprep.mubr.bf16.mxu0 0
        %1937 = vmatmul.mubr.bf16.gmra.mrb[0].mxu0 %v883
        %v1938 = vpop.f32.mrb[0].mxu0
        %v1939 = vadd.f32 %v1746, %v1938
        %v1940 = vpop.f32.mrb[0].mxu0
        %v1941 = vadd.f32 %v1748, %v1940
        %v1942 = vpop.f32.mrb[0].mxu0
        %v1943 = vadd.f32 %v1750, %v1942
        %v1944 = vpop.f32.mrb[0].mxu0
        %v1945 = vadd.f32 %v1752, %v1944
        %1946 = vmatprep.mubr.bf16.mxu0 0
        %1947 = vmatmul.mubr.bf16.gmra.mrb[0].mxu0 %v885
        %v1948 = vpop.f32.mrb[0].mxu0
        %v1949 = vadd.f32 %v1756, %v1948
        %v1950 = vpop.f32.mrb[0].mxu0
        %v1951 = vadd.f32 %v1758, %v1950
        %v1952 = vpop.f32.mrb[0].mxu0
        %v1953 = vadd.f32 %v1760, %v1952
        %v1954 = vpop.f32.mrb[0].mxu0
        %v1955 = vadd.f32 %v1762, %v1954
        %1956 = vmatprep.mubr.bf16.mxu0 0
        %1957 = vmatmul.mubr.bf16.gmra.mrb[0].mxu0 %v887
        %v1958 = vpop.f32.mrb[0].mxu0
        %v1959 = vadd.f32 %v1766, %v1958
        %v1960 = vpop.f32.mrb[0].mxu0
        %v1961 = vadd.f32 %v1768, %v1960
        %v1962 = vpop.f32.mrb[0].mxu0
        %v1963 = vadd.f32 %v1770, %v1962
        %v1964 = vpop.f32.mrb[0].mxu0
        %v1965 = vadd.f32 %v1772, %v1964
        %1966 = vmatprep.mubr.bf16.mxu0 0
        %1967 = vmatmul.mubr.bf16.gmra.mrb[0].mxu0 %v889
        %v1968 = vpop.f32.mrb[0].mxu0
        %v1969 = vadd.f32 %v1776, %v1968
        %v1970 = vpop.f32.mrb[0].mxu0
        %v1971 = vadd.f32 %v1778, %v1970
        %v1972 = vpop.f32.mrb[0].mxu0
        %v1973 = vadd.f32 %v1780, %v1972
        %v1974 = vpop.f32.mrb[0].mxu0
        %v1975 = vadd.f32 %v1782, %v1974
        %1976 = vdwg.mxu0
        %v1977 = vmax.f32 %v1819, 0.0
        %v1978 = vmax.f32 %v1821, 0.0
        %v1979 = vmax.f32 %v1823, 0.0
        %v1980 = vmax.f32 %v1825, 0.0
        %v1981 = vmax.f32 %v1829, 0.0
        %v1982 = vmax.f32 %v1831, 0.0
        %v1983 = vmax.f32 %v1833, 0.0
        %v1984 = vmax.f32 %v1835, 0.0
        %v1985 = vmax.f32 %v1839, 0.0
        %v1986 = vmax.f32 %v1841, 0.0
        %v1987 = vmax.f32 %v1843, 0.0
        %v1988 = vmax.f32 %v1845, 0.0
        %v1989 = vmax.f32 %v1849, 0.0
        %v1990 = vmax.f32 %v1851, 0.0
        %v1991 = vmax.f32 %v1853, 0.0
        %v1992 = vmax.f32 %v1855, 0.0
        %v1993 = vmax.f32 %v1859, 0.0
        %v1994 = vmax.f32 %v1861, 0.0
        %v1995 = vmax.f32 %v1863, 0.0
        %v1996 = vmax.f32 %v1865, 0.0
        %v1997 = vmax.f32 %v1869, 0.0
        %v1998 = vmax.f32 %v1871, 0.0
        %v1999 = vmax.f32 %v1873, 0.0
        %v2000 = vmax.f32 %v1875, 0.0
        %v2001 = vmax.f32 %v1879, 0.0
        %v2002 = vmax.f32 %v1881, 0.0
        %v2003 = vmax.f32 %v1883, 0.0
        %v2004 = vmax.f32 %v1885, 0.0
        %v2005 = vmax.f32 %v1889, 0.0
        %v2006 = vmax.f32 %v1891, 0.0
        %v2007 = vmax.f32 %v1893, 0.0
        %v2008 = vmax.f32 %v1895, 0.0
        %v2009 = vmax.f32 %v1899, 0.0
        %v2010 = vmax.f32 %v1901, 0.0
        %v2011 = vmax.f32 %v1903, 0.0
        %v2012 = vmax.f32 %v1905, 0.0
        %v2013 = vmax.f32 %v1909, 0.0
        %v2014 = vmax.f32 %v1911, 0.0
        %v2015 = vmax.f32 %v1913, 0.0
        %v2016 = vmax.f32 %v1915, 0.0
        %v2017 = vmax.f32 %v1919, 0.0
        %v2018 = vmax.f32 %v1921, 0.0
        %v2019 = vmax.f32 %v1923, 0.0
        %v2020 = vmax.f32 %v1925, 0.0
        %v2021 = vmax.f32 %v1929, 0.0
        %v2022 = vmax.f32 %v1931, 0.0
        %v2023 = vmax.f32 %v1933, 0.0
        %v2024 = vmax.f32 %v1935, 0.0
        %v2025 = vmax.f32 %v1939, 0.0
        %v2026 = vmax.f32 %v1941, 0.0
        %v2027 = vmax.f32 %v1943, 0.0
        %v2028 = vmax.f32 %v1945, 0.0
        %v2029 = vmax.f32 %v1949, 0.0
        %v2030 = vmax.f32 %v1951, 0.0
        %v2031 = vmax.f32 %v1953, 0.0
        %v2032 = vmax.f32 %v1955, 0.0
        %v2033 = vmax.f32 %v1959, 0.0
        %v2034 = vmax.f32 %v1961, 0.0
        %v2035 = vmax.f32 %v1963, 0.0
        %v2036 = vmax.f32 %v1965, 0.0
        %v2037 = vmax.f32 %v1969, 0.0
        %v2038 = vmax.f32 %v1971, 0.0
        %v2039 = vmax.f32 %v1973, 0.0
        %v2040 = vmax.f32 %v1975, 0.0
        %vm2105 = vcmask 1046528
        %v2106 = vrot.slane %v1977, 1
        %v2107 = vrot.slane %v1979, 1
        %v2108 = vsel %vm2105, %v2106, %v2107
        %v2109 = vrot.slane %v1978, 1
        %v2110 = vrot.slane %v1980, 1
        %v2111 = vsel %vm2105, %v2109, %v2110
        %v2112 = vrot.slane %v1981, 1
        %v2113 = vsel %vm2105, %v2107, %v2112
        %v2114 = vrot.slane %v1982, 1
        %v2115 = vsel %vm2105, %v2110, %v2114
        %v2116 = vrot.slane %v1983, 1
        %v2117 = vsel %vm2105, %v2112, %v2116
        %v2118 = vrot.slane %v1984, 1
        %v2119 = vsel %vm2105, %v2114, %v2118
        %v2120 = vrot.slane %v1985, 1
        %v2121 = vsel %vm2105, %v2116, %v2120
        %v2122 = vrot.slane %v1986, 1
        %v2123 = vsel %vm2105, %v2118, %v2122
        %v2124 = vrot.slane %v1987, 1
        %v2125 = vsel %vm2105, %v2120, %v2124
        %v2126 = vrot.slane %v1988, 1
        %v2127 = vsel %vm2105, %v2122, %v2126
        %v2128 = vrot.slane %v1989, 1
        %v2129 = vsel %vm2105, %v2124, %v2128
        %v2130 = vrot.slane %v1990, 1
        %v2131 = vsel %vm2105, %v2126, %v2130
        %v2132 = vrot.slane %v1991, 1
        %v2133 = vsel %vm2105, %v2128, %v2132
        %v2134 = vrot.slane %v1992, 1
        %v2135 = vsel %vm2105, %v2130, %v2134
        %v2136 = vrot.slane %v1993, 1
        %v2137 = vsel %vm2105, %v2132, %v2136
        %v2138 = vrot.slane %v1994, 1
        %v2139 = vsel %vm2105, %v2134, %v2138
        %v2140 = vrot.slane %v1995, 1
        %v2141 = vsel %vm2105, %v2136, %v2140
        %v2142 = vrot.slane %v1996, 1
        %v2143 = vsel %vm2105, %v2138, %v2142
        %v2144 = vrot.slane %v1997, 1
        %v2145 = vsel %vm2105, %v2140, %v2144
        %v2146 = vrot.slane %v1998, 1
        %v2147 = vsel %vm2105, %v2142, %v2146
        %v2148 = vrot.slane %v1999, 1
        %v2149 = vsel %vm2105, %v2144, %v2148
        %v2150 = vrot.slane %v2000, 1
        %v2151 = vsel %vm2105, %v2146, %v2150
        %v2152 = vrot.slane %v2001, 1
        %v2153 = vsel %vm2105, %v2148, %v2152
        %v2154 = vrot.slane %v2002, 1
        %v2155 = vsel %vm2105, %v2150, %v2154
        %v2156 = vrot.slane %v2003, 1
        %v2157 = vsel %vm2105, %v2152, %v2156
        %v2158 = vrot.slane %v2004, 1
        %v2159 = vsel %vm2105, %v2154, %v2158
        %v2160 = vrot.slane %v2005, 1
        %v2161 = vsel %vm2105, %v2156, %v2160
        %v2162 = vrot.slane %v2006, 1
        %v2163 = vsel %vm2105, %v2158, %v2162
        %v2164 = vrot.slane %v2007, 1
        %v2165 = vsel %vm2105, %v2160, %v2164
        %v2166 = vrot.slane %v2008, 1
        %v2167 = vsel %vm2105, %v2162, %v2166
        %v2168 = vrot.slane %v2009, 1
        %v2169 = vsel %vm2105, %v2164, %v2168
        %v2170 = vrot.slane %v2010, 1
        %v2171 = vsel %vm2105, %v2166, %v2170
        %v2172 = vrot.slane %v2011, 1
        %v2173 = vsel %vm2105, %v2168, %v2172
        %v2174 = vrot.slane %v2012, 1
        %v2175 = vsel %vm2105, %v2170, %v2174
        %v2176 = vrot.slane %v2013, 1
        %v2177 = vsel %vm2105, %v2172, %v2176
        %v2178 = vrot.slane %v2014, 1
        %v2179 = vsel %vm2105, %v2174, %v2178
        %v2180 = vrot.slane %v2015, 1
        %v2181 = vsel %vm2105, %v2176, %v2180
        %v2182 = vrot.slane %v2016, 1
        %v2183 = vsel %vm2105, %v2178, %v2182
        %v2184 = vrot.slane %v2017, 1
        %v2185 = vsel %vm2105, %v2180, %v2184
        %v2186 = vrot.slane %v2018, 1
        %v2187 = vsel %vm2105, %v2182, %v2186
        %v2188 = vrot.slane %v2019, 1
        %v2189 = vsel %vm2105, %v2184, %v2188
        %v2190 = vrot.slane %v2020, 1
        %v2191 = vsel %vm2105, %v2186, %v2190
        %v2192 = vrot.slane %v2021, 1
        %v2193 = vsel %vm2105, %v2188, %v2192
        %v2194 = vrot.slane %v2022, 1
        %v2195 = vsel %vm2105, %v2190, %v2194
        %v2196 = vrot.slane %v2023, 1
        %v2197 = vsel %vm2105, %v2192, %v2196
        %v2198 = vrot.slane %v2024, 1
        %v2199 = vsel %vm2105, %v2194, %v2198
        %v2200 = vrot.slane %v2025, 1
        %v2201 = vsel %vm2105, %v2196, %v2200
        %v2202 = vrot.slane %v2026, 1
        %v2203 = vsel %vm2105, %v2198, %v2202
        %v2204 = vrot.slane %v2027, 1
        %v2205 = vsel %vm2105, %v2200, %v2204
        %v2206 = vrot.slane %v2028, 1
        %v2207 = vsel %vm2105, %v2202, %v2206
        %v2208 = vrot.slane %v2029, 1
        %v2209 = vsel %vm2105, %v2204, %v2208
        %v2210 = vrot.slane %v2030, 1
        %v2211 = vsel %vm2105, %v2206, %v2210
        %v2212 = vrot.slane %v2031, 1
        %v2213 = vsel %vm2105, %v2208, %v2212
        %v2214 = vrot.slane %v2032, 1
        %v2215 = vsel %vm2105, %v2210, %v2214
        %v2216 = vrot.slane %v2033, 1
        %v2217 = vsel %vm2105, %v2212, %v2216
        %v2218 = vrot.slane %v2034, 1
        %v2219 = vsel %vm2105, %v2214, %v2218
        %v2220 = vrot.slane %v2035, 1
        %v2221 = vsel %vm2105, %v2216, %v2220
        %v2222 = vrot.slane %v2036, 1
        %v2223 = vsel %vm2105, %v2218, %v2222
        %v2224 = vrot.slane %v2037, 1
        %v2225 = vsel %vm2105, %v2220, %v2224
        %v2226 = vrot.slane %v2038, 1
        %v2227 = vsel %vm2105, %v2222, %v2226
        %v2228 = vrot.slane %v2039, 1
        %v2229 = vsel %vm2105, %v2224, %v2228
        %v2230 = vrot.slane %v2040, 1
        %v2231 = vsel %vm2105, %v2226, %v2230
        %v2296 = vmax.f32 %v1977, %v2108
        %v2297 = vmax.f32 %v1978, %v2111
        %v2298 = vmax.f32 %v1979, %v2113
        %v2299 = vmax.f32 %v1980, %v2115
        %v2300 = vmax.f32 %v1981, %v2117
        %v2301 = vmax.f32 %v1982, %v2119
        %v2302 = vmax.f32 %v1983, %v2121
        %v2303 = vmax.f32 %v1984, %v2123
        %v2304 = vmax.f32 %v1985, %v2125
        %v2305 = vmax.f32 %v1986, %v2127
        %v2306 = vmax.f32 %v1987, %v2129
        %v2307 = vmax.f32 %v1988, %v2131
        %v2308 = vmax.f32 %v1989, %v2133
        %v2309 = vmax.f32 %v1990, %v2135
        %v2310 = vmax.f32 %v1991, %v2137
        %v2311 = vmax.f32 %v1992, %v2139
        %v2312 = vmax.f32 %v1993, %v2141
        %v2313 = vmax.f32 %v1994, %v2143
        %v2314 = vmax.f32 %v1995, %v2145
        %v2315 = vmax.f32 %v1996, %v2147
        %v2316 = vmax.f32 %v1997, %v2149
        %v2317 = vmax.f32 %v1998, %v2151
        %v2318 = vmax.f32 %v1999, %v2153
        %v2319 = vmax.f32 %v2000, %v2155
        %v2320 = vmax.f32 %v2001, %v2157
        %v2321 = vmax.f32 %v2002, %v2159
        %v2322 = vmax.f32 %v2003, %v2161
        %v2323 = vmax.f32 %v2004, %v2163
        %v2324 = vmax.f32 %v2005, %v2165
        %v2325 = vmax.f32 %v2006, %v2167
        %v2326 = vmax.f32 %v2007, %v2169
        %v2327 = vmax.f32 %v2008, %v2171
        %v2328 = vmax.f32 %v2009, %v2173
        %v2329 = vmax.f32 %v2010, %v2175
        %v2330 = vmax.f32 %v2011, %v2177
        %v2331 = vmax.f32 %v2012, %v2179
        %v2332 = vmax.f32 %v2013, %v2181
        %v2333 = vmax.f32 %v2014, %v2183
        %v2334 = vmax.f32 %v2015, %v2185
        %v2335 = vmax.f32 %v2016, %v2187
        %v2336 = vmax.f32 %v2017, %v2189
        %v2337 = vmax.f32 %v2018, %v2191
        %v2338 = vmax.f32 %v2019, %v2193
        %v2339 = vmax.f32 %v2020, %v2195
        %v2340 = vmax.f32 %v2021, %v2197
        %v2341 = vmax.f32 %v2022, %v2199
        %v2342 = vmax.f32 %v2023, %v2201
        %v2343 = vmax.f32 %v2024, %v2203
        %v2344 = vmax.f32 %v2025, %v2205
        %v2345 = vmax.f32 %v2026, %v2207
        %v2346 = vmax.f32 %v2027, %v2209
        %v2347 = vmax.f32 %v2028, %v2211
        %v2348 = vmax.f32 %v2029, %v2213
        %v2349 = vmax.f32 %v2030, %v2215
        %v2350 = vmax.f32 %v2031, %v2217
        %v2351 = vmax.f32 %v2032, %v2219
        %v2352 = vmax.f32 %v2033, %v2221
        %v2353 = vmax.f32 %v2034, %v2223
        %v2354 = vmax.f32 %v2035, %v2225
        %v2355 = vmax.f32 %v2036, %v2227
        %v2356 = vmax.f32 %v2037, %v2229
        %v2357 = vmax.f32 %v2038, %v2231
        %v2358 = vmax.f32 %v2039, %v2228
        %v2359 = vmax.f32 %v2040, %v2230
        %2424 = vrot.lane.b32.xlu0 %v2296, 122
        %v2425 = vpop.permute.xlu0 %2424
        %2426 = vrot.lane.b32.xlu0 %v2297, 122
        %v2427 = vpop.permute.xlu0 %2426
        %2428 = vrot.lane.b32.xlu0 %v2298, 122
        %v2429 = vpop.permute.xlu0 %2428
        %2430 = vrot.lane.b32.xlu0 %v2299, 122
        %v2431 = vpop.permute.xlu0 %2430
        %2432 = vrot.lane.b32.xlu0 %v2300, 122
        %v2433 = vpop.permute.xlu0 %2432
        %2434 = vrot.lane.b32.xlu0 %v2301, 122
        %v2435 = vpop.permute.xlu0 %2434
        %2436 = vrot.lane.b32.xlu0 %v2302, 122
        %v2437 = vpop.permute.xlu0 %2436
        %2438 = vrot.lane.b32.xlu0 %v2303, 122
        %v2439 = vpop.permute.xlu0 %2438
        %2440 = vrot.lane.b32.xlu0 %v2304, 122
        %v2441 = vpop.permute.xlu0 %2440
        %2442 = vrot.lane.b32.xlu0 %v2305, 122
        %v2443 = vpop.permute.xlu0 %2442
        %2444 = vrot.lane.b32.xlu0 %v2306, 122
        %v2445 = vpop.permute.xlu0 %2444
        %2446 = vrot.lane.b32.xlu0 %v2307, 122
        %v2447 = vpop.permute.xlu0 %2446
        %2448 = vrot.lane.b32.xlu0 %v2308, 122
        %v2449 = vpop.permute.xlu0 %2448
        %2450 = vrot.lane.b32.xlu0 %v2309, 122
        %v2451 = vpop.permute.xlu0 %2450
        %2452 = vrot.lane.b32.xlu0 %v2310, 122
        %v2453 = vpop.permute.xlu0 %2452
        %2454 = vrot.lane.b32.xlu0 %v2311, 122
        %v2455 = vpop.permute.xlu0 %2454
        %2456 = vrot.lane.b32.xlu0 %v2312, 122
        %v2457 = vpop.permute.xlu0 %2456
        %2458 = vrot.lane.b32.xlu0 %v2313, 122
        %v2459 = vpop.permute.xlu0 %2458
        %2460 = vrot.lane.b32.xlu0 %v2314, 122
        %v2461 = vpop.permute.xlu0 %2460
        %2462 = vrot.lane.b32.xlu0 %v2315, 122
        %v2463 = vpop.permute.xlu0 %2462
        %2464 = vrot.lane.b32.xlu0 %v2316, 122
        %v2465 = vpop.permute.xlu0 %2464
        %2466 = vrot.lane.b32.xlu0 %v2317, 122
        %v2467 = vpop.permute.xlu0 %2466
        %2468 = vrot.lane.b32.xlu0 %v2318, 122
        %v2469 = vpop.permute.xlu0 %2468
        %2470 = vrot.lane.b32.xlu0 %v2319, 122
        %v2471 = vpop.permute.xlu0 %2470
        %2472 = vrot.lane.b32.xlu0 %v2320, 122
        %v2473 = vpop.permute.xlu0 %2472
        %2474 = vrot.lane.b32.xlu0 %v2321, 122
        %v2475 = vpop.permute.xlu0 %2474
        %2476 = vrot.lane.b32.xlu0 %v2322, 122
        %v2477 = vpop.permute.xlu0 %2476
        %2478 = vrot.lane.b32.xlu0 %v2323, 122
        %v2479 = vpop.permute.xlu0 %2478
        %2480 = vrot.lane.b32.xlu0 %v2324, 122
        %v2481 = vpop.permute.xlu0 %2480
        %2482 = vrot.lane.b32.xlu0 %v2325, 122
        %v2483 = vpop.permute.xlu0 %2482
        %2484 = vrot.lane.b32.xlu0 %v2326, 122
        %v2485 = vpop.permute.xlu0 %2484
        %2486 = vrot.lane.b32.xlu0 %v2327, 122
        %v2487 = vpop.permute.xlu0 %2486
        %2488 = vrot.lane.b32.xlu0 %v2328, 122
        %v2489 = vpop.permute.xlu0 %2488
        %2490 = vrot.lane.b32.xlu0 %v2329, 122
        %v2491 = vpop.permute.xlu0 %2490
        %2492 = vrot.lane.b32.xlu0 %v2330, 122
        %v2493 = vpop.permute.xlu0 %2492
        %2494 = vrot.lane.b32.xlu0 %v2331, 122
        %v2495 = vpop.permute.xlu0 %2494
        %2496 = vrot.lane.b32.xlu0 %v2332, 122
        %v2497 = vpop.permute.xlu0 %2496
        %2498 = vrot.lane.b32.xlu0 %v2333, 122
        %v2499 = vpop.permute.xlu0 %2498
        %2500 = vrot.lane.b32.xlu0 %v2334, 122
        %v2501 = vpop.permute.xlu0 %2500
        %2502 = vrot.lane.b32.xlu0 %v2335, 122
        %v2503 = vpop.permute.xlu0 %2502
        %2504 = vrot.lane.b32.xlu0 %v2336, 122
        %v2505 = vpop.permute.xlu0 %2504
        %2506 = vrot.lane.b32.xlu0 %v2337, 122
        %v2507 = vpop.permute.xlu0 %2506
        %2508 = vrot.lane.b32.xlu0 %v2338, 122
        %v2509 = vpop.permute.xlu0 %2508
        %2510 = vrot.lane.b32.xlu0 %v2339, 122
        %v2511 = vpop.permute.xlu0 %2510
        %2512 = vrot.lane.b32.xlu0 %v2340, 122
        %v2513 = vpop.permute.xlu0 %2512
        %2514 = vrot.lane.b32.xlu0 %v2341, 122
        %v2515 = vpop.permute.xlu0 %2514
        %2516 = vrot.lane.b32.xlu0 %v2342, 122
        %v2517 = vpop.permute.xlu0 %2516
        %2518 = vrot.lane.b32.xlu0 %v2343, 122
        %v2519 = vpop.permute.xlu0 %2518
        %2520 = vrot.lane.b32.xlu0 %v2344, 122
        %v2521 = vpop.permute.xlu0 %2520
        %2522 = vrot.lane.b32.xlu0 %v2345, 122
        %v2523 = vpop.permute.xlu0 %2522
        %2524 = vrot.lane.b32.xlu0 %v2346, 122
        %v2525 = vpop.permute.xlu0 %2524
        %2526 = vrot.lane.b32.xlu0 %v2347, 122
        %v2527 = vpop.permute.xlu0 %2526
        %2528 = vrot.lane.b32.xlu0 %v2348, 122
        %v2529 = vpop.permute.xlu0 %2528
        %2530 = vrot.lane.b32.xlu0 %v2349, 122
        %v2531 = vpop.permute.xlu0 %2530
        %2532 = vrot.lane.b32.xlu0 %v2350, 122
        %v2533 = vpop.permute.xlu0 %2532
        %2534 = vrot.lane.b32.xlu0 %v2351, 122
        %v2535 = vpop.permute.xlu0 %2534
        %2536 = vrot.lane.b32.xlu0 %v2352, 122
        %v2537 = vpop.permute.xlu0 %2536
        %2538 = vrot.lane.b32.xlu0 %v2353, 122
        %v2539 = vpop.permute.xlu0 %2538
        %2540 = vrot.lane.b32.xlu0 %v2354, 122
        %v2541 = vpop.permute.xlu0 %2540
        %2542 = vrot.lane.b32.xlu0 %v2355, 122
        %v2543 = vpop.permute.xlu0 %2542
        %2544 = vrot.lane.b32.xlu0 %v2356, 122
        %v2545 = vpop.permute.xlu0 %2544
        %2546 = vrot.lane.b32.xlu0 %v2357, 122
        %v2547 = vpop.permute.xlu0 %2546
        %2548 = vrot.lane.b32.xlu0 %v2358, 122
        %v2549 = vpop.permute.xlu0 %2548
        %2550 = vrot.lane.b32.xlu0 %v2359, 122
        %v2551 = vpop.permute.xlu0 %2550
        %vm2552 = vcmask 998400
        %v2553 = vsel %vm2552, %v2425, %v2427
        %v2554 = vsel %vm2552, %v2429, %v2431
        %v2555 = vsel %vm2552, %v2433, %v2435
        %v2556 = vsel %vm2552, %v2437, %v2439
        %v2557 = vsel %vm2552, %v2441, %v2443
        %v2558 = vsel %vm2552, %v2445, %v2447
        %v2559 = vsel %vm2552, %v2449, %v2451
        %v2560 = vsel %vm2552, %v2453, %v2455
        %v2561 = vsel %vm2552, %v2457, %v2459
        %v2562 = vsel %vm2552, %v2461, %v2463
        %v2563 = vsel %vm2552, %v2465, %v2467
        %v2564 = vsel %vm2552, %v2469, %v2471
        %v2565 = vsel %vm2552, %v2473, %v2475
        %v2566 = vsel %vm2552, %v2477, %v2479
        %v2567 = vsel %vm2552, %v2481, %v2483
        %v2568 = vsel %vm2552, %v2485, %v2487
        %v2569 = vsel %vm2552, %v2489, %v2491
        %v2570 = vsel %vm2552, %v2493, %v2495
        %v2571 = vsel %vm2552, %v2497, %v2499
        %v2572 = vsel %vm2552, %v2501, %v2503
        %v2573 = vsel %vm2552, %v2505, %v2507
        %v2574 = vsel %vm2552, %v2509, %v2511
        %v2575 = vsel %vm2552, %v2513, %v2515
        %v2576 = vsel %vm2552, %v2517, %v2519
        %v2577 = vsel %vm2552, %v2521, %v2523
        %v2578 = vsel %vm2552, %v2525, %v2527
        %v2579 = vsel %vm2552, %v2529, %v2531
        %v2580 = vsel %vm2552, %v2533, %v2535
        %v2581 = vsel %vm2552, %v2537, %v2539
        %v2582 = vsel %vm2552, %v2541, %v2543
        %v2583 = vsel %vm2552, %v2545, %v2547
        %v2584 = vsel %vm2552, %v2549, %v2551
        %v2649 = vmax.f32 %v2296, %v2553
        %v2650 = vmax.f32 %v2297, %v2427
        %v2651 = vmax.f32 %v2298, %v2554
        %v2652 = vmax.f32 %v2299, %v2431
        %v2653 = vmax.f32 %v2300, %v2555
        %v2654 = vmax.f32 %v2301, %v2435
        %v2655 = vmax.f32 %v2302, %v2556
        %v2656 = vmax.f32 %v2303, %v2439
        %v2657 = vmax.f32 %v2304, %v2557
        %v2658 = vmax.f32 %v2305, %v2443
        %v2659 = vmax.f32 %v2306, %v2558
        %v2660 = vmax.f32 %v2307, %v2447
        %v2661 = vmax.f32 %v2308, %v2559
        %v2662 = vmax.f32 %v2309, %v2451
        %v2663 = vmax.f32 %v2310, %v2560
        %v2664 = vmax.f32 %v2311, %v2455
        %v2665 = vmax.f32 %v2312, %v2561
        %v2666 = vmax.f32 %v2313, %v2459
        %v2667 = vmax.f32 %v2314, %v2562
        %v2668 = vmax.f32 %v2315, %v2463
        %v2669 = vmax.f32 %v2316, %v2563
        %v2670 = vmax.f32 %v2317, %v2467
        %v2671 = vmax.f32 %v2318, %v2564
        %v2672 = vmax.f32 %v2319, %v2471
        %v2673 = vmax.f32 %v2320, %v2565
        %v2674 = vmax.f32 %v2321, %v2475
        %v2675 = vmax.f32 %v2322, %v2566
        %v2676 = vmax.f32 %v2323, %v2479
        %v2677 = vmax.f32 %v2324, %v2567
        %v2678 = vmax.f32 %v2325, %v2483
        %v2679 = vmax.f32 %v2326, %v2568
        %v2680 = vmax.f32 %v2327, %v2487
        %v2681 = vmax.f32 %v2328, %v2569
        %v2682 = vmax.f32 %v2329, %v2491
        %v2683 = vmax.f32 %v2330, %v2570
        %v2684 = vmax.f32 %v2331, %v2495
        %v2685 = vmax.f32 %v2332, %v2571
        %v2686 = vmax.f32 %v2333, %v2499
        %v2687 = vmax.f32 %v2334, %v2572
        %v2688 = vmax.f32 %v2335, %v2503
        %v2689 = vmax.f32 %v2336, %v2573
        %v2690 = vmax.f32 %v2337, %v2507
        %v2691 = vmax.f32 %v2338, %v2574
        %v2692 = vmax.f32 %v2339, %v2511
        %v2693 = vmax.f32 %v2340, %v2575
        %v2694 = vmax.f32 %v2341, %v2515
        %v2695 = vmax.f32 %v2342, %v2576
        %v2696 = vmax.f32 %v2343, %v2519
        %v2697 = vmax.f32 %v2344, %v2577
        %v2698 = vmax.f32 %v2345, %v2523
        %v2699 = vmax.f32 %v2346, %v2578
        %v2700 = vmax.f32 %v2347, %v2527
        %v2701 = vmax.f32 %v2348, %v2579
        %v2702 = vmax.f32 %v2349, %v2531
        %v2703 = vmax.f32 %v2350, %v2580
        %v2704 = vmax.f32 %v2351, %v2535
        %v2705 = vmax.f32 %v2352, %v2581
        %v2706 = vmax.f32 %v2353, %v2539
        %v2707 = vmax.f32 %v2354, %v2582
        %v2708 = vmax.f32 %v2355, %v2543
        %v2709 = vmax.f32 %v2356, %v2583
        %v2710 = vmax.f32 %v2357, %v2547
        %v2711 = vmax.f32 %v2358, %v2584
        %v2712 = vmax.f32 %v2359, %v2551
        %v2713 = vpack.c.bf16 %v2651, %v2649
        %v2714 = vpack.c.bf16 %v2652, %v2650
        %v2715 = vpack.c.bf16 %v2655, %v2653
        %v2716 = vpack.c.bf16 %v2656, %v2654
        %v2717 = vpack.c.bf16 %v2659, %v2657
        %v2718 = vpack.c.bf16 %v2660, %v2658
        %v2719 = vpack.c.bf16 %v2663, %v2661
        %v2720 = vpack.c.bf16 %v2664, %v2662
        %v2721 = vpack.c.bf16 %v2667, %v2665
        %v2722 = vpack.c.bf16 %v2668, %v2666
        %v2723 = vpack.c.bf16 %v2671, %v2669
        %v2724 = vpack.c.bf16 %v2672, %v2670
        %v2725 = vpack.c.bf16 %v2675, %v2673
        %v2726 = vpack.c.bf16 %v2676, %v2674
        %v2727 = vpack.c.bf16 %v2679, %v2677
        %v2728 = vpack.c.bf16 %v2680, %v2678
        %v2729 = vpack.c.bf16 %v2683, %v2681
        %v2730 = vpack.c.bf16 %v2684, %v2682
        %v2731 = vpack.c.bf16 %v2687, %v2685
        %v2732 = vpack.c.bf16 %v2688, %v2686
        %v2733 = vpack.c.bf16 %v2691, %v2689
        %v2734 = vpack.c.bf16 %v2692, %v2690
        %v2735 = vpack.c.bf16 %v2695, %v2693
        %v2736 = vpack.c.bf16 %v2696, %v2694
        %v2737 = vpack.c.bf16 %v2699, %v2697
        %v2738 = vpack.c.bf16 %v2700, %v2698
        %v2739 = vpack.c.bf16 %v2703, %v2701
        %v2740 = vpack.c.bf16 %v2704, %v2702
        %v2741 = vpack.c.bf16 %v2707, %v2705
        %v2742 = vpack.c.bf16 %v2708, %v2706
        %v2743 = vpack.c.bf16 %v2711, %v2709
        %v2744 = vpack.c.bf16 %v2712, %v2710
        %v2745 = vld [vmem:[%s3] sm:$0xff]
        %v2746 = vld [vmem:[%s3 + $0x8] sm:$0xff]
        %v2747 = vld [vmem:[%s3 + $0x10] sm:$0xff]
        %v2748 = vld [vmem:[%s3 + $0x18] sm:$0xff]
        %v2749 = vld [vmem:[%s3 + $0x20] sm:$0xff]
        %v2750 = vld [vmem:[%s3 + $0x28] sm:$0xff]
        %v2751 = vld [vmem:[%s3 + $0x30] sm:$0xff]
        %v2752 = vld [vmem:[%s3 + $0x38] sm:$0xff]
        %v2753 = vld [vmem:[%s3 + $0x40] sm:$0xff]
        %v2754 = vld [vmem:[%s3 + $0x48] sm:$0xff]
        %v2755 = vld [vmem:[%s3 + $0x50] sm:$0xff]
        %v2756 = vld [vmem:[%s3 + $0x58] sm:$0xff]
        %v2757 = vld [vmem:[%s3 + $0x60] sm:$0xff]
        %v2758 = vld [vmem:[%s3 + $0x68] sm:$0xff]
        %v2759 = vld [vmem:[%s3 + $0x70] sm:$0xff]
        %v2760 = vld [vmem:[%s3 + $0x78] sm:$0xff]
        %v2777 = vunpack.c.l.b16 %v2745
        %v2778 = vunpack.c.h.b16 %v2745
        %v2779 = vunpack.c.l.b16 %v2746
        %v2780 = vunpack.c.h.b16 %v2746
        %v2781 = vunpack.c.l.b16 %v2747
        %v2782 = vunpack.c.h.b16 %v2747
        %v2783 = vunpack.c.l.b16 %v2748
        %v2784 = vunpack.c.h.b16 %v2748
        %v2785 = vunpack.c.l.b16 %v2749
        %v2786 = vunpack.c.h.b16 %v2749
        %v2787 = vunpack.c.l.b16 %v2750
        %v2788 = vunpack.c.h.b16 %v2750
        %v2789 = vunpack.c.l.b16 %v2751
        %v2790 = vunpack.c.h.b16 %v2751
        %v2791 = vunpack.c.l.b16 %v2752
        %v2792 = vunpack.c.h.b16 %v2752
        %v2793 = vunpack.c.l.b16 %v2753
        %v2794 = vunpack.c.h.b16 %v2753
        %v2795 = vunpack.c.l.b16 %v2754
        %v2796 = vunpack.c.h.b16 %v2754
        %v2797 = vunpack.c.l.b16 %v2755
        %v2798 = vunpack.c.h.b16 %v2755
        %v2799 = vunpack.c.l.b16 %v2756
        %v2800 = vunpack.c.h.b16 %v2756
        %v2801 = vunpack.c.l.b16 %v2757
        %v2802 = vunpack.c.h.b16 %v2757
        %v2803 = vunpack.c.l.b16 %v2758
        %v2804 = vunpack.c.h.b16 %v2758
        %v2805 = vunpack.c.l.b16 %v2759
        %v2806 = vunpack.c.h.b16 %v2759
        %v2807 = vunpack.c.l.b16 %v2760
        %v2808 = vunpack.c.h.b16 %v2760
        %v2809 = vpack.c.b16 %v2779, %v2777
        %v2810 = vpack.c.b16 %v2780, %v2778
        %v2811 = vpack.c.b16 %v2783, %v2781
        %v2812 = vpack.c.b16 %v2784, %v2782
        %v2813 = vpack.c.b16 %v2787, %v2785
        %v2814 = vpack.c.b16 %v2788, %v2786
        %v2815 = vpack.c.b16 %v2791, %v2789
        %v2816 = vpack.c.b16 %v2792, %v2790
        %v2817 = vpack.c.b16 %v2795, %v2793
        %v2818 = vpack.c.b16 %v2796, %v2794
        %v2819 = vpack.c.b16 %v2799, %v2797
        %v2820 = vpack.c.b16 %v2800, %v2798
        %v2821 = vpack.c.b16 %v2803, %v2801
        %v2822 = vpack.c.b16 %v2804, %v2802
        %v2823 = vpack.c.b16 %v2807, %v2805
        %v2824 = vpack.c.b16 %v2808, %v2806
        %vm2833 = vcmask 1039360
        %v2835 = vsel %vm2833, %v2810, 0
        %v2838 = vsel %vm2833, %v2812, 0
        %v2841 = vsel %vm2833, %v2814, 0
        %v2844 = vsel %vm2833, %v2816, 0
        %v2847 = vsel %vm2833, %v2818, 0
        %v2850 = vsel %vm2833, %v2820, 0
        %v2853 = vsel %vm2833, %v2822, 0
        %v2856 = vsel %vm2833, %v2824, 0
        %vm2858 = vcmask 1047552
        %v2859 = vsel %vm2105, 4294967295, 65535
        %v2860 = vsel %vm2858, %v2859, 0
        %v2862 = vand.u32 %v2743, %v2860
        %v2865 = vand.u32 %v2744, %v2860
        %2867 = vmatprep.subr.bf16.mxu0 %v2714
        %2868 = vmatpush1.bf16.msra.mxu0 %v2713
        %2869 = vmatprep.subr.bf16.mxu0 %v2716
        %2870 = vmatpush1.bf16.msra.mxu0 %v2715
        %2871 = vmatprep.subr.bf16.mxu0 %v2718
        %2872 = vmatpush1.bf16.msra.mxu0 %v2717
        %2873 = vmatprep.subr.bf16.mxu0 %v2720
        %2874 = vmatpush1.bf16.msra.mxu0 %v2719
        %2875 = vmatprep.subr.bf16.mxu0 %v2722
        %2876 = vmatpush1.bf16.msra.mxu0 %v2721
        %2877 = vmatprep.subr.bf16.mxu0 %v2724
        %2878 = vmatpush1.bf16.msra.mxu0 %v2723
        %2879 = vmatprep.subr.bf16.mxu0 %v2726
        %2880 = vmatpush1.bf16.msra.mxu0 %v2725
        %2881 = vmatprep.subr.bf16.mxu0 %v2728
        %2882 = vmatpush1.bf16.msra.mxu0 %v2727
        %2883 = vmatprep.subr.bf16.mxu0 %v2730
        %2884 = vmatpush1.bf16.msra.mxu0 %v2729
        %2885 = vmatprep.subr.bf16.mxu0 %v2732
        %2886 = vmatpush1.bf16.msra.mxu0 %v2731
        %2887 = vmatprep.subr.bf16.mxu0 %v2734
        %2888 = vmatpush1.bf16.msra.mxu0 %v2733
        %2889 = vmatprep.subr.bf16.mxu0 %v2736
        %2890 = vmatpush1.bf16.msra.mxu0 %v2735
        %2891 = vmatprep.subr.bf16.mxu0 %v2738
        %2892 = vmatpush1.bf16.msra.mxu0 %v2737
        %2893 = vmatprep.subr.bf16.mxu0 %v2740
        %2894 = vmatpush1.bf16.msra.mxu0 %v2739
        %2895 = vmatprep.subr.bf16.mxu0 %v2742
        %2896 = vmatpush1.bf16.msra.mxu0 %v2741
        %2897 = vmatprep.subr.bf16.mxu0 %v2865
        %2898 = vmatpush1.bf16.msra.mxu0 %v2862
        %2899 = vmatprep.mubr.bf16.mxu0 %v2835
        %2900 = vmatmul.mubr.bf16.gmra.mrb[0].mxu0 %v2809
        %v2901 = vpop.f32.mrb[0].mxu0
        %v2902 = vadd.f32 0.0, %v2901
        %v2903 = vpop.f32.mrb[0].mxu0
        %v2904 = vadd.f32 0.0, %v2903
        %v2905 = vpop.f32.mrb[0].mxu0
        %v2906 = vadd.f32 0.0, %v2905
        %v2907 = vpop.f32.mrb[0].mxu0
        %v2908 = vadd.f32 0.0, %v2907
        %2909 = vmatprep.mubr.bf16.mxu0 %v2838
        %2910 = vmatmul.mubr.bf16.gmra.mrb[0].mxu0 %v2811
        %v2911 = vpop.f32.mrb[0].mxu0
        %v2912 = vadd.f32 0.0, %v2911
        %v2913 = vpop.f32.mrb[0].mxu0
        %v2914 = vadd.f32 0.0, %v2913
        %v2915 = vpop.f32.mrb[0].mxu0
        %v2916 = vadd.f32 0.0, %v2915
        %v2917 = vpop.f32.mrb[0].mxu0
        %v2918 = vadd.f32 0.0, %v2917
        %2919 = vmatprep.mubr.bf16.mxu0 %v2841
        %2920 = vmatmul.mubr.bf16.gmra.mrb[0].mxu0 %v2813
        %v2921 = vpop.f32.mrb[0].mxu0
        %v2922 = vadd.f32 0.0, %v2921
        %v2923 = vpop.f32.mrb[0].mxu0
        %v2924 = vadd.f32 0.0, %v2923
        %v2925 = vpop.f32.mrb[0].mxu0
        %v2926 = vadd.f32 0.0, %v2925
        %v2927 = vpop.f32.mrb[0].mxu0
        %v2928 = vadd.f32 0.0, %v2927
        %2929 = vmatprep.mubr.bf16.mxu0 %v2844
        %2930 = vmatmul.mubr.bf16.gmra.mrb[0].mxu0 %v2815
        %v2931 = vpop.f32.mrb[0].mxu0
        %v2932 = vadd.f32 0.0, %v2931
        %v2933 = vpop.f32.mrb[0].mxu0
        %v2934 = vadd.f32 0.0, %v2933
        %v2935 = vpop.f32.mrb[0].mxu0
        %v2936 = vadd.f32 0.0, %v2935
        %v2937 = vpop.f32.mrb[0].mxu0
        %v2938 = vadd.f32 0.0, %v2937
        %2939 = vmatprep.mubr.bf16.mxu0 %v2847
        %2940 = vmatmul.mubr.bf16.gmra.mrb[0].mxu0 %v2817
        %v2941 = vpop.f32.mrb[0].mxu0
        %v2942 = vadd.f32 0.0, %v2941
        %v2943 = vpop.f32.mrb[0].mxu0
        %v2944 = vadd.f32 0.0, %v2943
        %v2945 = vpop.f32.mrb[0].mxu0
        %v2946 = vadd.f32 0.0, %v2945
        %v2947 = vpop.f32.mrb[0].mxu0
        %v2948 = vadd.f32 0.0, %v2947
        %2949 = vmatprep.mubr.bf16.mxu0 %v2850
        %2950 = vmatmul.mubr.bf16.gmra.mrb[0].mxu0 %v2819
        %v2951 = vpop.f32.mrb[0].mxu0
        %v2952 = vadd.f32 0.0, %v2951
        %v2953 = vpop.f32.mrb[0].mxu0
        %v2954 = vadd.f32 0.0, %v2953
        %v2955 = vpop.f32.mrb[0].mxu0
        %v2956 = vadd.f32 0.0, %v2955
        %v2957 = vpop.f32.mrb[0].mxu0
        %v2958 = vadd.f32 0.0, %v2957
        %2959 = vmatprep.mubr.bf16.mxu0 %v2853
        %2960 = vmatmul.mubr.bf16.gmra.mrb[0].mxu0 %v2821
        %v2961 = vpop.f32.mrb[0].mxu0
        %v2962 = vadd.f32 0.0, %v2961
        %v2963 = vpop.f32.mrb[0].mxu0
        %v2964 = vadd.f32 0.0, %v2963
        %v2965 = vpop.f32.mrb[0].mxu0
        %v2966 = vadd.f32 0.0, %v2965
        %v2967 = vpop.f32.mrb[0].mxu0
        %v2968 = vadd.f32 0.0, %v2967
        %2969 = vmatprep.mubr.bf16.mxu0 %v2856
        %2970 = vmatmul.mubr.bf16.gmra.mrb[0].mxu0 %v2823
        %v2971 = vpop.f32.mrb[0].mxu0
        %v2972 = vadd.f32 0.0, %v2971
        %v2973 = vpop.f32.mrb[0].mxu0
        %v2974 = vadd.f32 0.0, %v2973
        %v2975 = vpop.f32.mrb[0].mxu0
        %v2976 = vadd.f32 0.0, %v2975
        %v2977 = vpop.f32.mrb[0].mxu0
        %v2978 = vadd.f32 0.0, %v2977
        %2979 = vdwg.mxu0
        %v2980 = vpack.c.bf16 %v2906, %v2902
        %v2981 = vpack.c.bf16 %v2908, %v2904
        %v2982 = vpack.c.bf16 %v2916, %v2912
        %v2983 = vpack.c.bf16 %v2918, %v2914
        %v2984 = vpack.c.bf16 %v2926, %v2922
        %v2985 = vpack.c.bf16 %v2928, %v2924
        %v2986 = vpack.c.bf16 %v2936, %v2932
        %v2987 = vpack.c.bf16 %v2938, %v2934
        %v2988 = vpack.c.bf16 %v2946, %v2942
        %v2989 = vpack.c.bf16 %v2948, %v2944
        %v2990 = vpack.c.bf16 %v2956, %v2952
        %v2991 = vpack.c.bf16 %v2958, %v2954
        %v2992 = vpack.c.bf16 %v2966, %v2962
        %v2993 = vpack.c.bf16 %v2968, %v2964
        %v2994 = vpack.c.bf16 %v2976, %v2972
        %v2995 = vpack.c.bf16 %v2978, %v2974
        %v2996 = vld [vmem:[%s5] sm:$0x3]
        %v2998 = vlaneseq
        %v2999 = vshrl.u32 %v2998, 7
        %v3000 = vsub.s32 0, %v2999
        %v3001 = vrot.slane %v2996, %v3000
        %v3002 = vlaneseq
        %v3003 = vshrl.u32 %v3002, 7
        %v3004 = vsub.s32 1, %v3003
        %v3005 = vrot.slane %v2996, %v3004
        %v3008 = vld [vmem:[%s4] sm:$0xff]
        %v3009 = vld [vmem:[%s4 + $0x8] sm:$0xff]
        %v3010 = vld [vmem:[%s4 + $0x10] sm:$0xff]
        %v3011 = vld [vmem:[%s4 + $0x18] sm:$0xff]
        %v3012 = vld [vmem:[%s4 + $0x20] sm:$0xff]
        %v3013 = vld [vmem:[%s4 + $0x28] sm:$0xff]
        %v3014 = vld [vmem:[%s4 + $0x30] sm:$0xff]
        %v3015 = vld [vmem:[%s4 + $0x38] sm:$0xff]
        %v3016 = vld [vmem:[%s4 + $0x40] sm:$0xff]
        %v3017 = vld [vmem:[%s4 + $0x48] sm:$0xff]
        %v3018 = vld [vmem:[%s4 + $0x50] sm:$0xff]
        %v3019 = vld [vmem:[%s4 + $0x58] sm:$0xff]
        %v3020 = vld [vmem:[%s4 + $0x60] sm:$0xff]
        %v3021 = vld [vmem:[%s4 + $0x68] sm:$0xff]
        %v3022 = vld [vmem:[%s4 + $0x70] sm:$0xff]
        %v3023 = vld [vmem:[%s4 + $0x78] sm:$0xff]
        %v3024 = vld [vmem:[%s4 + $0x80] sm:$0xff]
        %v3025 = vld [vmem:[%s4 + $0x88] sm:$0xff]
        %v3026 = vld [vmem:[%s4 + $0x90] sm:$0xff]
        %v3027 = vld [vmem:[%s4 + $0x98] sm:$0xff]
        %v3028 = vld [vmem:[%s4 + $0xa0] sm:$0x11]
        %v3050 = vunpack.c.l.b16 %v3008
        %v3051 = vunpack.c.h.b16 %v3008
        %v3052 = vunpack.c.l.b16 %v3009
        %v3053 = vunpack.c.h.b16 %v3009
        %v3054 = vunpack.c.l.b16 %v3010
        %v3055 = vunpack.c.h.b16 %v3010
        %v3056 = vunpack.c.l.b16 %v3011
        %v3057 = vunpack.c.h.b16 %v3011
        %v3058 = vunpack.c.l.b16 %v3012
        %v3059 = vunpack.c.h.b16 %v3012
        %v3060 = vunpack.c.l.b16 %v3013
        %v3061 = vunpack.c.h.b16 %v3013
        %v3062 = vunpack.c.l.b16 %v3014
        %v3063 = vunpack.c.h.b16 %v3014
        %v3064 = vunpack.c.l.b16 %v3015
        %v3065 = vunpack.c.h.b16 %v3015
        %v3066 = vunpack.c.l.b16 %v3016
        %v3067 = vunpack.c.h.b16 %v3016
        %v3068 = vunpack.c.l.b16 %v3017
        %v3069 = vunpack.c.h.b16 %v3017
        %v3070 = vunpack.c.l.b16 %v3018
        %v3071 = vunpack.c.h.b16 %v3018
        %v3072 = vunpack.c.l.b16 %v3019
        %v3073 = vunpack.c.h.b16 %v3019
        %v3074 = vunpack.c.l.b16 %v3020
        %v3075 = vunpack.c.h.b16 %v3020
        %v3076 = vunpack.c.l.b16 %v3021
        %v3077 = vunpack.c.h.b16 %v3021
        %v3078 = vunpack.c.l.b16 %v3022
        %v3079 = vunpack.c.h.b16 %v3022
        %v3080 = vunpack.c.l.b16 %v3023
        %v3081 = vunpack.c.h.b16 %v3023
        %v3082 = vunpack.c.l.b16 %v3024
        %v3083 = vunpack.c.h.b16 %v3024
        %v3084 = vunpack.c.l.b16 %v3025
        %v3085 = vunpack.c.h.b16 %v3025
        %v3086 = vunpack.c.l.b16 %v3026
        %v3087 = vunpack.c.h.b16 %v3026
        %v3088 = vunpack.c.l.b16 %v3027
        %v3089 = vunpack.c.h.b16 %v3027
        %v3090 = vunpack.c.l.b16 %v3028
        %v3091 = vunpack.c.h.b16 %v3028
        %v3092 = vpack.c.b16 %v3052, %v3050
        %v3093 = vpack.c.b16 %v3053, %v3051
        %v3094 = vpack.c.b16 %v3056, %v3054
        %v3095 = vpack.c.b16 %v3057, %v3055
        %v3096 = vpack.c.b16 %v3060, %v3058
        %v3097 = vpack.c.b16 %v3061, %v3059
        %v3098 = vpack.c.b16 %v3064, %v3062
        %v3099 = vpack.c.b16 %v3065, %v3063
        %v3100 = vpack.c.b16 %v3068, %v3066
        %v3101 = vpack.c.b16 %v3069, %v3067
        %v3102 = vpack.c.b16 %v3072, %v3070
        %v3103 = vpack.c.b16 %v3073, %v3071
        %v3104 = vpack.c.b16 %v3076, %v3074
        %v3105 = vpack.c.b16 %v3077, %v3075
        %v3106 = vpack.c.b16 %v3080, %v3078
        %v3107 = vpack.c.b16 %v3081, %v3079
        %v3108 = vpack.c.b16 %v3084, %v3082
        %v3109 = vpack.c.b16 %v3085, %v3083
        %v3110 = vpack.c.b16 %v3088, %v3086
        %v3111 = vpack.c.b16 %v3089, %v3087
        %v3112 = vpack.c.b16 %v3090, %v3090
        %v3113 = vpack.c.b16 %v3091, %v3091
        %vm3134 = vcmask 277504
        %v3136 = vsel %vm3134, %v2981, 0
        %v3139 = vsel %vm3134, %v2983, 0
        %v3142 = vsel %vm3134, %v2985, 0
        %v3145 = vsel %vm3134, %v2987, 0
        %v3148 = vsel %vm3134, %v2989, 0
        %v3151 = vsel %vm3134, %v2991, 0
        %v3154 = vsel %vm3134, %v2993, 0
        %v3157 = vsel %vm3134, %v2995, 0
        %vm3159 = vcmask 1040384
        %v3161 = vsel %vm3159, %v3112, 0
        %v3164 = vsel %vm3159, %v3113, 0
        %3166 = vmatprep.subr.bf16.mxu0 %v3093
        %3167 = vmatpush1.bf16.msra.mxu0 %v3092
        %3168 = vmatprep.subr.bf16.mxu0 %v3095
        %3169 = vmatpush1.bf16.msra.mxu0 %v3094
        %3170 = vmatprep.subr.bf16.mxu0 %v3097
        %3171 = vmatpush1.bf16.msra.mxu0 %v3096
        %3172 = vmatprep.subr.bf16.mxu0 %v3099
        %3173 = vmatpush1.bf16.msra.mxu0 %v3098
        %3174 = vmatprep.subr.bf16.mxu0 %v3101
        %3175 = vmatpush1.bf16.msra.mxu0 %v3100
        %3176 = vmatprep.subr.bf16.mxu0 %v3103
        %3177 = vmatpush1.bf16.msra.mxu0 %v3102
        %3178 = vmatprep.subr.bf16.mxu0 %v3105
        %3179 = vmatpush1.bf16.msra.mxu0 %v3104
        %3180 = vmatprep.subr.bf16.mxu0 %v3107
        %3181 = vmatpush1.bf16.msra.mxu0 %v3106
        %3182 = vmatprep.subr.bf16.mxu0 %v3109
        %3183 = vmatpush1.bf16.msra.mxu0 %v3108
        %3184 = vmatprep.subr.bf16.mxu0 %v3111
        %3185 = vmatpush1.bf16.msra.mxu0 %v3110
        %3186 = vmatprep.subr.bf16.mxu0 %v3164
        %3187 = vmatpush1.bf16.msra.mxu0 %v3161
        %3188 = vmatprep.subr.bf16.mxu0 0
        %3189 = vmatpush1.bf16.msra.mxu0 0
        %3190 = vmatprep.subr.bf16.mxu0 0
        %3191 = vmatpush1.bf16.msra.mxu0 0
        %3192 = vmatprep.subr.bf16.mxu0 0
        %3193 = vmatpush1.bf16.msra.mxu0 0
        %3194 = vmatprep.subr.bf16.mxu0 0
        %3195 = vmatpush1.bf16.msra.mxu0 0
        %3196 = vmatprep.subr.bf16.mxu0 0
        %3197 = vmatpush1.bf16.msra.mxu0 0
        %3198 = vmatprep.mubr.bf16.mxu0 %v3136
        %3199 = vmatmul.mubr.bf16.gmra.mrb[0].mxu0 %v2980
        %v3200 = vpop.f32.mrb[0].mxu0
        %v3201 = vadd.f32 0.0, %v3200
        %v3202 = vpop.f32.mrb[0].mxu0
        %v3203 = vadd.f32 0.0, %v3202
        %v3204 = vpop.f32.mrb[0].mxu0
        %v3205 = vadd.f32 0.0, %v3204
        %v3206 = vpop.f32.mrb[0].mxu0
        %v3207 = vadd.f32 0.0, %v3206
        %3208 = vmatprep.mubr.bf16.mxu0 %v3139
        %3209 = vmatmul.mubr.bf16.gmra.mrb[0].mxu0 %v2982
        %v3210 = vpop.f32.mrb[0].mxu0
        %v3211 = vadd.f32 0.0, %v3210
        %v3212 = vpop.f32.mrb[0].mxu0
        %v3213 = vadd.f32 0.0, %v3212
        %v3214 = vpop.f32.mrb[0].mxu0
        %v3215 = vadd.f32 0.0, %v3214
        %v3216 = vpop.f32.mrb[0].mxu0
        %v3217 = vadd.f32 0.0, %v3216
        %3218 = vmatprep.mubr.bf16.mxu0 %v3142
        %3219 = vmatmul.mubr.bf16.gmra.mrb[0].mxu0 %v2984
        %v3220 = vpop.f32.mrb[0].mxu0
        %v3221 = vadd.f32 0.0, %v3220
        %v3222 = vpop.f32.mrb[0].mxu0
        %v3223 = vadd.f32 0.0, %v3222
        %v3224 = vpop.f32.mrb[0].mxu0
        %v3225 = vadd.f32 0.0, %v3224
        %v3226 = vpop.f32.mrb[0].mxu0
        %v3227 = vadd.f32 0.0, %v3226
        %3228 = vmatprep.mubr.bf16.mxu0 %v3145
        %3229 = vmatmul.mubr.bf16.gmra.mrb[0].mxu0 %v2986
        %v3230 = vpop.f32.mrb[0].mxu0
        %v3231 = vadd.f32 0.0, %v3230
        %v3232 = vpop.f32.mrb[0].mxu0
        %v3233 = vadd.f32 0.0, %v3232
        %v3234 = vpop.f32.mrb[0].mxu0
        %v3235 = vadd.f32 0.0, %v3234
        %v3236 = vpop.f32.mrb[0].mxu0
        %v3237 = vadd.f32 0.0, %v3236
        %3238 = vmatprep.mubr.bf16.mxu0 %v3148
        %3239 = vmatmul.mubr.bf16.gmra.mrb[0].mxu0 %v2988
        %v3240 = vpop.f32.mrb[0].mxu0
        %v3241 = vadd.f32 0.0, %v3240
        %v3242 = vpop.f32.mrb[0].mxu0
        %v3243 = vadd.f32 0.0, %v3242
        %v3244 = vpop.f32.mrb[0].mxu0
        %v3245 = vadd.f32 0.0, %v3244
        %v3246 = vpop.f32.mrb[0].mxu0
        %v3247 = vadd.f32 0.0, %v3246
        %3248 = vmatprep.mubr.bf16.mxu0 %v3151
        %3249 = vmatmul.mubr.bf16.gmra.mrb[0].mxu0 %v2990
        %v3250 = vpop.f32.mrb[0].mxu0
        %v3251 = vadd.f32 0.0, %v3250
        %v3252 = vpop.f32.mrb[0].mxu0
        %v3253 = vadd.f32 0.0, %v3252
        %v3254 = vpop.f32.mrb[0].mxu0
        %v3255 = vadd.f32 0.0, %v3254
        %v3256 = vpop.f32.mrb[0].mxu0
        %v3257 = vadd.f32 0.0, %v3256
        %3258 = vmatprep.mubr.bf16.mxu0 %v3154
        %3259 = vmatmul.mubr.bf16.gmra.mrb[0].mxu0 %v2992
        %v3260 = vpop.f32.mrb[0].mxu0
        %v3261 = vadd.f32 0.0, %v3260
        %v3262 = vpop.f32.mrb[0].mxu0
        %v3263 = vadd.f32 0.0, %v3262
        %v3264 = vpop.f32.mrb[0].mxu0
        %v3265 = vadd.f32 0.0, %v3264
        %v3266 = vpop.f32.mrb[0].mxu0
        %v3267 = vadd.f32 0.0, %v3266
        %3268 = vmatprep.mubr.bf16.mxu0 %v3157
        %3269 = vmatmul.mubr.bf16.gmra.mrb[0].mxu0 %v2994
        %v3270 = vpop.f32.mrb[0].mxu0
        %v3271 = vadd.f32 0.0, %v3270
        %v3272 = vpop.f32.mrb[0].mxu0
        %v3273 = vadd.f32 0.0, %v3272
        %v3274 = vpop.f32.mrb[0].mxu0
        %v3275 = vadd.f32 0.0, %v3274
        %v3276 = vpop.f32.mrb[0].mxu0
        %v3277 = vadd.f32 0.0, %v3276
        %3278 = vdwg.mxu0
        %v3279 = vadd.f32 %v3001, %v3201
        %v3280 = vadd.f32 %v3005, %v3203
        %v3281 = vadd.f32 %v3001, %v3205
        %v3282 = vadd.f32 %v3005, %v3207
        %v3283 = vadd.f32 %v3001, %v3211
        %v3284 = vadd.f32 %v3005, %v3213
        %v3285 = vadd.f32 %v3001, %v3215
        %v3286 = vadd.f32 %v3005, %v3217
        %v3287 = vadd.f32 %v3001, %v3221
        %v3288 = vadd.f32 %v3005, %v3223
        %v3289 = vadd.f32 %v3001, %v3225
        %v3290 = vadd.f32 %v3005, %v3227
        %v3291 = vadd.f32 %v3001, %v3231
        %v3292 = vadd.f32 %v3005, %v3233
        %v3293 = vadd.f32 %v3001, %v3235
        %v3294 = vadd.f32 %v3005, %v3237
        %v3295 = vadd.f32 %v3001, %v3241
        %v3296 = vadd.f32 %v3005, %v3243
        %v3297 = vadd.f32 %v3001, %v3245
        %v3298 = vadd.f32 %v3005, %v3247
        %v3299 = vadd.f32 %v3001, %v3251
        %v3300 = vadd.f32 %v3005, %v3253
        %v3301 = vadd.f32 %v3001, %v3255
        %v3302 = vadd.f32 %v3005, %v3257
        %v3303 = vadd.f32 %v3001, %v3261
        %v3304 = vadd.f32 %v3005, %v3263
        %v3305 = vadd.f32 %v3001, %v3265
        %v3306 = vadd.f32 %v3005, %v3267
        %v3307 = vadd.f32 %v3001, %v3271
        %v3308 = vadd.f32 %v3005, %v3273
        %v3309 = vadd.f32 %v3001, %v3275
        %v3310 = vadd.f32 %v3005, %v3277
        %s3311 = scalar_lea.vmem %s4, 168
        %v3312 = vld [vmem:[%s3311] sm:$0xff]
        %v3313 = vld [vmem:[%s3311 + $0x8] sm:$0xff]
        %v3314 = vld [vmem:[%s3311 + $0x10] sm:$0xff]
        %v3315 = vld [vmem:[%s3311 + $0x18] sm:$0xff]
        %v3316 = vld [vmem:[%s3311 + $0x20] sm:$0xff]
        %v3317 = vld [vmem:[%s3311 + $0x28] sm:$0xff]
        %v3318 = vld [vmem:[%s3311 + $0x30] sm:$0xff]
        %v3319 = vld [vmem:[%s3311 + $0x38] sm:$0xff]
        %v3320 = vld [vmem:[%s3311 + $0x40] sm:$0xff]
        %v3321 = vld [vmem:[%s3311 + $0x48] sm:$0xff]
        %v3322 = vld [vmem:[%s3311 + $0x50] sm:$0xff]
        %v3323 = vld [vmem:[%s3311 + $0x58] sm:$0xff]
        %v3324 = vld [vmem:[%s3311 + $0x60] sm:$0xff]
        %v3325 = vld [vmem:[%s3311 + $0x68] sm:$0xff]
        %v3326 = vld [vmem:[%s3311 + $0x70] sm:$0xff]
        %v3327 = vld [vmem:[%s3311 + $0x78] sm:$0xff]
        %v3328 = vld [vmem:[%s3311 + $0x80] sm:$0xff]
        %v3329 = vld [vmem:[%s3311 + $0x88] sm:$0xff]
        %v3330 = vld [vmem:[%s3311 + $0x90] sm:$0xff]
        %v3331 = vld [vmem:[%s3311 + $0x98] sm:$0xff]
        %v3332 = vld [vmem:[%s3311 + $0xa0] sm:$0x11]
        %v3334 = vshrl.u32 %v2980, 16
        %v3336 = vshll.u32 %v2980, 16
        %v3338 = vrot.slane %v3336, 1
        %v3339 = vor.u32 %v3334, %v3338
        %v3341 = vshll.u32 %v2982, 16
        %v3343 = vrot.slane %v3341, 1
        %v3344 = vsel %vm570, %v3339, %v3343
        %v3345 = vshrl.u32 %v2981, 16
        %v3347 = vshll.u32 %v2981, 16
        %v3349 = vrot.slane %v3347, 1
        %v3350 = vor.u32 %v3345, %v3349
        %v3351 = vshll.u32 %v2983, 16
        %v3353 = vrot.slane %v3351, 1
        %v3354 = vsel %vm570, %v3350, %v3353
        %v3355 = vshrl.u32 %v2982, 16
        %v3357 = vor.u32 %v3355, %v3343
        %v3359 = vshll.u32 %v2984, 16
        %v3361 = vrot.slane %v3359, 1
        %v3362 = vsel %vm570, %v3357, %v3361
        %v3363 = vshrl.u32 %v2983, 16
        %v3365 = vor.u32 %v3363, %v3353
        %v3366 = vshll.u32 %v2985, 16
        %v3368 = vrot.slane %v3366, 1
        %v3369 = vsel %vm570, %v3365, %v3368
        %v3370 = vshrl.u32 %v2984, 16
        %v3372 = vor.u32 %v3370, %v3361
        %v3374 = vshll.u32 %v2986, 16
        %v3376 = vrot.slane %v3374, 1
        %v3377 = vsel %vm570, %v3372, %v3376
        %v3378 = vshrl.u32 %v2985, 16
        %v3380 = vor.u32 %v3378, %v3368
        %v3381 = vshll.u32 %v2987, 16
        %v3383 = vrot.slane %v3381, 1
        %v3384 = vsel %vm570, %v3380, %v3383
        %v3385 = vshrl.u32 %v2986, 16
        %v3387 = vor.u32 %v3385, %v3376
        %v3389 = vshll.u32 %v2988, 16
        %v3391 = vrot.slane %v3389, 1
        %v3392 = vsel %vm570, %v3387, %v3391
        %v3393 = vshrl.u32 %v2987, 16
        %v3395 = vor.u32 %v3393, %v3383
        %v3396 = vshll.u32 %v2989, 16
        %v3398 = vrot.slane %v3396, 1
        %v3399 = vsel %vm570, %v3395, %v3398
        %v3400 = vshrl.u32 %v2988, 16
        %v3402 = vor.u32 %v3400, %v3391
        %v3404 = vshll.u32 %v2990, 16
        %v3406 = vrot.slane %v3404, 1
        %v3407 = vsel %vm570, %v3402, %v3406
        %v3408 = vshrl.u32 %v2989, 16
        %v3410 = vor.u32 %v3408, %v3398
        %v3411 = vshll.u32 %v2991, 16
        %v3413 = vrot.slane %v3411, 1
        %v3414 = vsel %vm570, %v3410, %v3413
        %v3415 = vshrl.u32 %v2990, 16
        %v3417 = vor.u32 %v3415, %v3406
        %v3419 = vshll.u32 %v2992, 16
        %v3421 = vrot.slane %v3419, 1
        %v3422 = vsel %vm570, %v3417, %v3421
        %v3423 = vshrl.u32 %v2991, 16
        %v3425 = vor.u32 %v3423, %v3413
        %v3426 = vshll.u32 %v2993, 16
        %v3428 = vrot.slane %v3426, 1
        %v3429 = vsel %vm570, %v3425, %v3428
        %v3430 = vshrl.u32 %v2992, 16
        %v3432 = vor.u32 %v3430, %v3421
        %v3434 = vshll.u32 %v2994, 16
        %v3436 = vrot.slane %v3434, 1
        %v3437 = vsel %vm570, %v3432, %v3436
        %v3438 = vshrl.u32 %v2993, 16
        %v3440 = vor.u32 %v3438, %v3428
        %v3441 = vshll.u32 %v2995, 16
        %v3443 = vrot.slane %v3441, 1
        %v3444 = vsel %vm570, %v3440, %v3443
        %v3445 = vshrl.u32 %v2994, 16
        %v3447 = vor.u32 %v3445, %v3436
        %v3448 = vsel %vm570, %v3447, %v701
        %v3449 = vshrl.u32 %v2995, 16
        %v3451 = vor.u32 %v3449, %v3443
        %v3452 = vsel %vm570, %v3451, %v701
        %v3482 = vunpack.c.l.b16 %v3312
        %v3483 = vunpack.c.h.b16 %v3312
        %v3484 = vunpack.c.l.b16 %v3313
        %v3485 = vunpack.c.h.b16 %v3313
        %v3486 = vunpack.c.l.b16 %v3314
        %v3487 = vunpack.c.h.b16 %v3314
        %v3488 = vunpack.c.l.b16 %v3315
        %v3489 = vunpack.c.h.b16 %v3315
        %v3490 = vunpack.c.l.b16 %v3316
        %v3491 = vunpack.c.h.b16 %v3316
        %v3492 = vunpack.c.l.b16 %v3317
        %v3493 = vunpack.c.h.b16 %v3317
        %v3494 = vunpack.c.l.b16 %v3318
        %v3495 = vunpack.c.h.b16 %v3318
        %v3496 = vunpack.c.l.b16 %v3319
        %v3497 = vunpack.c.h.b16 %v3319
        %v3498 = vunpack.c.l.b16 %v3320
        %v3499 = vunpack.c.h.b16 %v3320
        %v3500 = vunpack.c.l.b16 %v3321
        %v3501 = vunpack.c.h.b16 %v3321
        %v3502 = vunpack.c.l.b16 %v3322
        %v3503 = vunpack.c.h.b16 %v3322
        %v3504 = vunpack.c.l.b16 %v3323
        %v3505 = vunpack.c.h.b16 %v3323
        %v3506 = vunpack.c.l.b16 %v3324
        %v3507 = vunpack.c.h.b16 %v3324
        %v3508 = vunpack.c.l.b16 %v3325
        %v3509 = vunpack.c.h.b16 %v3325
        %v3510 = vunpack.c.l.b16 %v3326
        %v3511 = vunpack.c.h.b16 %v3326
        %v3512 = vunpack.c.l.b16 %v3327
        %v3513 = vunpack.c.h.b16 %v3327
        %v3514 = vunpack.c.l.b16 %v3328
        %v3515 = vunpack.c.h.b16 %v3328
        %v3516 = vunpack.c.l.b16 %v3329
        %v3517 = vunpack.c.h.b16 %v3329
        %v3518 = vunpack.c.l.b16 %v3330
        %v3519 = vunpack.c.h.b16 %v3330
        %v3520 = vunpack.c.l.b16 %v3331
        %v3521 = vunpack.c.h.b16 %v3331
        %v3522 = vunpack.c.l.b16 %v3332
        %v3523 = vunpack.c.h.b16 %v3332
        %v3524 = vpack.c.b16 %v3484, %v3482
        %v3525 = vpack.c.b16 %v3485, %v3483
        %v3526 = vpack.c.b16 %v3488, %v3486
        %v3527 = vpack.c.b16 %v3489, %v3487
        %v3528 = vpack.c.b16 %v3492, %v3490
        %v3529 = vpack.c.b16 %v3493, %v3491
        %v3530 = vpack.c.b16 %v3496, %v3494
        %v3531 = vpack.c.b16 %v3497, %v3495
        %v3532 = vpack.c.b16 %v3500, %v3498
        %v3533 = vpack.c.b16 %v3501, %v3499
        %v3534 = vpack.c.b16 %v3504, %v3502
        %v3535 = vpack.c.b16 %v3505, %v3503
        %v3536 = vpack.c.b16 %v3508, %v3506
        %v3537 = vpack.c.b16 %v3509, %v3507
        %v3538 = vpack.c.b16 %v3512, %v3510
        %v3539 = vpack.c.b16 %v3513, %v3511
        %v3540 = vpack.c.b16 %v3516, %v3514
        %v3541 = vpack.c.b16 %v3517, %v3515
        %v3542 = vpack.c.b16 %v3520, %v3518
        %v3543 = vpack.c.b16 %v3521, %v3519
        %v3544 = vpack.c.b16 %v3522, %v3522
        %v3545 = vpack.c.b16 %v3523, %v3523
        %v3567 = vsel %vm3134, %v3354, 0
        %v3570 = vsel %vm3134, %v3369, 0
        %v3573 = vsel %vm3134, %v3384, 0
        %v3576 = vsel %vm3134, %v3399, 0
        %v3579 = vsel %vm3134, %v3414, 0
        %v3582 = vsel %vm3134, %v3429, 0
        %v3585 = vsel %vm3134, %v3444, 0
        %v3588 = vsel %vm3134, %v3452, 0
        %v3591 = vsel %vm3159, %v3544, 0
        %v3594 = vsel %vm3159, %v3545, 0
        %3596 = vmatprep.subr.bf16.mxu0 %v3525
        %3597 = vmatpush1.bf16.msra.mxu0 %v3524
        %3598 = vmatprep.subr.bf16.mxu0 %v3527
        %3599 = vmatpush1.bf16.msra.mxu0 %v3526
        %3600 = vmatprep.subr.bf16.mxu0 %v3529
        %3601 = vmatpush1.bf16.msra.mxu0 %v3528
        %3602 = vmatprep.subr.bf16.mxu0 %v3531
        %3603 = vmatpush1.bf16.msra.mxu0 %v3530
        %3604 = vmatprep.subr.bf16.mxu0 %v3533
        %3605 = vmatpush1.bf16.msra.mxu0 %v3532
        %3606 = vmatprep.subr.bf16.mxu0 %v3535
        %3607 = vmatpush1.bf16.msra.mxu0 %v3534
        %3608 = vmatprep.subr.bf16.mxu0 %v3537
        %3609 = vmatpush1.bf16.msra.mxu0 %v3536
        %3610 = vmatprep.subr.bf16.mxu0 %v3539
        %3611 = vmatpush1.bf16.msra.mxu0 %v3538
        %3612 = vmatprep.subr.bf16.mxu0 %v3541
        %3613 = vmatpush1.bf16.msra.mxu0 %v3540
        %3614 = vmatprep.subr.bf16.mxu0 %v3543
        %3615 = vmatpush1.bf16.msra.mxu0 %v3542
        %3616 = vmatprep.subr.bf16.mxu0 %v3594
        %3617 = vmatpush1.bf16.msra.mxu0 %v3591
        %3618 = vmatprep.subr.bf16.mxu0 0
        %3619 = vmatpush1.bf16.msra.mxu0 0
        %3620 = vmatprep.subr.bf16.mxu0 0
        %3621 = vmatpush1.bf16.msra.mxu0 0
        %3622 = vmatprep.subr.bf16.mxu0 0
        %3623 = vmatpush1.bf16.msra.mxu0 0
        %3624 = vmatprep.subr.bf16.mxu0 0
        %3625 = vmatpush1.bf16.msra.mxu0 0
        %3626 = vmatprep.subr.bf16.mxu0 0
        %3627 = vmatpush1.bf16.msra.mxu0 0
        %3628 = vmatprep.mubr.bf16.mxu0 %v3567
        %3629 = vmatmul.mubr.bf16.gmra.mrb[0].mxu0 %v3344
        %v3630 = vpop.f32.mrb[0].mxu0
        %v3631 = vadd.f32 0.0, %v3630
        %v3632 = vpop.f32.mrb[0].mxu0
        %v3633 = vadd.f32 0.0, %v3632
        %v3634 = vpop.f32.mrb[0].mxu0
        %v3635 = vadd.f32 0.0, %v3634
        %v3636 = vpop.f32.mrb[0].mxu0
        %v3637 = vadd.f32 0.0, %v3636
        %3638 = vmatprep.mubr.bf16.mxu0 %v3570
        %3639 = vmatmul.mubr.bf16.gmra.mrb[0].mxu0 %v3362
        %v3640 = vpop.f32.mrb[0].mxu0
        %v3641 = vadd.f32 0.0, %v3640
        %v3642 = vpop.f32.mrb[0].mxu0
        %v3643 = vadd.f32 0.0, %v3642
        %v3644 = vpop.f32.mrb[0].mxu0
        %v3645 = vadd.f32 0.0, %v3644
        %v3646 = vpop.f32.mrb[0].mxu0
        %v3647 = vadd.f32 0.0, %v3646
        %3648 = vmatprep.mubr.bf16.mxu0 %v3573
        %3649 = vmatmul.mubr.bf16.gmra.mrb[0].mxu0 %v3377
        %v3650 = vpop.f32.mrb[0].mxu0
        %v3651 = vadd.f32 0.0, %v3650
        %v3652 = vpop.f32.mrb[0].mxu0
        %v3653 = vadd.f32 0.0, %v3652
        %v3654 = vpop.f32.mrb[0].mxu0
        %v3655 = vadd.f32 0.0, %v3654
        %v3656 = vpop.f32.mrb[0].mxu0
        %v3657 = vadd.f32 0.0, %v3656
        %3658 = vmatprep.mubr.bf16.mxu0 %v3576
        %3659 = vmatmul.mubr.bf16.gmra.mrb[0].mxu0 %v3392
        %v3660 = vpop.f32.mrb[0].mxu0
        %v3661 = vadd.f32 0.0, %v3660
        %v3662 = vpop.f32.mrb[0].mxu0
        %v3663 = vadd.f32 0.0, %v3662
        %v3664 = vpop.f32.mrb[0].mxu0
        %v3665 = vadd.f32 0.0, %v3664
        %v3666 = vpop.f32.mrb[0].mxu0
        %v3667 = vadd.f32 0.0, %v3666
        %3668 = vmatprep.mubr.bf16.mxu0 %v3579
        %3669 = vmatmul.mubr.bf16.gmra.mrb[0].mxu0 %v3407
        %v3670 = vpop.f32.mrb[0].mxu0
        %v3671 = vadd.f32 0.0, %v3670
        %v3672 = vpop.f32.mrb[0].mxu0
        %v3673 = vadd.f32 0.0, %v3672
        %v3674 = vpop.f32.mrb[0].mxu0
        %v3675 = vadd.f32 0.0, %v3674
        %v3676 = vpop.f32.mrb[0].mxu0
        %v3677 = vadd.f32 0.0, %v3676
        %3678 = vmatprep.mubr.bf16.mxu0 %v3582
        %3679 = vmatmul.mubr.bf16.gmra.mrb[0].mxu0 %v3422
        %v3680 = vpop.f32.mrb[0].mxu0
        %v3681 = vadd.f32 0.0, %v3680
        %v3682 = vpop.f32.mrb[0].mxu0
        %v3683 = vadd.f32 0.0, %v3682
        %v3684 = vpop.f32.mrb[0].mxu0
        %v3685 = vadd.f32 0.0, %v3684
        %v3686 = vpop.f32.mrb[0].mxu0
        %v3687 = vadd.f32 0.0, %v3686
        %3688 = vmatprep.mubr.bf16.mxu0 %v3585
        %3689 = vmatmul.mubr.bf16.gmra.mrb[0].mxu0 %v3437
        %v3690 = vpop.f32.mrb[0].mxu0
        %v3691 = vadd.f32 0.0, %v3690
        %v3692 = vpop.f32.mrb[0].mxu0
        %v3693 = vadd.f32 0.0, %v3692
        %v3694 = vpop.f32.mrb[0].mxu0
        %v3695 = vadd.f32 0.0, %v3694
        %v3696 = vpop.f32.mrb[0].mxu0
        %v3697 = vadd.f32 0.0, %v3696
        %3698 = vmatprep.mubr.bf16.mxu0 %v3588
        %3699 = vmatmul.mubr.bf16.gmra.mrb[0].mxu0 %v3448
        %v3700 = vpop.f32.mrb[0].mxu0
        %v3701 = vadd.f32 0.0, %v3700
        %v3702 = vpop.f32.mrb[0].mxu0
        %v3703 = vadd.f32 0.0, %v3702
        %v3704 = vpop.f32.mrb[0].mxu0
        %v3705 = vadd.f32 0.0, %v3704
        %v3706 = vpop.f32.mrb[0].mxu0
        %v3707 = vadd.f32 0.0, %v3706
        %3708 = vdwg.mxu0
        %v3709 = vadd.f32 %v3279, %v3631
        %v3710 = vadd.f32 %v3280, %v3633
        %v3711 = vadd.f32 %v3281, %v3635
        %v3712 = vadd.f32 %v3282, %v3637
        %v3713 = vadd.f32 %v3283, %v3641
        %v3714 = vadd.f32 %v3284, %v3643
        %v3715 = vadd.f32 %v3285, %v3645
        %v3716 = vadd.f32 %v3286, %v3647
        %v3717 = vadd.f32 %v3287, %v3651
        %v3718 = vadd.f32 %v3288, %v3653
        %v3719 = vadd.f32 %v3289, %v3655
        %v3720 = vadd.f32 %v3290, %v3657
        %v3721 = vadd.f32 %v3291, %v3661
        %v3722 = vadd.f32 %v3292, %v3663
        %v3723 = vadd.f32 %v3293, %v3665
        %v3724 = vadd.f32 %v3294, %v3667
        %v3725 = vadd.f32 %v3295, %v3671
        %v3726 = vadd.f32 %v3296, %v3673
        %v3727 = vadd.f32 %v3297, %v3675
        %v3728 = vadd.f32 %v3298, %v3677
        %v3729 = vadd.f32 %v3299, %v3681
        %v3730 = vadd.f32 %v3300, %v3683
        %v3731 = vadd.f32 %v3301, %v3685
        %v3732 = vadd.f32 %v3302, %v3687
        %v3733 = vadd.f32 %v3303, %v3691
        %v3734 = vadd.f32 %v3304, %v3693
        %v3735 = vadd.f32 %v3305, %v3695
        %v3736 = vadd.f32 %v3306, %v3697
        %v3737 = vadd.f32 %v3307, %v3701
        %v3738 = vadd.f32 %v3308, %v3703
        %v3739 = vadd.f32 %v3309, %v3705
        %v3740 = vadd.f32 %v3310, %v3707
        %s3741 = scalar_lea.vmem %s4, 336
        %v3742 = vld [vmem:[%s3741] sm:$0xff]
        %v3743 = vld [vmem:[%s3741 + $0x8] sm:$0xff]
        %v3744 = vld [vmem:[%s3741 + $0x10] sm:$0xff]
        %v3745 = vld [vmem:[%s3741 + $0x18] sm:$0xff]
        %v3746 = vld [vmem:[%s3741 + $0x20] sm:$0xff]
        %v3747 = vld [vmem:[%s3741 + $0x28] sm:$0xff]
        %v3748 = vld [vmem:[%s3741 + $0x30] sm:$0xff]
        %v3749 = vld [vmem:[%s3741 + $0x38] sm:$0xff]
        %v3750 = vld [vmem:[%s3741 + $0x40] sm:$0xff]
        %v3751 = vld [vmem:[%s3741 + $0x48] sm:$0xff]
        %v3752 = vld [vmem:[%s3741 + $0x50] sm:$0xff]
        %v3753 = vld [vmem:[%s3741 + $0x58] sm:$0xff]
        %v3754 = vld [vmem:[%s3741 + $0x60] sm:$0xff]
        %v3755 = vld [vmem:[%s3741 + $0x68] sm:$0xff]
        %v3756 = vld [vmem:[%s3741 + $0x70] sm:$0xff]
        %v3757 = vld [vmem:[%s3741 + $0x78] sm:$0xff]
        %v3758 = vld [vmem:[%s3741 + $0x80] sm:$0xff]
        %v3759 = vld [vmem:[%s3741 + $0x88] sm:$0xff]
        %v3760 = vld [vmem:[%s3741 + $0x90] sm:$0xff]
        %v3761 = vld [vmem:[%s3741 + $0x98] sm:$0xff]
        %v3762 = vld [vmem:[%s3741 + $0xa0] sm:$0x11]
        %v3779 = vrot.slane %v2980, 1
        %v3780 = vrot.slane %v2982, 1
        %v3781 = vsel %vm720, %v3779, %v3780
        %v3782 = vrot.slane %v2981, 1
        %v3783 = vrot.slane %v2983, 1
        %v3784 = vsel %vm720, %v3782, %v3783
        %v3785 = vrot.slane %v2984, 1
        %v3786 = vsel %vm720, %v3780, %v3785
        %v3787 = vrot.slane %v2985, 1
        %v3788 = vsel %vm720, %v3783, %v3787
        %v3789 = vrot.slane %v2986, 1
        %v3790 = vsel %vm720, %v3785, %v3789
        %v3791 = vrot.slane %v2987, 1
        %v3792 = vsel %vm720, %v3787, %v3791
        %v3793 = vrot.slane %v2988, 1
        %v3794 = vsel %vm720, %v3789, %v3793
        %v3795 = vrot.slane %v2989, 1
        %v3796 = vsel %vm720, %v3791, %v3795
        %v3797 = vrot.slane %v2990, 1
        %v3798 = vsel %vm720, %v3793, %v3797
        %v3799 = vrot.slane %v2991, 1
        %v3800 = vsel %vm720, %v3795, %v3799
        %v3801 = vrot.slane %v2992, 1
        %v3802 = vsel %vm720, %v3797, %v3801
        %v3803 = vrot.slane %v2993, 1
        %v3804 = vsel %vm720, %v3799, %v3803
        %v3805 = vrot.slane %v2994, 1
        %v3806 = vsel %vm720, %v3801, %v3805
        %v3807 = vrot.slane %v2995, 1
        %v3808 = vsel %vm720, %v3803, %v3807
        %v3809 = vsel %vm720, %v3805, %v752
        %v3810 = vsel %vm720, %v3807, %v752
        %v3840 = vunpack.c.l.b16 %v3742
        %v3841 = vunpack.c.h.b16 %v3742
        %v3842 = vunpack.c.l.b16 %v3743
        %v3843 = vunpack.c.h.b16 %v3743
        %v3844 = vunpack.c.l.b16 %v3744
        %v3845 = vunpack.c.h.b16 %v3744
        %v3846 = vunpack.c.l.b16 %v3745
        %v3847 = vunpack.c.h.b16 %v3745
        %v3848 = vunpack.c.l.b16 %v3746
        %v3849 = vunpack.c.h.b16 %v3746
        %v3850 = vunpack.c.l.b16 %v3747
        %v3851 = vunpack.c.h.b16 %v3747
        %v3852 = vunpack.c.l.b16 %v3748
        %v3853 = vunpack.c.h.b16 %v3748
        %v3854 = vunpack.c.l.b16 %v3749
        %v3855 = vunpack.c.h.b16 %v3749
        %v3856 = vunpack.c.l.b16 %v3750
        %v3857 = vunpack.c.h.b16 %v3750
        %v3858 = vunpack.c.l.b16 %v3751
        %v3859 = vunpack.c.h.b16 %v3751
        %v3860 = vunpack.c.l.b16 %v3752
        %v3861 = vunpack.c.h.b16 %v3752
        %v3862 = vunpack.c.l.b16 %v3753
        %v3863 = vunpack.c.h.b16 %v3753
        %v3864 = vunpack.c.l.b16 %v3754
        %v3865 = vunpack.c.h.b16 %v3754
        %v3866 = vunpack.c.l.b16 %v3755
        %v3867 = vunpack.c.h.b16 %v3755
        %v3868 = vunpack.c.l.b16 %v3756
        %v3869 = vunpack.c.h.b16 %v3756
        %v3870 = vunpack.c.l.b16 %v3757
        %v3871 = vunpack.c.h.b16 %v3757
        %v3872 = vunpack.c.l.b16 %v3758
        %v3873 = vunpack.c.h.b16 %v3758
        %v3874 = vunpack.c.l.b16 %v3759
        %v3875 = vunpack.c.h.b16 %v3759
        %v3876 = vunpack.c.l.b16 %v3760
        %v3877 = vunpack.c.h.b16 %v3760
        %v3878 = vunpack.c.l.b16 %v3761
        %v3879 = vunpack.c.h.b16 %v3761
        %v3880 = vunpack.c.l.b16 %v3762
        %v3881 = vunpack.c.h.b16 %v3762
        %v3882 = vpack.c.b16 %v3842, %v3840
        %v3883 = vpack.c.b16 %v3843, %v3841
        %v3884 = vpack.c.b16 %v3846, %v3844
        %v3885 = vpack.c.b16 %v3847, %v3845
        %v3886 = vpack.c.b16 %v3850, %v3848
        %v3887 = vpack.c.b16 %v3851, %v3849
        %v3888 = vpack.c.b16 %v3854, %v3852
        %v3889 = vpack.c.b16 %v3855, %v3853
        %v3890 = vpack.c.b16 %v3858, %v3856
        %v3891 = vpack.c.b16 %v3859, %v3857
        %v3892 = vpack.c.b16 %v3862, %v3860
        %v3893 = vpack.c.b16 %v3863, %v3861
        %v3894 = vpack.c.b16 %v3866, %v3864
        %v3895 = vpack.c.b16 %v3867, %v3865
        %v3896 = vpack.c.b16 %v3870, %v3868
        %v3897 = vpack.c.b16 %v3871, %v3869
        %v3898 = vpack.c.b16 %v3874, %v3872
        %v3899 = vpack.c.b16 %v3875, %v3873
        %v3900 = vpack.c.b16 %v3878, %v3876
        %v3901 = vpack.c.b16 %v3879, %v3877
        %v3902 = vpack.c.b16 %v3880, %v3880
        %v3903 = vpack.c.b16 %v3881, %v3881
        %v3925 = vsel %vm3134, %v3784, 0
        %v3928 = vsel %vm3134, %v3788, 0
        %v3931 = vsel %vm3134, %v3792, 0
        %v3934 = vsel %vm3134, %v3796, 0
        %v3937 = vsel %vm3134, %v3800, 0
        %v3940 = vsel %vm3134, %v3804, 0
        %v3943 = vsel %vm3134, %v3808, 0
        %v3946 = vsel %vm3134, %v3810, 0
        %v3949 = vsel %vm3159, %v3902, 0
        %v3952 = vsel %vm3159, %v3903, 0
        %3954 = vmatprep.subr.bf16.mxu0 %v3883
        %3955 = vmatpush1.bf16.msra.mxu0 %v3882
        %3956 = vmatprep.subr.bf16.mxu0 %v3885
        %3957 = vmatpush1.bf16.msra.mxu0 %v3884
        %3958 = vmatprep.subr.bf16.mxu0 %v3887
        %3959 = vmatpush1.bf16.msra.mxu0 %v3886
        %3960 = vmatprep.subr.bf16.mxu0 %v3889
        %3961 = vmatpush1.bf16.msra.mxu0 %v3888
        %3962 = vmatprep.subr.bf16.mxu0 %v3891
        %3963 = vmatpush1.bf16.msra.mxu0 %v3890
        %3964 = vmatprep.subr.bf16.mxu0 %v3893
        %3965 = vmatpush1.bf16.msra.mxu0 %v3892
        %3966 = vmatprep.subr.bf16.mxu0 %v3895
        %3967 = vmatpush1.bf16.msra.mxu0 %v3894
        %3968 = vmatprep.subr.bf16.mxu0 %v3897
        %3969 = vmatpush1.bf16.msra.mxu0 %v3896
        %3970 = vmatprep.subr.bf16.mxu0 %v3899
        %3971 = vmatpush1.bf16.msra.mxu0 %v3898
        %3972 = vmatprep.subr.bf16.mxu0 %v3901
        %3973 = vmatpush1.bf16.msra.mxu0 %v3900
        %3974 = vmatprep.subr.bf16.mxu0 %v3952
        %3975 = vmatpush1.bf16.msra.mxu0 %v3949
        %3976 = vmatprep.subr.bf16.mxu0 0
        %3977 = vmatpush1.bf16.msra.mxu0 0
        %3978 = vmatprep.subr.bf16.mxu0 0
        %3979 = vmatpush1.bf16.msra.mxu0 0
        %3980 = vmatprep.subr.bf16.mxu0 0
        %3981 = vmatpush1.bf16.msra.mxu0 0
        %3982 = vmatprep.subr.bf16.mxu0 0
        %3983 = vmatpush1.bf16.msra.mxu0 0
        %3984 = vmatprep.subr.bf16.mxu0 0
        %3985 = vmatpush1.bf16.msra.mxu0 0
        %3986 = vmatprep.mubr.bf16.mxu0 %v3925
        %3987 = vmatmul.mubr.bf16.gmra.mrb[0].mxu0 %v3781
        %v3988 = vpop.f32.mrb[0].mxu0
        %v3989 = vadd.f32 0.0, %v3988
        %v3990 = vpop.f32.mrb[0].mxu0
        %v3991 = vadd.f32 0.0, %v3990
        %v3992 = vpop.f32.mrb[0].mxu0
        %v3993 = vadd.f32 0.0, %v3992
        %v3994 = vpop.f32.mrb[0].mxu0
        %v3995 = vadd.f32 0.0, %v3994
        %3996 = vmatprep.mubr.bf16.mxu0 %v3928
        %3997 = vmatmul.mubr.bf16.gmra.mrb[0].mxu0 %v3786
        %v3998 = vpop.f32.mrb[0].mxu0
        %v3999 = vadd.f32 0.0, %v3998
        %v4000 = vpop.f32.mrb[0].mxu0
        %v4001 = vadd.f32 0.0, %v4000
        %v4002 = vpop.f32.mrb[0].mxu0
        %v4003 = vadd.f32 0.0, %v4002
        %v4004 = vpop.f32.mrb[0].mxu0
        %v4005 = vadd.f32 0.0, %v4004
        %4006 = vmatprep.mubr.bf16.mxu0 %v3931
        %4007 = vmatmul.mubr.bf16.gmra.mrb[0].mxu0 %v3790
        %v4008 = vpop.f32.mrb[0].mxu0
        %v4009 = vadd.f32 0.0, %v4008
        %v4010 = vpop.f32.mrb[0].mxu0
        %v4011 = vadd.f32 0.0, %v4010
        %v4012 = vpop.f32.mrb[0].mxu0
        %v4013 = vadd.f32 0.0, %v4012
        %v4014 = vpop.f32.mrb[0].mxu0
        %v4015 = vadd.f32 0.0, %v4014
        %4016 = vmatprep.mubr.bf16.mxu0 %v3934
        %4017 = vmatmul.mubr.bf16.gmra.mrb[0].mxu0 %v3794
        %v4018 = vpop.f32.mrb[0].mxu0
        %v4019 = vadd.f32 0.0, %v4018
        %v4020 = vpop.f32.mrb[0].mxu0
        %v4021 = vadd.f32 0.0, %v4020
        %v4022 = vpop.f32.mrb[0].mxu0
        %v4023 = vadd.f32 0.0, %v4022
        %v4024 = vpop.f32.mrb[0].mxu0
        %v4025 = vadd.f32 0.0, %v4024
        %4026 = vmatprep.mubr.bf16.mxu0 %v3937
        %4027 = vmatmul.mubr.bf16.gmra.mrb[0].mxu0 %v3798
        %v4028 = vpop.f32.mrb[0].mxu0
        %v4029 = vadd.f32 0.0, %v4028
        %v4030 = vpop.f32.mrb[0].mxu0
        %v4031 = vadd.f32 0.0, %v4030
        %v4032 = vpop.f32.mrb[0].mxu0
        %v4033 = vadd.f32 0.0, %v4032
        %v4034 = vpop.f32.mrb[0].mxu0
        %v4035 = vadd.f32 0.0, %v4034
        %4036 = vmatprep.mubr.bf16.mxu0 %v3940
        %4037 = vmatmul.mubr.bf16.gmra.mrb[0].mxu0 %v3802
        %v4038 = vpop.f32.mrb[0].mxu0
        %v4039 = vadd.f32 0.0, %v4038
        %v4040 = vpop.f32.mrb[0].mxu0
        %v4041 = vadd.f32 0.0, %v4040
        %v4042 = vpop.f32.mrb[0].mxu0
        %v4043 = vadd.f32 0.0, %v4042
        %v4044 = vpop.f32.mrb[0].mxu0
        %v4045 = vadd.f32 0.0, %v4044
        %4046 = vmatprep.mubr.bf16.mxu0 %v3943
        %4047 = vmatmul.mubr.bf16.gmra.mrb[0].mxu0 %v3806
        %v4048 = vpop.f32.mrb[0].mxu0
        %v4049 = vadd.f32 0.0, %v4048
        %v4050 = vpop.f32.mrb[0].mxu0
        %v4051 = vadd.f32 0.0, %v4050
        %v4052 = vpop.f32.mrb[0].mxu0
        %v4053 = vadd.f32 0.0, %v4052
        %v4054 = vpop.f32.mrb[0].mxu0
        %v4055 = vadd.f32 0.0, %v4054
        %4056 = vmatprep.mubr.bf16.mxu0 %v3946
        %4057 = vmatmul.mubr.bf16.gmra.mrb[0].mxu0 %v3809
        %v4058 = vpop.f32.mrb[0].mxu0
        %v4059 = vadd.f32 0.0, %v4058
        %v4060 = vpop.f32.mrb[0].mxu0
        %v4061 = vadd.f32 0.0, %v4060
        %v4062 = vpop.f32.mrb[0].mxu0
        %v4063 = vadd.f32 0.0, %v4062
        %v4064 = vpop.f32.mrb[0].mxu0
        %v4065 = vadd.f32 0.0, %v4064
        %4066 = vdwg.mxu0
        %v4067 = vadd.f32 %v3709, %v3989
        %v4068 = vadd.f32 %v3710, %v3991
        %v4069 = vadd.f32 %v3711, %v3993
        %v4070 = vadd.f32 %v3712, %v3995
        %v4071 = vadd.f32 %v3713, %v3999
        %v4072 = vadd.f32 %v3714, %v4001
        %v4073 = vadd.f32 %v3715, %v4003
        %v4074 = vadd.f32 %v3716, %v4005
        %v4075 = vadd.f32 %v3717, %v4009
        %v4076 = vadd.f32 %v3718, %v4011
        %v4077 = vadd.f32 %v3719, %v4013
        %v4078 = vadd.f32 %v3720, %v4015
        %v4079 = vadd.f32 %v3721, %v4019
        %v4080 = vadd.f32 %v3722, %v4021
        %v4081 = vadd.f32 %v3723, %v4023
        %v4082 = vadd.f32 %v3724, %v4025
        %v4083 = vadd.f32 %v3725, %v4029
        %v4084 = vadd.f32 %v3726, %v4031
        %v4085 = vadd.f32 %v3727, %v4033
        %v4086 = vadd.f32 %v3728, %v4035
        %v4087 = vadd.f32 %v3729, %v4039
        %v4088 = vadd.f32 %v3730, %v4041
        %v4089 = vadd.f32 %v3731, %v4043
        %v4090 = vadd.f32 %v3732, %v4045
        %v4091 = vadd.f32 %v3733, %v4049
        %v4092 = vadd.f32 %v3734, %v4051
        %v4093 = vadd.f32 %v3735, %v4053
        %v4094 = vadd.f32 %v3736, %v4055
        %v4095 = vadd.f32 %v3737, %v4059
        %v4096 = vadd.f32 %v3738, %v4061
        %v4097 = vadd.f32 %v3739, %v4063
        %v4098 = vadd.f32 %v3740, %v4065
        %s4099 = scalar_lea.vmem %s4, 504
        %v4100 = vld [vmem:[%s4099] sm:$0xff]
        %v4101 = vld [vmem:[%s4099 + $0x8] sm:$0xff]
        %v4102 = vld [vmem:[%s4099 + $0x10] sm:$0xff]
        %v4103 = vld [vmem:[%s4099 + $0x18] sm:$0xff]
        %v4104 = vld [vmem:[%s4099 + $0x20] sm:$0xff]
        %v4105 = vld [vmem:[%s4099 + $0x28] sm:$0xff]
        %v4106 = vld [vmem:[%s4099 + $0x30] sm:$0xff]
        %v4107 = vld [vmem:[%s4099 + $0x38] sm:$0xff]
        %v4108 = vld [vmem:[%s4099 + $0x40] sm:$0xff]
        %v4109 = vld [vmem:[%s4099 + $0x48] sm:$0xff]
        %v4110 = vld [vmem:[%s4099 + $0x50] sm:$0xff]
        %v4111 = vld [vmem:[%s4099 + $0x58] sm:$0xff]
        %v4112 = vld [vmem:[%s4099 + $0x60] sm:$0xff]
        %v4113 = vld [vmem:[%s4099 + $0x68] sm:$0xff]
        %v4114 = vld [vmem:[%s4099 + $0x70] sm:$0xff]
        %v4115 = vld [vmem:[%s4099 + $0x78] sm:$0xff]
        %v4116 = vld [vmem:[%s4099 + $0x80] sm:$0xff]
        %v4117 = vld [vmem:[%s4099 + $0x88] sm:$0xff]
        %v4118 = vld [vmem:[%s4099 + $0x90] sm:$0xff]
        %v4119 = vld [vmem:[%s4099 + $0x98] sm:$0xff]
        %v4120 = vld [vmem:[%s4099 + $0xa0] sm:$0x11]
        %v4121 = vrot.slane %v3334, 1
        %v4122 = vrot.slane %v3336, 2
        %v4123 = vor.u32 %v4121, %v4122
        %v4124 = vrot.slane %v3355, 1
        %v4125 = vrot.slane %v3341, 2
        %v4126 = vor.u32 %v4124, %v4125
        %v4127 = vsel %vm770, %v4123, %v4126
        %v4128 = vrot.slane %v3345, 1
        %v4129 = vrot.slane %v3347, 2
        %v4130 = vor.u32 %v4128, %v4129
        %v4131 = vrot.slane %v3363, 1
        %v4132 = vrot.slane %v3351, 2
        %v4133 = vor.u32 %v4131, %v4132
        %v4134 = vsel %vm770, %v4130, %v4133
        %v4135 = vrot.slane %v3370, 1
        %v4136 = vrot.slane %v3359, 2
        %v4137 = vor.u32 %v4135, %v4136
        %v4138 = vsel %vm770, %v4126, %v4137
        %v4139 = vrot.slane %v3378, 1
        %v4140 = vrot.slane %v3366, 2
        %v4141 = vor.u32 %v4139, %v4140
        %v4142 = vsel %vm770, %v4133, %v4141
        %v4143 = vrot.slane %v3385, 1
        %v4144 = vrot.slane %v3374, 2
        %v4145 = vor.u32 %v4143, %v4144
        %v4146 = vsel %vm770, %v4137, %v4145
        %v4147 = vrot.slane %v3393, 1
        %v4148 = vrot.slane %v3381, 2
        %v4149 = vor.u32 %v4147, %v4148
        %v4150 = vsel %vm770, %v4141, %v4149
        %v4151 = vrot.slane %v3400, 1
        %v4152 = vrot.slane %v3389, 2
        %v4153 = vor.u32 %v4151, %v4152
        %v4154 = vsel %vm770, %v4145, %v4153
        %v4155 = vrot.slane %v3408, 1
        %v4156 = vrot.slane %v3396, 2
        %v4157 = vor.u32 %v4155, %v4156
        %v4158 = vsel %vm770, %v4149, %v4157
        %v4159 = vrot.slane %v3415, 1
        %v4160 = vrot.slane %v3404, 2
        %v4161 = vor.u32 %v4159, %v4160
        %v4162 = vsel %vm770, %v4153, %v4161
        %v4163 = vrot.slane %v3423, 1
        %v4164 = vrot.slane %v3411, 2
        %v4165 = vor.u32 %v4163, %v4164
        %v4166 = vsel %vm770, %v4157, %v4165
        %v4167 = vrot.slane %v3430, 1
        %v4168 = vrot.slane %v3419, 2
        %v4169 = vor.u32 %v4167, %v4168
        %v4170 = vsel %vm770, %v4161, %v4169
        %v4171 = vrot.slane %v3438, 1
        %v4172 = vrot.slane %v3426, 2
        %v4173 = vor.u32 %v4171, %v4172
        %v4174 = vsel %vm770, %v4165, %v4173
        %v4175 = vrot.slane %v3445, 1
        %v4176 = vrot.slane %v3434, 2
        %v4177 = vor.u32 %v4175, %v4176
        %v4178 = vsel %vm770, %v4169, %v4177
        %v4179 = vrot.slane %v3449, 1
        %v4180 = vrot.slane %v3441, 2
        %v4181 = vor.u32 %v4179, %v4180
        %v4182 = vsel %vm770, %v4173, %v4181
        %v4183 = vsel %vm770, %v4177, %v838
        %v4184 = vsel %vm770, %v4181, %v838
        %v4214 = vunpack.c.l.b16 %v4100
        %v4215 = vunpack.c.h.b16 %v4100
        %v4216 = vunpack.c.l.b16 %v4101
        %v4217 = vunpack.c.h.b16 %v4101
        %v4218 = vunpack.c.l.b16 %v4102
        %v4219 = vunpack.c.h.b16 %v4102
        %v4220 = vunpack.c.l.b16 %v4103
        %v4221 = vunpack.c.h.b16 %v4103
        %v4222 = vunpack.c.l.b16 %v4104
        %v4223 = vunpack.c.h.b16 %v4104
        %v4224 = vunpack.c.l.b16 %v4105
        %v4225 = vunpack.c.h.b16 %v4105
        %v4226 = vunpack.c.l.b16 %v4106
        %v4227 = vunpack.c.h.b16 %v4106
        %v4228 = vunpack.c.l.b16 %v4107
        %v4229 = vunpack.c.h.b16 %v4107
        %v4230 = vunpack.c.l.b16 %v4108
        %v4231 = vunpack.c.h.b16 %v4108
        %v4232 = vunpack.c.l.b16 %v4109
        %v4233 = vunpack.c.h.b16 %v4109
        %v4234 = vunpack.c.l.b16 %v4110
        %v4235 = vunpack.c.h.b16 %v4110
        %v4236 = vunpack.c.l.b16 %v4111
        %v4237 = vunpack.c.h.b16 %v4111
        %v4238 = vunpack.c.l.b16 %v4112
        %v4239 = vunpack.c.h.b16 %v4112
        %v4240 = vunpack.c.l.b16 %v4113
        %v4241 = vunpack.c.h.b16 %v4113
        %v4242 = vunpack.c.l.b16 %v4114
        %v4243 = vunpack.c.h.b16 %v4114
        %v4244 = vunpack.c.l.b16 %v4115
        %v4245 = vunpack.c.h.b16 %v4115
        %v4246 = vunpack.c.l.b16 %v4116
        %v4247 = vunpack.c.h.b16 %v4116
        %v4248 = vunpack.c.l.b16 %v4117
        %v4249 = vunpack.c.h.b16 %v4117
        %v4250 = vunpack.c.l.b16 %v4118
        %v4251 = vunpack.c.h.b16 %v4118
        %v4252 = vunpack.c.l.b16 %v4119
        %v4253 = vunpack.c.h.b16 %v4119
        %v4254 = vunpack.c.l.b16 %v4120
        %v4255 = vunpack.c.h.b16 %v4120
        %v4256 = vpack.c.b16 %v4216, %v4214
        %v4257 = vpack.c.b16 %v4217, %v4215
        %v4258 = vpack.c.b16 %v4220, %v4218
        %v4259 = vpack.c.b16 %v4221, %v4219
        %v4260 = vpack.c.b16 %v4224, %v4222
        %v4261 = vpack.c.b16 %v4225, %v4223
        %v4262 = vpack.c.b16 %v4228, %v4226
        %v4263 = vpack.c.b16 %v4229, %v4227
        %v4264 = vpack.c.b16 %v4232, %v4230
        %v4265 = vpack.c.b16 %v4233, %v4231
        %v4266 = vpack.c.b16 %v4236, %v4234
        %v4267 = vpack.c.b16 %v4237, %v4235
        %v4268 = vpack.c.b16 %v4240, %v4238
        %v4269 = vpack.c.b16 %v4241, %v4239
        %v4270 = vpack.c.b16 %v4244, %v4242
        %v4271 = vpack.c.b16 %v4245, %v4243
        %v4272 = vpack.c.b16 %v4248, %v4246
        %v4273 = vpack.c.b16 %v4249, %v4247
        %v4274 = vpack.c.b16 %v4252, %v4250
        %v4275 = vpack.c.b16 %v4253, %v4251
        %v4276 = vpack.c.b16 %v4254, %v4254
        %v4277 = vpack.c.b16 %v4255, %v4255
        %v4299 = vsel %vm3134, %v4134, 0
        %v4302 = vsel %vm3134, %v4142, 0
        %v4305 = vsel %vm3134, %v4150, 0
        %v4308 = vsel %vm3134, %v4158, 0
        %v4311 = vsel %vm3134, %v4166, 0
        %v4314 = vsel %vm3134, %v4174, 0
        %v4317 = vsel %vm3134, %v4182, 0
        %v4320 = vsel %vm3134, %v4184, 0
        %v4323 = vsel %vm3159, %v4276, 0
        %v4326 = vsel %vm3159, %v4277, 0
        %4328 = vmatprep.subr.bf16.mxu0 %v4257
        %4329 = vmatpush1.bf16.msra.mxu0 %v4256
        %4330 = vmatprep.subr.bf16.mxu0 %v4259
        %4331 = vmatpush1.bf16.msra.mxu0 %v4258
        %4332 = vmatprep.subr.bf16.mxu0 %v4261
        %4333 = vmatpush1.bf16.msra.mxu0 %v4260
        %4334 = vmatprep.subr.bf16.mxu0 %v4263
        %4335 = vmatpush1.bf16.msra.mxu0 %v4262
        %4336 = vmatprep.subr.bf16.mxu0 %v4265
        %4337 = vmatpush1.bf16.msra.mxu0 %v4264
        %4338 = vmatprep.subr.bf16.mxu0 %v4267
        %4339 = vmatpush1.bf16.msra.mxu0 %v4266
        %4340 = vmatprep.subr.bf16.mxu0 %v4269
        %4341 = vmatpush1.bf16.msra.mxu0 %v4268
        %4342 = vmatprep.subr.bf16.mxu0 %v4271
        %4343 = vmatpush1.bf16.msra.mxu0 %v4270
        %4344 = vmatprep.subr.bf16.mxu0 %v4273
        %4345 = vmatpush1.bf16.msra.mxu0 %v4272
        %4346 = vmatprep.subr.bf16.mxu0 %v4275
        %4347 = vmatpush1.bf16.msra.mxu0 %v4274
        %4348 = vmatprep.subr.bf16.mxu0 %v4326
        %4349 = vmatpush1.bf16.msra.mxu0 %v4323
        %4350 = vmatprep.subr.bf16.mxu0 0
        %4351 = vmatpush1.bf16.msra.mxu0 0
        %4352 = vmatprep.subr.bf16.mxu0 0
        %4353 = vmatpush1.bf16.msra.mxu0 0
        %4354 = vmatprep.subr.bf16.mxu0 0
        %4355 = vmatpush1.bf16.msra.mxu0 0
        %4356 = vmatprep.subr.bf16.mxu0 0
        %4357 = vmatpush1.bf16.msra.mxu0 0
        %4358 = vmatprep.subr.bf16.mxu0 0
        %4359 = vmatpush1.bf16.msra.mxu0 0
        %4360 = vmatprep.mubr.bf16.mxu0 %v4299
        %4361 = vmatmul.mubr.bf16.gmra.mrb[0].mxu0 %v4127
        %v4362 = vpop.f32.mrb[0].mxu0
        %v4363 = vadd.f32 0.0, %v4362
        %v4364 = vpop.f32.mrb[0].mxu0
        %v4365 = vadd.f32 0.0, %v4364
        %v4366 = vpop.f32.mrb[0].mxu0
        %v4367 = vadd.f32 0.0, %v4366
        %v4368 = vpop.f32.mrb[0].mxu0
        %v4369 = vadd.f32 0.0, %v4368
        %4370 = vmatprep.mubr.bf16.mxu0 %v4302
        %4371 = vmatmul.mubr.bf16.gmra.mrb[0].mxu0 %v4138
        %v4372 = vpop.f32.mrb[0].mxu0
        %v4373 = vadd.f32 0.0, %v4372
        %v4374 = vpop.f32.mrb[0].mxu0
        %v4375 = vadd.f32 0.0, %v4374
        %v4376 = vpop.f32.mrb[0].mxu0
        %v4377 = vadd.f32 0.0, %v4376
        %v4378 = vpop.f32.mrb[0].mxu0
        %v4379 = vadd.f32 0.0, %v4378
        %4380 = vmatprep.mubr.bf16.mxu0 %v4305
        %4381 = vmatmul.mubr.bf16.gmra.mrb[0].mxu0 %v4146
        %v4382 = vpop.f32.mrb[0].mxu0
        %v4383 = vadd.f32 0.0, %v4382
        %v4384 = vpop.f32.mrb[0].mxu0
        %v4385 = vadd.f32 0.0, %v4384
        %v4386 = vpop.f32.mrb[0].mxu0
        %v4387 = vadd.f32 0.0, %v4386
        %v4388 = vpop.f32.mrb[0].mxu0
        %v4389 = vadd.f32 0.0, %v4388
        %4390 = vmatprep.mubr.bf16.mxu0 %v4308
        %4391 = vmatmul.mubr.bf16.gmra.mrb[0].mxu0 %v4154
        %v4392 = vpop.f32.mrb[0].mxu0
        %v4393 = vadd.f32 0.0, %v4392
        %v4394 = vpop.f32.mrb[0].mxu0
        %v4395 = vadd.f32 0.0, %v4394
        %v4396 = vpop.f32.mrb[0].mxu0
        %v4397 = vadd.f32 0.0, %v4396
        %v4398 = vpop.f32.mrb[0].mxu0
        %v4399 = vadd.f32 0.0, %v4398
        %4400 = vmatprep.mubr.bf16.mxu0 %v4311
        %4401 = vmatmul.mubr.bf16.gmra.mrb[0].mxu0 %v4162
        %v4402 = vpop.f32.mrb[0].mxu0
        %v4403 = vadd.f32 0.0, %v4402
        %v4404 = vpop.f32.mrb[0].mxu0
        %v4405 = vadd.f32 0.0, %v4404
        %v4406 = vpop.f32.mrb[0].mxu0
        %v4407 = vadd.f32 0.0, %v4406
        %v4408 = vpop.f32.mrb[0].mxu0
        %v4409 = vadd.f32 0.0, %v4408
        %4410 = vmatprep.mubr.bf16.mxu0 %v4314
        %4411 = vmatmul.mubr.bf16.gmra.mrb[0].mxu0 %v4170
        %v4412 = vpop.f32.mrb[0].mxu0
        %v4413 = vadd.f32 0.0, %v4412
        %v4414 = vpop.f32.mrb[0].mxu0
        %v4415 = vadd.f32 0.0, %v4414
        %v4416 = vpop.f32.mrb[0].mxu0
        %v4417 = vadd.f32 0.0, %v4416
        %v4418 = vpop.f32.mrb[0].mxu0
        %v4419 = vadd.f32 0.0, %v4418
        %4420 = vmatprep.mubr.bf16.mxu0 %v4317
        %4421 = vmatmul.mubr.bf16.gmra.mrb[0].mxu0 %v4178
        %v4422 = vpop.f32.mrb[0].mxu0
        %v4423 = vadd.f32 0.0, %v4422
        %v4424 = vpop.f32.mrb[0].mxu0
        %v4425 = vadd.f32 0.0, %v4424
        %v4426 = vpop.f32.mrb[0].mxu0
        %v4427 = vadd.f32 0.0, %v4426
        %v4428 = vpop.f32.mrb[0].mxu0
        %v4429 = vadd.f32 0.0, %v4428
        %4430 = vmatprep.mubr.bf16.mxu0 %v4320
        %4431 = vmatmul.mubr.bf16.gmra.mrb[0].mxu0 %v4183
        %v4432 = vpop.f32.mrb[0].mxu0
        %v4433 = vadd.f32 0.0, %v4432
        %v4434 = vpop.f32.mrb[0].mxu0
        %v4435 = vadd.f32 0.0, %v4434
        %v4436 = vpop.f32.mrb[0].mxu0
        %v4437 = vadd.f32 0.0, %v4436
        %v4438 = vpop.f32.mrb[0].mxu0
        %v4439 = vadd.f32 0.0, %v4438
        %4440 = vdwg.mxu0
        %v4441 = vadd.f32 %v4067, %v4363
        %v4442 = vadd.f32 %v4068, %v4365
        %v4443 = vadd.f32 %v4069, %v4367
        %v4444 = vadd.f32 %v4070, %v4369
        %v4445 = vadd.f32 %v4071, %v4373
        %v4446 = vadd.f32 %v4072, %v4375
        %v4447 = vadd.f32 %v4073, %v4377
        %v4448 = vadd.f32 %v4074, %v4379
        %v4449 = vadd.f32 %v4075, %v4383
        %v4450 = vadd.f32 %v4076, %v4385
        %v4451 = vadd.f32 %v4077, %v4387
        %v4452 = vadd.f32 %v4078, %v4389
        %v4453 = vadd.f32 %v4079, %v4393
        %v4454 = vadd.f32 %v4080, %v4395
        %v4455 = vadd.f32 %v4081, %v4397
        %v4456 = vadd.f32 %v4082, %v4399
        %v4457 = vadd.f32 %v4083, %v4403
        %v4458 = vadd.f32 %v4084, %v4405
        %v4459 = vadd.f32 %v4085, %v4407
        %v4460 = vadd.f32 %v4086, %v4409
        %v4461 = vadd.f32 %v4087, %v4413
        %v4462 = vadd.f32 %v4088, %v4415
        %v4463 = vadd.f32 %v4089, %v4417
        %v4464 = vadd.f32 %v4090, %v4419
        %v4465 = vadd.f32 %v4091, %v4423
        %v4466 = vadd.f32 %v4092, %v4425
        %v4467 = vadd.f32 %v4093, %v4427
        %v4468 = vadd.f32 %v4094, %v4429
        %v4469 = vadd.f32 %v4095, %v4433
        %v4470 = vadd.f32 %v4096, %v4435
        %v4471 = vadd.f32 %v4097, %v4437
        %v4472 = vadd.f32 %v4098, %v4439
        %s4473 = scalar_lea.vmem %s4, 672
        %v4474 = vld [vmem:[%s4473] sm:$0xff]
        %v4475 = vld [vmem:[%s4473 + $0x8] sm:$0xff]
        %v4476 = vld [vmem:[%s4473 + $0x10] sm:$0xff]
        %v4477 = vld [vmem:[%s4473 + $0x18] sm:$0xff]
        %v4478 = vld [vmem:[%s4473 + $0x20] sm:$0xff]
        %v4479 = vld [vmem:[%s4473 + $0x28] sm:$0xff]
        %v4480 = vld [vmem:[%s4473 + $0x30] sm:$0xff]
        %v4481 = vld [vmem:[%s4473 + $0x38] sm:$0xff]
        %v4482 = vld [vmem:[%s4473 + $0x40] sm:$0xff]
        %v4483 = vld [vmem:[%s4473 + $0x48] sm:$0xff]
        %v4484 = vld [vmem:[%s4473 + $0x50] sm:$0xff]
        %v4485 = vld [vmem:[%s4473 + $0x58] sm:$0xff]
        %v4486 = vld [vmem:[%s4473 + $0x60] sm:$0xff]
        %v4487 = vld [vmem:[%s4473 + $0x68] sm:$0xff]
        %v4488 = vld [vmem:[%s4473 + $0x70] sm:$0xff]
        %v4489 = vld [vmem:[%s4473 + $0x78] sm:$0xff]
        %v4490 = vld [vmem:[%s4473 + $0x80] sm:$0xff]
        %v4491 = vld [vmem:[%s4473 + $0x88] sm:$0xff]
        %v4492 = vld [vmem:[%s4473 + $0x90] sm:$0xff]
        %v4493 = vld [vmem:[%s4473 + $0x98] sm:$0xff]
        %v4494 = vld [vmem:[%s4473 + $0xa0] sm:$0x11]
        %v4495 = vrot.slane %v2980, 2
        %v4496 = vrot.slane %v2982, 2
        %v4497 = vsel %vm856, %v4495, %v4496
        %v4498 = vrot.slane %v2981, 2
        %v4499 = vrot.slane %v2983, 2
        %v4500 = vsel %vm856, %v4498, %v4499
        %v4501 = vrot.slane %v2984, 2
        %v4502 = vsel %vm856, %v4496, %v4501
        %v4503 = vrot.slane %v2985, 2
        %v4504 = vsel %vm856, %v4499, %v4503
        %v4505 = vrot.slane %v2986, 2
        %v4506 = vsel %vm856, %v4501, %v4505
        %v4507 = vrot.slane %v2987, 2
        %v4508 = vsel %vm856, %v4503, %v4507
        %v4509 = vrot.slane %v2988, 2
        %v4510 = vsel %vm856, %v4505, %v4509
        %v4511 = vrot.slane %v2989, 2
        %v4512 = vsel %vm856, %v4507, %v4511
        %v4513 = vrot.slane %v2990, 2
        %v4514 = vsel %vm856, %v4509, %v4513
        %v4515 = vrot.slane %v2991, 2
        %v4516 = vsel %vm856, %v4511, %v4515
        %v4517 = vrot.slane %v2992, 2
        %v4518 = vsel %vm856, %v4513, %v4517
        %v4519 = vrot.slane %v2993, 2
        %v4520 = vsel %vm856, %v4515, %v4519
        %v4521 = vrot.slane %v2994, 2
        %v4522 = vsel %vm856, %v4517, %v4521
        %v4523 = vrot.slane %v2995, 2
        %v4524 = vsel %vm856, %v4519, %v4523
        %v4525 = vsel %vm856, %v4521, %v888
        %v4526 = vsel %vm856, %v4523, %v888
        %v4556 = vunpack.c.l.b16 %v4474
        %v4557 = vunpack.c.h.b16 %v4474
        %v4558 = vunpack.c.l.b16 %v4475
        %v4559 = vunpack.c.h.b16 %v4475
        %v4560 = vunpack.c.l.b16 %v4476
        %v4561 = vunpack.c.h.b16 %v4476
        %v4562 = vunpack.c.l.b16 %v4477
        %v4563 = vunpack.c.h.b16 %v4477
        %v4564 = vunpack.c.l.b16 %v4478
        %v4565 = vunpack.c.h.b16 %v4478
        %v4566 = vunpack.c.l.b16 %v4479
        %v4567 = vunpack.c.h.b16 %v4479
        %v4568 = vunpack.c.l.b16 %v4480
        %v4569 = vunpack.c.h.b16 %v4480
        %v4570 = vunpack.c.l.b16 %v4481
        %v4571 = vunpack.c.h.b16 %v4481
        %v4572 = vunpack.c.l.b16 %v4482
        %v4573 = vunpack.c.h.b16 %v4482
        %v4574 = vunpack.c.l.b16 %v4483
        %v4575 = vunpack.c.h.b16 %v4483
        %v4576 = vunpack.c.l.b16 %v4484
        %v4577 = vunpack.c.h.b16 %v4484
        %v4578 = vunpack.c.l.b16 %v4485
        %v4579 = vunpack.c.h.b16 %v4485
        %v4580 = vunpack.c.l.b16 %v4486
        %v4581 = vunpack.c.h.b16 %v4486
        %v4582 = vunpack.c.l.b16 %v4487
        %v4583 = vunpack.c.h.b16 %v4487
        %v4584 = vunpack.c.l.b16 %v4488
        %v4585 = vunpack.c.h.b16 %v4488
        %v4586 = vunpack.c.l.b16 %v4489
        %v4587 = vunpack.c.h.b16 %v4489
        %v4588 = vunpack.c.l.b16 %v4490
        %v4589 = vunpack.c.h.b16 %v4490
        %v4590 = vunpack.c.l.b16 %v4491
        %v4591 = vunpack.c.h.b16 %v4491
        %v4592 = vunpack.c.l.b16 %v4492
        %v4593 = vunpack.c.h.b16 %v4492
        %v4594 = vunpack.c.l.b16 %v4493
        %v4595 = vunpack.c.h.b16 %v4493
        %v4596 = vunpack.c.l.b16 %v4494
        %v4597 = vunpack.c.h.b16 %v4494
        %v4598 = vpack.c.b16 %v4558, %v4556
        %v4599 = vpack.c.b16 %v4559, %v4557
        %v4600 = vpack.c.b16 %v4562, %v4560
        %v4601 = vpack.c.b16 %v4563, %v4561
        %v4602 = vpack.c.b16 %v4566, %v4564
        %v4603 = vpack.c.b16 %v4567, %v4565
        %v4604 = vpack.c.b16 %v4570, %v4568
        %v4605 = vpack.c.b16 %v4571, %v4569
        %v4606 = vpack.c.b16 %v4574, %v4572
        %v4607 = vpack.c.b16 %v4575, %v4573
        %v4608 = vpack.c.b16 %v4578, %v4576
        %v4609 = vpack.c.b16 %v4579, %v4577
        %v4610 = vpack.c.b16 %v4582, %v4580
        %v4611 = vpack.c.b16 %v4583, %v4581
        %v4612 = vpack.c.b16 %v4586, %v4584
        %v4613 = vpack.c.b16 %v4587, %v4585
        %v4614 = vpack.c.b16 %v4590, %v4588
        %v4615 = vpack.c.b16 %v4591, %v4589
        %v4616 = vpack.c.b16 %v4594, %v4592
        %v4617 = vpack.c.b16 %v4595, %v4593
        %v4618 = vpack.c.b16 %v4596, %v4596
        %v4619 = vpack.c.b16 %v4597, %v4597
        %v4641 = vsel %vm3134, %v4500, 0
        %v4644 = vsel %vm3134, %v4504, 0
        %v4647 = vsel %vm3134, %v4508, 0
        %v4650 = vsel %vm3134, %v4512, 0
        %v4653 = vsel %vm3134, %v4516, 0
        %v4656 = vsel %vm3134, %v4520, 0
        %v4659 = vsel %vm3134, %v4524, 0
        %v4662 = vsel %vm3134, %v4526, 0
        %v4665 = vsel %vm3159, %v4618, 0
        %v4668 = vsel %vm3159, %v4619, 0
        %4670 = vmatprep.subr.bf16.mxu0 %v4599
        %4671 = vmatpush1.bf16.msra.mxu0 %v4598
        %4672 = vmatprep.subr.bf16.mxu0 %v4601
        %4673 = vmatpush1.bf16.msra.mxu0 %v4600
        %4674 = vmatprep.subr.bf16.mxu0 %v4603
        %4675 = vmatpush1.bf16.msra.mxu0 %v4602
        %4676 = vmatprep.subr.bf16.mxu0 %v4605
        %4677 = vmatpush1.bf16.msra.mxu0 %v4604
        %4678 = vmatprep.subr.bf16.mxu0 %v4607
        %4679 = vmatpush1.bf16.msra.mxu0 %v4606
        %4680 = vmatprep.subr.bf16.mxu0 %v4609
        %4681 = vmatpush1.bf16.msra.mxu0 %v4608
        %4682 = vmatprep.subr.bf16.mxu0 %v4611
        %4683 = vmatpush1.bf16.msra.mxu0 %v4610
        %4684 = vmatprep.subr.bf16.mxu0 %v4613
        %4685 = vmatpush1.bf16.msra.mxu0 %v4612
        %4686 = vmatprep.subr.bf16.mxu0 %v4615
        %4687 = vmatpush1.bf16.msra.mxu0 %v4614
        %4688 = vmatprep.subr.bf16.mxu0 %v4617
        %4689 = vmatpush1.bf16.msra.mxu0 %v4616
        %4690 = vmatprep.subr.bf16.mxu0 %v4668
        %4691 = vmatpush1.bf16.msra.mxu0 %v4665
        %4692 = vmatprep.subr.bf16.mxu0 0
        %4693 = vmatpush1.bf16.msra.mxu0 0
        %4694 = vmatprep.subr.bf16.mxu0 0
        %4695 = vmatpush1.bf16.msra.mxu0 0
        %4696 = vmatprep.subr.bf16.mxu0 0
        %4697 = vmatpush1.bf16.msra.mxu0 0
        %4698 = vmatprep.subr.bf16.mxu0 0
        %4699 = vmatpush1.bf16.msra.mxu0 0
        %4700 = vmatprep.subr.bf16.mxu0 0
        %4701 = vmatpush1.bf16.msra.mxu0 0
        %4702 = vmatprep.mubr.bf16.mxu0 %v4641
        %4703 = vmatmul.mubr.bf16.gmra.mrb[0].mxu0 %v4497
        %v4704 = vpop.f32.mrb[0].mxu0
        %v4705 = vadd.f32 0.0, %v4704
        %v4706 = vpop.f32.mrb[0].mxu0
        %v4707 = vadd.f32 0.0, %v4706
        %v4708 = vpop.f32.mrb[0].mxu0
        %v4709 = vadd.f32 0.0, %v4708
        %v4710 = vpop.f32.mrb[0].mxu0
        %v4711 = vadd.f32 0.0, %v4710
        %4712 = vmatprep.mubr.bf16.mxu0 %v4644
        %4713 = vmatmul.mubr.bf16.gmra.mrb[0].mxu0 %v4502
        %v4714 = vpop.f32.mrb[0].mxu0
        %v4715 = vadd.f32 0.0, %v4714
        %v4716 = vpop.f32.mrb[0].mxu0
        %v4717 = vadd.f32 0.0, %v4716
        %v4718 = vpop.f32.mrb[0].mxu0
        %v4719 = vadd.f32 0.0, %v4718
        %v4720 = vpop.f32.mrb[0].mxu0
        %v4721 = vadd.f32 0.0, %v4720
        %4722 = vmatprep.mubr.bf16.mxu0 %v4647
        %4723 = vmatmul.mubr.bf16.gmra.mrb[0].mxu0 %v4506
        %v4724 = vpop.f32.mrb[0].mxu0
        %v4725 = vadd.f32 0.0, %v4724
        %v4726 = vpop.f32.mrb[0].mxu0
        %v4727 = vadd.f32 0.0, %v4726
        %v4728 = vpop.f32.mrb[0].mxu0
        %v4729 = vadd.f32 0.0, %v4728
        %v4730 = vpop.f32.mrb[0].mxu0
        %v4731 = vadd.f32 0.0, %v4730
        %4732 = vmatprep.mubr.bf16.mxu0 %v4650
        %4733 = vmatmul.mubr.bf16.gmra.mrb[0].mxu0 %v4510
        %v4734 = vpop.f32.mrb[0].mxu0
        %v4735 = vadd.f32 0.0, %v4734
        %v4736 = vpop.f32.mrb[0].mxu0
        %v4737 = vadd.f32 0.0, %v4736
        %v4738 = vpop.f32.mrb[0].mxu0
        %v4739 = vadd.f32 0.0, %v4738
        %v4740 = vpop.f32.mrb[0].mxu0
        %v4741 = vadd.f32 0.0, %v4740
        %4742 = vmatprep.mubr.bf16.mxu0 %v4653
        %4743 = vmatmul.mubr.bf16.gmra.mrb[0].mxu0 %v4514
        %v4744 = vpop.f32.mrb[0].mxu0
        %v4745 = vadd.f32 0.0, %v4744
        %v4746 = vpop.f32.mrb[0].mxu0
        %v4747 = vadd.f32 0.0, %v4746
        %v4748 = vpop.f32.mrb[0].mxu0
        %v4749 = vadd.f32 0.0, %v4748
        %v4750 = vpop.f32.mrb[0].mxu0
        %v4751 = vadd.f32 0.0, %v4750
        %4752 = vmatprep.mubr.bf16.mxu0 %v4656
        %4753 = vmatmul.mubr.bf16.gmra.mrb[0].mxu0 %v4518
        %v4754 = vpop.f32.mrb[0].mxu0
        %v4755 = vadd.f32 0.0, %v4754
        %v4756 = vpop.f32.mrb[0].mxu0
        %v4757 = vadd.f32 0.0, %v4756
        %v4758 = vpop.f32.mrb[0].mxu0
        %v4759 = vadd.f32 0.0, %v4758
        %v4760 = vpop.f32.mrb[0].mxu0
        %v4761 = vadd.f32 0.0, %v4760
        %4762 = vmatprep.mubr.bf16.mxu0 %v4659
        %4763 = vmatmul.mubr.bf16.gmra.mrb[0].mxu0 %v4522
        %v4764 = vpop.f32.mrb[0].mxu0
        %v4765 = vadd.f32 0.0, %v4764
        %v4766 = vpop.f32.mrb[0].mxu0
        %v4767 = vadd.f32 0.0, %v4766
        %v4768 = vpop.f32.mrb[0].mxu0
        %v4769 = vadd.f32 0.0, %v4768
        %v4770 = vpop.f32.mrb[0].mxu0
        %v4771 = vadd.f32 0.0, %v4770
        %4772 = vmatprep.mubr.bf16.mxu0 %v4662
        %4773 = vmatmul.mubr.bf16.gmra.mrb[0].mxu0 %v4525
        %v4774 = vpop.f32.mrb[0].mxu0
        %v4775 = vadd.f32 0.0, %v4774
        %v4776 = vpop.f32.mrb[0].mxu0
        %v4777 = vadd.f32 0.0, %v4776
        %v4778 = vpop.f32.mrb[0].mxu0
        %v4779 = vadd.f32 0.0, %v4778
        %v4780 = vpop.f32.mrb[0].mxu0
        %v4781 = vadd.f32 0.0, %v4780
        %4782 = vdwg.mxu0
        %v4783 = vadd.f32 %v4441, %v4705
        %v4784 = vadd.f32 %v4442, %v4707
        %v4785 = vadd.f32 %v4443, %v4709
        %v4786 = vadd.f32 %v4444, %v4711
        %v4787 = vadd.f32 %v4445, %v4715
        %v4788 = vadd.f32 %v4446, %v4717
        %v4789 = vadd.f32 %v4447, %v4719
        %v4790 = vadd.f32 %v4448, %v4721
        %v4791 = vadd.f32 %v4449, %v4725
        %v4792 = vadd.f32 %v4450, %v4727
        %v4793 = vadd.f32 %v4451, %v4729
        %v4794 = vadd.f32 %v4452, %v4731
        %v4795 = vadd.f32 %v4453, %v4735
        %v4796 = vadd.f32 %v4454, %v4737
        %v4797 = vadd.f32 %v4455, %v4739
        %v4798 = vadd.f32 %v4456, %v4741
        %v4799 = vadd.f32 %v4457, %v4745
        %v4800 = vadd.f32 %v4458, %v4747
        %v4801 = vadd.f32 %v4459, %v4749
        %v4802 = vadd.f32 %v4460, %v4751
        %v4803 = vadd.f32 %v4461, %v4755
        %v4804 = vadd.f32 %v4462, %v4757
        %v4805 = vadd.f32 %v4463, %v4759
        %v4806 = vadd.f32 %v4464, %v4761
        %v4807 = vadd.f32 %v4465, %v4765
        %v4808 = vadd.f32 %v4466, %v4767
        %v4809 = vadd.f32 %v4467, %v4769
        %v4810 = vadd.f32 %v4468, %v4771
        %v4811 = vadd.f32 %v4469, %v4775
        %v4812 = vadd.f32 %v4470, %v4777
        %v4813 = vadd.f32 %v4471, %v4779
        %v4814 = vadd.f32 %v4472, %v4781
        %v4815 = vmax.f32 %v4783, 0.0
        %v4816 = vmax.f32 %v4784, 0.0
        %v4817 = vmax.f32 %v4785, 0.0
        %v4818 = vmax.f32 %v4786, 0.0
        %v4819 = vmax.f32 %v4787, 0.0
        %v4820 = vmax.f32 %v4788, 0.0
        %v4821 = vmax.f32 %v4789, 0.0
        %v4822 = vmax.f32 %v4790, 0.0
        %v4823 = vmax.f32 %v4791, 0.0
        %v4824 = vmax.f32 %v4792, 0.0
        %v4825 = vmax.f32 %v4793, 0.0
        %v4826 = vmax.f32 %v4794, 0.0
        %v4827 = vmax.f32 %v4795, 0.0
        %v4828 = vmax.f32 %v4796, 0.0
        %v4829 = vmax.f32 %v4797, 0.0
        %v4830 = vmax.f32 %v4798, 0.0
        %v4831 = vmax.f32 %v4799, 0.0
        %v4832 = vmax.f32 %v4800, 0.0
        %v4833 = vmax.f32 %v4801, 0.0
        %v4834 = vmax.f32 %v4802, 0.0
        %v4835 = vmax.f32 %v4803, 0.0
        %v4836 = vmax.f32 %v4804, 0.0
        %v4837 = vmax.f32 %v4805, 0.0
        %v4838 = vmax.f32 %v4806, 0.0
        %v4839 = vmax.f32 %v4807, 0.0
        %v4840 = vmax.f32 %v4808, 0.0
        %v4841 = vmax.f32 %v4809, 0.0
        %v4842 = vmax.f32 %v4810, 0.0
        %v4843 = vmax.f32 %v4811, 0.0
        %v4844 = vmax.f32 %v4812, 0.0
        %v4845 = vmax.f32 %v4813, 0.0
        %v4846 = vmax.f32 %v4814, 0.0
        %v4879 = vrot.slane %v4815, 1
        %v4880 = vrot.slane %v4817, 1
        %v4881 = vsel %vm2105, %v4879, %v4880
        %v4882 = vrot.slane %v4816, 1
        %v4883 = vrot.slane %v4818, 1
        %v4884 = vsel %vm2105, %v4882, %v4883
        %v4885 = vrot.slane %v4819, 1
        %v4886 = vsel %vm2105, %v4880, %v4885
        %v4887 = vrot.slane %v4820, 1
        %v4888 = vsel %vm2105, %v4883, %v4887
        %v4889 = vrot.slane %v4821, 1
        %v4890 = vsel %vm2105, %v4885, %v4889
        %v4891 = vrot.slane %v4822, 1
        %v4892 = vsel %vm2105, %v4887, %v4891
        %v4893 = vrot.slane %v4823, 1
        %v4894 = vsel %vm2105, %v4889, %v4893
        %v4895 = vrot.slane %v4824, 1
        %v4896 = vsel %vm2105, %v4891, %v4895
        %v4897 = vrot.slane %v4825, 1
        %v4898 = vsel %vm2105, %v4893, %v4897
        %v4899 = vrot.slane %v4826, 1
        %v4900 = vsel %vm2105, %v4895, %v4899
        %v4901 = vrot.slane %v4827, 1
        %v4902 = vsel %vm2105, %v4897, %v4901
        %v4903 = vrot.slane %v4828, 1
        %v4904 = vsel %vm2105, %v4899, %v4903
        %v4905 = vrot.slane %v4829, 1
        %v4906 = vsel %vm2105, %v4901, %v4905
        %v4907 = vrot.slane %v4830, 1
        %v4908 = vsel %vm2105, %v4903, %v4907
        %v4909 = vrot.slane %v4831, 1
        %v4910 = vsel %vm2105, %v4905, %v4909
        %v4911 = vrot.slane %v4832, 1
        %v4912 = vsel %vm2105, %v4907, %v4911
        %v4913 = vrot.slane %v4833, 1
        %v4914 = vsel %vm2105, %v4909, %v4913
        %v4915 = vrot.slane %v4834, 1
        %v4916 = vsel %vm2105, %v4911, %v4915
        %v4917 = vrot.slane %v4835, 1
        %v4918 = vsel %vm2105, %v4913, %v4917
        %v4919 = vrot.slane %v4836, 1
        %v4920 = vsel %vm2105, %v4915, %v4919
        %v4921 = vrot.slane %v4837, 1
        %v4922 = vsel %vm2105, %v4917, %v4921
        %v4923 = vrot.slane %v4838, 1
        %v4924 = vsel %vm2105, %v4919, %v4923
        %v4925 = vrot.slane %v4839, 1
        %v4926 = vsel %vm2105, %v4921, %v4925
        %v4927 = vrot.slane %v4840, 1
        %v4928 = vsel %vm2105, %v4923, %v4927
        %v4929 = vrot.slane %v4841, 1
        %v4930 = vsel %vm2105, %v4925, %v4929
        %v4931 = vrot.slane %v4842, 1
        %v4932 = vsel %vm2105, %v4927, %v4931
        %v4933 = vrot.slane %v4843, 1
        %v4934 = vsel %vm2105, %v4929, %v4933
        %v4935 = vrot.slane %v4844, 1
        %v4936 = vsel %vm2105, %v4931, %v4935
        %v4937 = vrot.slane %v4845, 1
        %v4938 = vsel %vm2105, %v4933, %v4937
        %v4939 = vrot.slane %v4846, 1
        %v4940 = vsel %vm2105, %v4935, %v4939
        %v4973 = vmax.f32 %v4815, %v4881
        %v4974 = vmax.f32 %v4816, %v4884
        %v4975 = vmax.f32 %v4817, %v4886
        %v4976 = vmax.f32 %v4818, %v4888
        %v4977 = vmax.f32 %v4819, %v4890
        %v4978 = vmax.f32 %v4820, %v4892
        %v4979 = vmax.f32 %v4821, %v4894
        %v4980 = vmax.f32 %v4822, %v4896
        %v4981 = vmax.f32 %v4823, %v4898
        %v4982 = vmax.f32 %v4824, %v4900
        %v4983 = vmax.f32 %v4825, %v4902
        %v4984 = vmax.f32 %v4826, %v4904
        %v4985 = vmax.f32 %v4827, %v4906
        %v4986 = vmax.f32 %v4828, %v4908
        %v4987 = vmax.f32 %v4829, %v4910
        %v4988 = vmax.f32 %v4830, %v4912
        %v4989 = vmax.f32 %v4831, %v4914
        %v4990 = vmax.f32 %v4832, %v4916
        %v4991 = vmax.f32 %v4833, %v4918
        %v4992 = vmax.f32 %v4834, %v4920
        %v4993 = vmax.f32 %v4835, %v4922
        %v4994 = vmax.f32 %v4836, %v4924
        %v4995 = vmax.f32 %v4837, %v4926
        %v4996 = vmax.f32 %v4838, %v4928
        %v4997 = vmax.f32 %v4839, %v4930
        %v4998 = vmax.f32 %v4840, %v4932
        %v4999 = vmax.f32 %v4841, %v4934
        %v5000 = vmax.f32 %v4842, %v4936
        %v5001 = vmax.f32 %v4843, %v4938
        %v5002 = vmax.f32 %v4844, %v4940
        %v5003 = vmax.f32 %v4845, %v4937
        %v5004 = vmax.f32 %v4846, %v4939
        %5037 = vrot.lane.b32.xlu0 %v4973, 112
        %v5038 = vpop.permute.xlu0 %5037
        %5039 = vrot.lane.b32.xlu0 %v4974, 112
        %v5040 = vpop.permute.xlu0 %5039
        %5041 = vrot.lane.b32.xlu0 %v4975, 112
        %v5042 = vpop.permute.xlu0 %5041
        %5043 = vrot.lane.b32.xlu0 %v4976, 112
        %v5044 = vpop.permute.xlu0 %5043
        %5045 = vrot.lane.b32.xlu0 %v4977, 112
        %v5046 = vpop.permute.xlu0 %5045
        %5047 = vrot.lane.b32.xlu0 %v4978, 112
        %v5048 = vpop.permute.xlu0 %5047
        %5049 = vrot.lane.b32.xlu0 %v4979, 112
        %v5050 = vpop.permute.xlu0 %5049
        %5051 = vrot.lane.b32.xlu0 %v4980, 112
        %v5052 = vpop.permute.xlu0 %5051
        %5053 = vrot.lane.b32.xlu0 %v4981, 112
        %v5054 = vpop.permute.xlu0 %5053
        %5055 = vrot.lane.b32.xlu0 %v4982, 112
        %v5056 = vpop.permute.xlu0 %5055
        %5057 = vrot.lane.b32.xlu0 %v4983, 112
        %v5058 = vpop.permute.xlu0 %5057
        %5059 = vrot.lane.b32.xlu0 %v4984, 112
        %v5060 = vpop.permute.xlu0 %5059
        %5061 = vrot.lane.b32.xlu0 %v4985, 112
        %v5062 = vpop.permute.xlu0 %5061
        %5063 = vrot.lane.b32.xlu0 %v4986, 112
        %v5064 = vpop.permute.xlu0 %5063
        %5065 = vrot.lane.b32.xlu0 %v4987, 112
        %v5066 = vpop.permute.xlu0 %5065
        %5067 = vrot.lane.b32.xlu0 %v4988, 112
        %v5068 = vpop.permute.xlu0 %5067
        %5069 = vrot.lane.b32.xlu0 %v4989, 112
        %v5070 = vpop.permute.xlu0 %5069
        %5071 = vrot.lane.b32.xlu0 %v4990, 112
        %v5072 = vpop.permute.xlu0 %5071
        %5073 = vrot.lane.b32.xlu0 %v4991, 112
        %v5074 = vpop.permute.xlu0 %5073
        %5075 = vrot.lane.b32.xlu0 %v4992, 112
        %v5076 = vpop.permute.xlu0 %5075
        %5077 = vrot.lane.b32.xlu0 %v4993, 112
        %v5078 = vpop.permute.xlu0 %5077
        %5079 = vrot.lane.b32.xlu0 %v4994, 112
        %v5080 = vpop.permute.xlu0 %5079
        %5081 = vrot.lane.b32.xlu0 %v4995, 112
        %v5082 = vpop.permute.xlu0 %5081
        %5083 = vrot.lane.b32.xlu0 %v4996, 112
        %v5084 = vpop.permute.xlu0 %5083
        %5085 = vrot.lane.b32.xlu0 %v4997, 112
        %v5086 = vpop.permute.xlu0 %5085
        %5087 = vrot.lane.b32.xlu0 %v4998, 112
        %v5088 = vpop.permute.xlu0 %5087
        %5089 = vrot.lane.b32.xlu0 %v4999, 112
        %v5090 = vpop.permute.xlu0 %5089
        %5091 = vrot.lane.b32.xlu0 %v5000, 112
        %v5092 = vpop.permute.xlu0 %5091
        %5093 = vrot.lane.b32.xlu0 %v5001, 112
        %v5094 = vpop.permute.xlu0 %5093
        %5095 = vrot.lane.b32.xlu0 %v5002, 112
        %v5096 = vpop.permute.xlu0 %5095
        %5097 = vrot.lane.b32.xlu0 %v5003, 112
        %v5098 = vpop.permute.xlu0 %5097
        %5099 = vrot.lane.b32.xlu0 %v5004, 112
        %v5100 = vpop.permute.xlu0 %5099
        %vm5101 = vcmask 916480
        %v5102 = vsel %vm5101, %v5038, %v5040
        %v5103 = vsel %vm5101, %v5042, %v5044
        %v5104 = vsel %vm5101, %v5046, %v5048
        %v5105 = vsel %vm5101, %v5050, %v5052
        %v5106 = vsel %vm5101, %v5054, %v5056
        %v5107 = vsel %vm5101, %v5058, %v5060
        %v5108 = vsel %vm5101, %v5062, %v5064
        %v5109 = vsel %vm5101, %v5066, %v5068
        %v5110 = vsel %vm5101, %v5070, %v5072
        %v5111 = vsel %vm5101, %v5074, %v5076
        %v5112 = vsel %vm5101, %v5078, %v5080
        %v5113 = vsel %vm5101, %v5082, %v5084
        %v5114 = vsel %vm5101, %v5086, %v5088
        %v5115 = vsel %vm5101, %v5090, %v5092
        %v5116 = vsel %vm5101, %v5094, %v5096
        %v5117 = vsel %vm5101, %v5098, %v5100
        %v5150 = vmax.f32 %v4973, %v5102
        %v5151 = vmax.f32 %v4974, %v5040
        %v5152 = vmax.f32 %v4975, %v5103
        %v5153 = vmax.f32 %v4976, %v5044
        %v5154 = vmax.f32 %v4977, %v5104
        %v5155 = vmax.f32 %v4978, %v5048
        %v5156 = vmax.f32 %v4979, %v5105
        %v5157 = vmax.f32 %v4980, %v5052
        %v5158 = vmax.f32 %v4981, %v5106
        %v5159 = vmax.f32 %v4982, %v5056
        %v5160 = vmax.f32 %v4983, %v5107
        %v5161 = vmax.f32 %v4984, %v5060
        %v5162 = vmax.f32 %v4985, %v5108
        %v5163 = vmax.f32 %v4986, %v5064
        %v5164 = vmax.f32 %v4987, %v5109
        %v5165 = vmax.f32 %v4988, %v5068
        %v5166 = vmax.f32 %v4989, %v5110
        %v5167 = vmax.f32 %v4990, %v5072
        %v5168 = vmax.f32 %v4991, %v5111
        %v5169 = vmax.f32 %v4992, %v5076
        %v5170 = vmax.f32 %v4993, %v5112
        %v5171 = vmax.f32 %v4994, %v5080
        %v5172 = vmax.f32 %v4995, %v5113
        %v5173 = vmax.f32 %v4996, %v5084
        %v5174 = vmax.f32 %v4997, %v5114
        %v5175 = vmax.f32 %v4998, %v5088
        %v5176 = vmax.f32 %v4999, %v5115
        %v5177 = vmax.f32 %v5000, %v5092
        %v5178 = vmax.f32 %v5001, %v5116
        %v5179 = vmax.f32 %v5002, %v5096
        %v5180 = vmax.f32 %v5003, %v5117
        %v5181 = vmax.f32 %v5004, %v5100
        %v5182 = vpack.c.bf16 %v5152, %v5150
        %v5183 = vpack.c.bf16 %v5153, %v5151
        %v5184 = vpack.c.bf16 %v5156, %v5154
        %v5185 = vpack.c.bf16 %v5157, %v5155
        %v5186 = vpack.c.bf16 %v5160, %v5158
        %v5187 = vpack.c.bf16 %v5161, %v5159
        %v5188 = vpack.c.bf16 %v5164, %v5162
        %v5189 = vpack.c.bf16 %v5165, %v5163
        %v5190 = vpack.c.bf16 %v5168, %v5166
        %v5191 = vpack.c.bf16 %v5169, %v5167
        %v5192 = vpack.c.bf16 %v5172, %v5170
        %v5193 = vpack.c.bf16 %v5173, %v5171
        %v5194 = vpack.c.bf16 %v5176, %v5174
        %v5195 = vpack.c.bf16 %v5177, %v5175
        %v5196 = vpack.c.bf16 %v5180, %v5178
        %v5197 = vpack.c.bf16 %v5181, %v5179
        %v5198 = vld [vmem:[%s6] sm:$0xf]
        %v5199 = vld [vmem:[%s6 + $0x4] sm:$0xf]
        %v5200 = vld [vmem:[%s6 + $0x8] sm:$0xf]
        %v5201 = vld [vmem:[%s6 + $0xc] sm:$0xf]
        %v5202 = vld [vmem:[%s6 + $0x10] sm:$0xf]
        %v5208 = vunpack.c.l.b16 %v5198
        %v5209 = vunpack.c.l.b16 %v5199
        %v5210 = vunpack.c.l.b16 %v5200
        %v5211 = vunpack.c.l.b16 %v5201
        %v5212 = vunpack.c.l.b16 %v5202
        %v5213 = vpack.c.b16 %v5209, %v5208
        %v5214 = vpack.c.b16 %v5211, %v5210
        %v5215 = vpack.c.b16 %v5212, %v5212
        %v5217 = vsel %vm2833, %v5213, 0
        %v5220 = vsel %vm2833, %v5214, 0
        %v5223 = vsel %vm2833, %v5215, 0
        %v5226 = vand.u32 %v5196, %v2860
        %v5229 = vand.u32 %v5197, %v2860
        %5231 = vmatprep.subr.bf16.mxu0 %v5183
        %5232 = vmatpush1.bf16.msra.mxu0 %v5182
        %5233 = vmatprep.subr.bf16.mxu0 %v5185
        %5234 = vmatpush1.bf16.msra.mxu0 %v5184
        %5235 = vmatprep.subr.bf16.mxu0 %v5187
        %5236 = vmatpush1.bf16.msra.mxu0 %v5186
        %5237 = vmatprep.subr.bf16.mxu0 %v5189
        %5238 = vmatpush1.bf16.msra.mxu0 %v5188
        %5239 = vmatprep.subr.bf16.mxu0 %v5191
        %5240 = vmatpush1.bf16.msra.mxu0 %v5190
        %5241 = vmatprep.subr.bf16.mxu0 %v5193
        %5242 = vmatpush1.bf16.msra.mxu0 %v5192
        %5243 = vmatprep.subr.bf16.mxu0 %v5195
        %5244 = vmatpush1.bf16.msra.mxu0 %v5194
        %5245 = vmatprep.subr.bf16.mxu0 %v5229
        %5246 = vmatpush1.bf16.msra.mxu0 %v5226
        %5247 = vmatprep.subr.bf16.mxu0 0
        %5248 = vmatpush1.bf16.msra.mxu0 0
        %5249 = vmatprep.subr.bf16.mxu0 0
        %5250 = vmatpush1.bf16.msra.mxu0 0
        %5251 = vmatprep.subr.bf16.mxu0 0
        %5252 = vmatpush1.bf16.msra.mxu0 0
        %5253 = vmatprep.subr.bf16.mxu0 0
        %5254 = vmatpush1.bf16.msra.mxu0 0
        %5255 = vmatprep.subr.bf16.mxu0 0
        %5256 = vmatpush1.bf16.msra.mxu0 0
        %5257 = vmatprep.subr.bf16.mxu0 0
        %5258 = vmatpush1.bf16.msra.mxu0 0
        %5259 = vmatprep.subr.bf16.mxu0 0
        %5260 = vmatpush1.bf16.msra.mxu0 0
        %5261 = vmatprep.subr.bf16.mxu0 0
        %5262 = vmatpush1.bf16.msra.mxu0 0
        %5263 = vmatprep.mubr.bf16.mxu0 0
        %5264 = vmatmul.mubr.bf16.gmra.mrb[0].mxu0 %v5217
        %v5265 = vpop.f32.mrb[0].mxu0
        %v5266 = vadd.f32 0.0, %v5265
        %v5267 = vpop.f32.mrb[0].mxu0
        %v5268 = vadd.f32 0.0, %v5267
        %v5269 = vpop.f32.mrb[0].mxu0
        %v5270 = vadd.f32 0.0, %v5269
        %v5271 = vpop.f32.mrb[0].mxu0
        %v5272 = vadd.f32 0.0, %v5271
        %5273 = vmatprep.mubr.bf16.mxu0 0
        %5274 = vmatmul.mubr.bf16.gmra.mrb[0].mxu0 %v5220
        %v5275 = vpop.f32.mrb[0].mxu0
        %v5276 = vadd.f32 0.0, %v5275
        %v5277 = vpop.f32.mrb[0].mxu0
        %v5278 = vadd.f32 0.0, %v5277
        %v5279 = vpop.f32.mrb[0].mxu0
        %v5280 = vadd.f32 0.0, %v5279
        %v5281 = vpop.f32.mrb[0].mxu0
        %v5282 = vadd.f32 0.0, %v5281
        %5283 = vmatprep.mubr.bf16.mxu0 0
        %5284 = vmatmul.mubr.bf16.gmra.mrb[0].mxu0 %v5223
        %v5285 = vpop.f32.mrb[0].mxu0
        %v5286 = vadd.f32 0.0, %v5285
        %v5287 = vpop.f32.mrb[0].mxu0
        %v5288 = vadd.f32 0.0, %v5287
        %v5289 = vpop.f32.mrb[0].mxu0
        %v5290 = vpop.f32.mrb[0].mxu0
        %5291 = vdwg.mxu0
        %v5292 = vpack.c.bf16 %v5270, %v5266
        %v5293 = vpack.c.bf16 %v5272, %v5268
        %v5294 = vpack.c.bf16 %v5280, %v5276
        %v5295 = vpack.c.bf16 %v5282, %v5278
        %v5296 = vpack.c.bf16 %v5286, %v5286
        %v5297 = vpack.c.bf16 %v5288, %v5288
        %v5298 = vld [vmem:[%s8] sm:$0x1]
        %v5300 = vlaneseq
        %v5301 = vshrl.u32 %v5300, 7
        %v5302 = vsub.s32 0, %v5301
        %v5303 = vrot.slane %v5298, %v5302
        %v5305 = vld [vmem:[%s7] sm:$0xf]
        %v5306 = vld [vmem:[%s7 + $0x4] sm:$0xf]
        %v5307 = vld [vmem:[%s7 + $0x8] sm:$0xf]
        %v5308 = vld [vmem:[%s7 + $0xc] sm:$0xf]
        %v5309 = vld [vmem:[%s7 + $0x10] sm:$0xf]
        %v5310 = vld [vmem:[%s7 + $0x14] sm:$0xf]
        %v5311 = vld [vmem:[%s7 + $0x18] sm:$0xf]
        %v5312 = vld [vmem:[%s7 + $0x1c] sm:$0xf]
        %v5313 = vld [vmem:[%s7 + $0x20] sm:$0xf]
        %v5314 = vld [vmem:[%s7 + $0x24] sm:$0xf]
        %v5315 = vld [vmem:[%s7 + $0x28] sm:$0xf]
        %v5316 = vld [vmem:[%s7 + $0x2c] sm:$0xf]
        %v5317 = vld [vmem:[%s7 + $0x30] sm:$0xf]
        %v5318 = vld [vmem:[%s7 + $0x34] sm:$0xf]
        %v5319 = vld [vmem:[%s7 + $0x38] sm:$0xf]
        %v5320 = vld [vmem:[%s7 + $0x3c] sm:$0xf]
        %v5321 = vld [vmem:[%s7 + $0x40] sm:$0xf]
        %v5322 = vld [vmem:[%s7 + $0x44] sm:$0xf]
        %v5341 = vunpack.c.l.b16 %v5305
        %v5342 = vunpack.c.l.b16 %v5306
        %v5343 = vunpack.c.l.b16 %v5307
        %v5344 = vunpack.c.l.b16 %v5308
        %v5345 = vunpack.c.l.b16 %v5309
        %v5346 = vunpack.c.l.b16 %v5310
        %v5347 = vunpack.c.l.b16 %v5311
        %v5348 = vunpack.c.l.b16 %v5312
        %v5349 = vunpack.c.l.b16 %v5313
        %v5350 = vunpack.c.l.b16 %v5314
        %v5351 = vunpack.c.l.b16 %v5315
        %v5352 = vunpack.c.l.b16 %v5316
        %v5353 = vunpack.c.l.b16 %v5317
        %v5354 = vunpack.c.l.b16 %v5318
        %v5355 = vunpack.c.l.b16 %v5319
        %v5356 = vunpack.c.l.b16 %v5320
        %v5357 = vunpack.c.l.b16 %v5321
        %v5358 = vunpack.c.l.b16 %v5322
        %v5359 = vpack.c.b16 %v5342, %v5341
        %v5360 = vpack.c.b16 %v5344, %v5343
        %v5361 = vpack.c.b16 %v5346, %v5345
        %v5362 = vpack.c.b16 %v5348, %v5347
        %v5363 = vpack.c.b16 %v5350, %v5349
        %v5364 = vpack.c.b16 %v5352, %v5351
        %v5365 = vpack.c.b16 %v5354, %v5353
        %v5366 = vpack.c.b16 %v5356, %v5355
        %v5367 = vpack.c.b16 %v5358, %v5357
        %vm5377 = vcmask 130048
        %v5379 = vsel %vm5377, %v5293, 0
        %5381 = vmatprep.subr.bf16.mxu0 0
        %5382 = vmatpush1.bf16.msra.mxu0 %v5359
        %5383 = vmatprep.subr.bf16.mxu0 0
        %5384 = vmatpush1.bf16.msra.mxu0 %v5360
        %5385 = vmatprep.subr.bf16.mxu0 0
        %5386 = vmatpush1.bf16.msra.mxu0 %v5361
        %5387 = vmatprep.subr.bf16.mxu0 0
        %5388 = vmatpush1.bf16.msra.mxu0 %v5362
        %5389 = vmatprep.subr.bf16.mxu0 0
        %5390 = vmatpush1.bf16.msra.mxu0 %v5363
        %5391 = vmatprep.subr.bf16.mxu0 0
        %5392 = vmatpush1.bf16.msra.mxu0 %v5364
        %5393 = vmatprep.subr.bf16.mxu0 0
        %5394 = vmatpush1.bf16.msra.mxu0 %v5365
        %5395 = vmatprep.subr.bf16.mxu0 0
        %5396 = vmatpush1.bf16.msra.mxu0 %v5366
        %5397 = vmatprep.subr.bf16.mxu0 0
        %5398 = vmatpush1.bf16.msra.mxu0 %v5367
        %5399 = vmatprep.subr.bf16.mxu0 0
        %5400 = vmatpush1.bf16.msra.mxu0 0
        %5401 = vmatprep.subr.bf16.mxu0 0
        %5402 = vmatpush1.bf16.msra.mxu0 0
        %5403 = vmatprep.subr.bf16.mxu0 0
        %5404 = vmatpush1.bf16.msra.mxu0 0
        %5405 = vmatprep.subr.bf16.mxu0 0
        %5406 = vmatpush1.bf16.msra.mxu0 0
        %5407 = vmatprep.subr.bf16.mxu0 0
        %5408 = vmatpush1.bf16.msra.mxu0 0
        %5409 = vmatprep.subr.bf16.mxu0 0
        %5410 = vmatpush1.bf16.msra.mxu0 0
        %5411 = vmatprep.subr.bf16.mxu0 0
        %5412 = vmatpush1.bf16.msra.mxu0 0
        %5413 = vmatprep.mubr.bf16.mxu0 %v5379
        %5414 = vmatmul.mubr.bf16.gmra.mrb[0].mxu0 %v5292
        %v5415 = vpop.f32.mrb[0].mxu0
        %v5416 = vadd.f32 0.0, %v5415
        %v5417 = vpop.f32.mrb[0].mxu0
        %v5418 = vpop.f32.mrb[0].mxu0
        %v5419 = vpop.f32.mrb[0].mxu0
        %5420 = vdwg.mxu0
        %v5421 = vadd.f32 %v5303, %v5416
        %s5422 = scalar_lea.vmem %s7, 72
        %v5423 = vld [vmem:[%s5422] sm:$0xf]
        %v5424 = vld [vmem:[%s5422 + $0x4] sm:$0xf]
        %v5425 = vld [vmem:[%s5422 + $0x8] sm:$0xf]
        %v5426 = vld [vmem:[%s5422 + $0xc] sm:$0xf]
        %v5427 = vld [vmem:[%s5422 + $0x10] sm:$0xf]
        %v5428 = vld [vmem:[%s5422 + $0x14] sm:$0xf]
        %v5429 = vld [vmem:[%s5422 + $0x18] sm:$0xf]
        %v5430 = vld [vmem:[%s5422 + $0x1c] sm:$0xf]
        %v5431 = vld [vmem:[%s5422 + $0x20] sm:$0xf]
        %v5432 = vld [vmem:[%s5422 + $0x24] sm:$0xf]
        %v5433 = vld [vmem:[%s5422 + $0x28] sm:$0xf]
        %v5434 = vld [vmem:[%s5422 + $0x2c] sm:$0xf]
        %v5435 = vld [vmem:[%s5422 + $0x30] sm:$0xf]
        %v5436 = vld [vmem:[%s5422 + $0x34] sm:$0xf]
        %v5437 = vld [vmem:[%s5422 + $0x38] sm:$0xf]
        %v5438 = vld [vmem:[%s5422 + $0x3c] sm:$0xf]
        %v5439 = vld [vmem:[%s5422 + $0x40] sm:$0xf]
        %v5440 = vld [vmem:[%s5422 + $0x44] sm:$0xf]
        %v5443 = vrot.slane %v5292, 4
        %v5444 = vrot.slane %v5293, 4
        %v5464 = vunpack.c.l.b16 %v5423
        %v5465 = vunpack.c.l.b16 %v5424
        %v5466 = vunpack.c.l.b16 %v5425
        %v5467 = vunpack.c.l.b16 %v5426
        %v5468 = vunpack.c.l.b16 %v5427
        %v5469 = vunpack.c.l.b16 %v5428
        %v5470 = vunpack.c.l.b16 %v5429
        %v5471 = vunpack.c.l.b16 %v5430
        %v5472 = vunpack.c.l.b16 %v5431
        %v5473 = vunpack.c.l.b16 %v5432
        %v5474 = vunpack.c.l.b16 %v5433
        %v5475 = vunpack.c.l.b16 %v5434
        %v5476 = vunpack.c.l.b16 %v5435
        %v5477 = vunpack.c.l.b16 %v5436
        %v5478 = vunpack.c.l.b16 %v5437
        %v5479 = vunpack.c.l.b16 %v5438
        %v5480 = vunpack.c.l.b16 %v5439
        %v5481 = vunpack.c.l.b16 %v5440
        %v5482 = vpack.c.b16 %v5465, %v5464
        %v5483 = vpack.c.b16 %v5467, %v5466
        %v5484 = vpack.c.b16 %v5469, %v5468
        %v5485 = vpack.c.b16 %v5471, %v5470
        %v5486 = vpack.c.b16 %v5473, %v5472
        %v5487 = vpack.c.b16 %v5475, %v5474
        %v5488 = vpack.c.b16 %v5477, %v5476
        %v5489 = vpack.c.b16 %v5479, %v5478
        %v5490 = vpack.c.b16 %v5481, %v5480
        %v5501 = vsel %vm5377, %v5444, 0
        %5503 = vmatprep.subr.bf16.mxu0 0
        %5504 = vmatpush1.bf16.msra.mxu0 %v5482
        %5505 = vmatprep.subr.bf16.mxu0 0
        %5506 = vmatpush1.bf16.msra.mxu0 %v5483
        %5507 = vmatprep.subr.bf16.mxu0 0
        %5508 = vmatpush1.bf16.msra.mxu0 %v5484
        %5509 = vmatprep.subr.bf16.mxu0 0
        %5510 = vmatpush1.bf16.msra.mxu0 %v5485
        %5511 = vmatprep.subr.bf16.mxu0 0
        %5512 = vmatpush1.bf16.msra.mxu0 %v5486
        %5513 = vmatprep.subr.bf16.mxu0 0
        %5514 = vmatpush1.bf16.msra.mxu0 %v5487
        %5515 = vmatprep.subr.bf16.mxu0 0
        %5516 = vmatpush1.bf16.msra.mxu0 %v5488
        %5517 = vmatprep.subr.bf16.mxu0 0
        %5518 = vmatpush1.bf16.msra.mxu0 %v5489
        %5519 = vmatprep.subr.bf16.mxu0 0
        %5520 = vmatpush1.bf16.msra.mxu0 %v5490
        %5521 = vmatprep.subr.bf16.mxu0 0
        %5522 = vmatpush1.bf16.msra.mxu0 0
        %5523 = vmatprep.subr.bf16.mxu0 0
        %5524 = vmatpush1.bf16.msra.mxu0 0
        %5525 = vmatprep.subr.bf16.mxu0 0
        %5526 = vmatpush1.bf16.msra.mxu0 0
        %5527 = vmatprep.subr.bf16.mxu0 0
        %5528 = vmatpush1.bf16.msra.mxu0 0
        %5529 = vmatprep.subr.bf16.mxu0 0
        %5530 = vmatpush1.bf16.msra.mxu0 0
        %5531 = vmatprep.subr.bf16.mxu0 0
        %5532 = vmatpush1.bf16.msra.mxu0 0
        %5533 = vmatprep.subr.bf16.mxu0 0
        %5534 = vmatpush1.bf16.msra.mxu0 0
        %5535 = vmatprep.mubr.bf16.mxu0 %v5501
        %5536 = vmatmul.mubr.bf16.gmra.mrb[0].mxu0 %v5443
        %v5537 = vpop.f32.mrb[0].mxu0
        %v5538 = vadd.f32 0.0, %v5537
        %v5539 = vpop.f32.mrb[0].mxu0
        %v5540 = vpop.f32.mrb[0].mxu0
        %v5541 = vpop.f32.mrb[0].mxu0
        %5542 = vdwg.mxu0
        %v5543 = vadd.f32 %v5421, %v5538
        %s5544 = scalar_lea.vmem %s7, 144
        %v5545 = vld [vmem:[%s5544] sm:$0xf]
        %v5546 = vld [vmem:[%s5544 + $0x4] sm:$0xf]
        %v5547 = vld [vmem:[%s5544 + $0x8] sm:$0xf]
        %v5548 = vld [vmem:[%s5544 + $0xc] sm:$0xf]
        %v5549 = vld [vmem:[%s5544 + $0x10] sm:$0xf]
        %v5550 = vld [vmem:[%s5544 + $0x14] sm:$0xf]
        %v5551 = vld [vmem:[%s5544 + $0x18] sm:$0xf]
        %v5552 = vld [vmem:[%s5544 + $0x1c] sm:$0xf]
        %v5553 = vld [vmem:[%s5544 + $0x20] sm:$0xf]
        %v5554 = vld [vmem:[%s5544 + $0x24] sm:$0xf]
        %v5555 = vld [vmem:[%s5544 + $0x28] sm:$0xf]
        %v5556 = vld [vmem:[%s5544 + $0x2c] sm:$0xf]
        %v5557 = vld [vmem:[%s5544 + $0x30] sm:$0xf]
        %v5558 = vld [vmem:[%s5544 + $0x34] sm:$0xf]
        %v5559 = vld [vmem:[%s5544 + $0x38] sm:$0xf]
        %v5560 = vld [vmem:[%s5544 + $0x3c] sm:$0xf]
        %v5561 = vld [vmem:[%s5544 + $0x40] sm:$0xf]
        %v5562 = vld [vmem:[%s5544 + $0x44] sm:$0xf]
        %v5581 = vunpack.c.l.b16 %v5545
        %v5582 = vunpack.c.l.b16 %v5546
        %v5583 = vunpack.c.l.b16 %v5547
        %v5584 = vunpack.c.l.b16 %v5548
        %v5585 = vunpack.c.l.b16 %v5549
        %v5586 = vunpack.c.l.b16 %v5550
        %v5587 = vunpack.c.l.b16 %v5551
        %v5588 = vunpack.c.l.b16 %v5552
        %v5589 = vunpack.c.l.b16 %v5553
        %v5590 = vunpack.c.l.b16 %v5554
        %v5591 = vunpack.c.l.b16 %v5555
        %v5592 = vunpack.c.l.b16 %v5556
        %v5593 = vunpack.c.l.b16 %v5557
        %v5594 = vunpack.c.l.b16 %v5558
        %v5595 = vunpack.c.l.b16 %v5559
        %v5596 = vunpack.c.l.b16 %v5560
        %v5597 = vunpack.c.l.b16 %v5561
        %v5598 = vunpack.c.l.b16 %v5562
        %v5599 = vpack.c.b16 %v5582, %v5581
        %v5600 = vpack.c.b16 %v5584, %v5583
        %v5601 = vpack.c.b16 %v5586, %v5585
        %v5602 = vpack.c.b16 %v5588, %v5587
        %v5603 = vpack.c.b16 %v5590, %v5589
        %v5604 = vpack.c.b16 %v5592, %v5591
        %v5605 = vpack.c.b16 %v5594, %v5593
        %v5606 = vpack.c.b16 %v5596, %v5595
        %v5607 = vpack.c.b16 %v5598, %v5597
        %v5618 = vsel %vm5377, %v5295, 0
        %5620 = vmatprep.subr.bf16.mxu0 0
        %5621 = vmatpush1.bf16.msra.mxu0 %v5599
        %5622 = vmatprep.subr.bf16.mxu0 0
        %5623 = vmatpush1.bf16.msra.mxu0 %v5600
        %5624 = vmatprep.subr.bf16.mxu0 0
        %5625 = vmatpush1.bf16.msra.mxu0 %v5601
        %5626 = vmatprep.subr.bf16.mxu0 0
        %5627 = vmatpush1.bf16.msra.mxu0 %v5602
        %5628 = vmatprep.subr.bf16.mxu0 0
        %5629 = vmatpush1.bf16.msra.mxu0 %v5603
        %5630 = vmatprep.subr.bf16.mxu0 0
        %5631 = vmatpush1.bf16.msra.mxu0 %v5604
        %5632 = vmatprep.subr.bf16.mxu0 0
        %5633 = vmatpush1.bf16.msra.mxu0 %v5605
        %5634 = vmatprep.subr.bf16.mxu0 0
        %5635 = vmatpush1.bf16.msra.mxu0 %v5606
        %5636 = vmatprep.subr.bf16.mxu0 0
        %5637 = vmatpush1.bf16.msra.mxu0 %v5607
        %5638 = vmatprep.subr.bf16.mxu0 0
        %5639 = vmatpush1.bf16.msra.mxu0 0
        %5640 = vmatprep.subr.bf16.mxu0 0
        %5641 = vmatpush1.bf16.msra.mxu0 0
        %5642 = vmatprep.subr.bf16.mxu0 0
        %5643 = vmatpush1.bf16.msra.mxu0 0
        %5644 = vmatprep.subr.bf16.mxu0 0
        %5645 = vmatpush1.bf16.msra.mxu0 0
        %5646 = vmatprep.subr.bf16.mxu0 0
        %5647 = vmatpush1.bf16.msra.mxu0 0
        %5648 = vmatprep.subr.bf16.mxu0 0
        %5649 = vmatpush1.bf16.msra.mxu0 0
        %5650 = vmatprep.subr.bf16.mxu0 0
        %5651 = vmatpush1.bf16.msra.mxu0 0
        %5652 = vmatprep.mubr.bf16.mxu0 %v5618
        %5653 = vmatmul.mubr.bf16.gmra.mrb[0].mxu0 %v5294
        %v5654 = vpop.f32.mrb[0].mxu0
        %v5655 = vadd.f32 0.0, %v5654
        %v5656 = vpop.f32.mrb[0].mxu0
        %v5657 = vpop.f32.mrb[0].mxu0
        %v5658 = vpop.f32.mrb[0].mxu0
        %5659 = vdwg.mxu0
        %v5660 = vadd.f32 %v5543, %v5655
        %s5661 = scalar_lea.vmem %s7, 216
        %v5662 = vld [vmem:[%s5661] sm:$0xf]
        %v5663 = vld [vmem:[%s5661 + $0x4] sm:$0xf]
        %v5664 = vld [vmem:[%s5661 + $0x8] sm:$0xf]
        %v5665 = vld [vmem:[%s5661 + $0xc] sm:$0xf]
        %v5666 = vld [vmem:[%s5661 + $0x10] sm:$0xf]
        %v5667 = vld [vmem:[%s5661 + $0x14] sm:$0xf]
        %v5668 = vld [vmem:[%s5661 + $0x18] sm:$0xf]
        %v5669 = vld [vmem:[%s5661 + $0x1c] sm:$0xf]
        %v5670 = vld [vmem:[%s5661 + $0x20] sm:$0xf]
        %v5671 = vld [vmem:[%s5661 + $0x24] sm:$0xf]
        %v5672 = vld [vmem:[%s5661 + $0x28] sm:$0xf]
        %v5673 = vld [vmem:[%s5661 + $0x2c] sm:$0xf]
        %v5674 = vld [vmem:[%s5661 + $0x30] sm:$0xf]
        %v5675 = vld [vmem:[%s5661 + $0x34] sm:$0xf]
        %v5676 = vld [vmem:[%s5661 + $0x38] sm:$0xf]
        %v5677 = vld [vmem:[%s5661 + $0x3c] sm:$0xf]
        %v5678 = vld [vmem:[%s5661 + $0x40] sm:$0xf]
        %v5679 = vld [vmem:[%s5661 + $0x44] sm:$0xf]
        %v5682 = vrot.slane %v5294, 4
        %v5683 = vrot.slane %v5295, 4
        %v5703 = vunpack.c.l.b16 %v5662
        %v5704 = vunpack.c.l.b16 %v5663
        %v5705 = vunpack.c.l.b16 %v5664
        %v5706 = vunpack.c.l.b16 %v5665
        %v5707 = vunpack.c.l.b16 %v5666
        %v5708 = vunpack.c.l.b16 %v5667
        %v5709 = vunpack.c.l.b16 %v5668
        %v5710 = vunpack.c.l.b16 %v5669
        %v5711 = vunpack.c.l.b16 %v5670
        %v5712 = vunpack.c.l.b16 %v5671
        %v5713 = vunpack.c.l.b16 %v5672
        %v5714 = vunpack.c.l.b16 %v5673
        %v5715 = vunpack.c.l.b16 %v5674
        %v5716 = vunpack.c.l.b16 %v5675
        %v5717 = vunpack.c.l.b16 %v5676
        %v5718 = vunpack.c.l.b16 %v5677
        %v5719 = vunpack.c.l.b16 %v5678
        %v5720 = vunpack.c.l.b16 %v5679
        %v5721 = vpack.c.b16 %v5704, %v5703
        %v5722 = vpack.c.b16 %v5706, %v5705
        %v5723 = vpack.c.b16 %v5708, %v5707
        %v5724 = vpack.c.b16 %v5710, %v5709
        %v5725 = vpack.c.b16 %v5712, %v5711
        %v5726 = vpack.c.b16 %v5714, %v5713
        %v5727 = vpack.c.b16 %v5716, %v5715
        %v5728 = vpack.c.b16 %v5718, %v5717
        %v5729 = vpack.c.b16 %v5720, %v5719
        %v5740 = vsel %vm5377, %v5683, 0
        %5742 = vmatprep.subr.bf16.mxu0 0
        %5743 = vmatpush1.bf16.msra.mxu0 %v5721
        %5744 = vmatprep.subr.bf16.mxu0 0
        %5745 = vmatpush1.bf16.msra.mxu0 %v5722
        %5746 = vmatprep.subr.bf16.mxu0 0
        %5747 = vmatpush1.bf16.msra.mxu0 %v5723
        %5748 = vmatprep.subr.bf16.mxu0 0
        %5749 = vmatpush1.bf16.msra.mxu0 %v5724
        %5750 = vmatprep.subr.bf16.mxu0 0
        %5751 = vmatpush1.bf16.msra.mxu0 %v5725
        %5752 = vmatprep.subr.bf16.mxu0 0
        %5753 = vmatpush1.bf16.msra.mxu0 %v5726
        %5754 = vmatprep.subr.bf16.mxu0 0
        %5755 = vmatpush1.bf16.msra.mxu0 %v5727
        %5756 = vmatprep.subr.bf16.mxu0 0
        %5757 = vmatpush1.bf16.msra.mxu0 %v5728
        %5758 = vmatprep.subr.bf16.mxu0 0
        %5759 = vmatpush1.bf16.msra.mxu0 %v5729
        %5760 = vmatprep.subr.bf16.mxu0 0
        %5761 = vmatpush1.bf16.msra.mxu0 0
        %5762 = vmatprep.subr.bf16.mxu0 0
        %5763 = vmatpush1.bf16.msra.mxu0 0
        %5764 = vmatprep.subr.bf16.mxu0 0
        %5765 = vmatpush1.bf16.msra.mxu0 0
        %5766 = vmatprep.subr.bf16.mxu0 0
        %5767 = vmatpush1.bf16.msra.mxu0 0
        %5768 = vmatprep.subr.bf16.mxu0 0
        %5769 = vmatpush1.bf16.msra.mxu0 0
        %5770 = vmatprep.subr.bf16.mxu0 0
        %5771 = vmatpush1.bf16.msra.mxu0 0
        %5772 = vmatprep.subr.bf16.mxu0 0
        %5773 = vmatpush1.bf16.msra.mxu0 0
        %5774 = vmatprep.mubr.bf16.mxu0 %v5740
        %5775 = vmatmul.mubr.bf16.gmra.mrb[0].mxu0 %v5682
        %v5776 = vpop.f32.mrb[0].mxu0
        %v5777 = vadd.f32 0.0, %v5776
        %v5778 = vpop.f32.mrb[0].mxu0
        %v5779 = vpop.f32.mrb[0].mxu0
        %v5780 = vpop.f32.mrb[0].mxu0
        %5781 = vdwg.mxu0
        %v5782 = vadd.f32 %v5660, %v5777
        %s5783 = scalar_lea.vmem %s7, 288
        %v5784 = vld [vmem:[%s5783] sm:$0xf]
        %v5785 = vld [vmem:[%s5783 + $0x4] sm:$0xf]
        %v5786 = vld [vmem:[%s5783 + $0x8] sm:$0xf]
        %v5787 = vld [vmem:[%s5783 + $0xc] sm:$0xf]
        %v5788 = vld [vmem:[%s5783 + $0x10] sm:$0xf]
        %v5789 = vld [vmem:[%s5783 + $0x14] sm:$0xf]
        %v5790 = vld [vmem:[%s5783 + $0x18] sm:$0xf]
        %v5791 = vld [vmem:[%s5783 + $0x1c] sm:$0xf]
        %v5792 = vld [vmem:[%s5783 + $0x20] sm:$0xf]
        %v5793 = vld [vmem:[%s5783 + $0x24] sm:$0xf]
        %v5794 = vld [vmem:[%s5783 + $0x28] sm:$0xf]
        %v5795 = vld [vmem:[%s5783 + $0x2c] sm:$0xf]
        %v5796 = vld [vmem:[%s5783 + $0x30] sm:$0xf]
        %v5797 = vld [vmem:[%s5783 + $0x34] sm:$0xf]
        %v5798 = vld [vmem:[%s5783 + $0x38] sm:$0xf]
        %v5799 = vld [vmem:[%s5783 + $0x3c] sm:$0xf]
        %v5800 = vld [vmem:[%s5783 + $0x40] sm:$0xf]
        %v5801 = vld [vmem:[%s5783 + $0x44] sm:$0xf]
        %v5820 = vunpack.c.l.b16 %v5784
        %v5821 = vunpack.c.l.b16 %v5785
        %v5822 = vunpack.c.l.b16 %v5786
        %v5823 = vunpack.c.l.b16 %v5787
        %v5824 = vunpack.c.l.b16 %v5788
        %v5825 = vunpack.c.l.b16 %v5789
        %v5826 = vunpack.c.l.b16 %v5790
        %v5827 = vunpack.c.l.b16 %v5791
        %v5828 = vunpack.c.l.b16 %v5792
        %v5829 = vunpack.c.l.b16 %v5793
        %v5830 = vunpack.c.l.b16 %v5794
        %v5831 = vunpack.c.l.b16 %v5795
        %v5832 = vunpack.c.l.b16 %v5796
        %v5833 = vunpack.c.l.b16 %v5797
        %v5834 = vunpack.c.l.b16 %v5798
        %v5835 = vunpack.c.l.b16 %v5799
        %v5836 = vunpack.c.l.b16 %v5800
        %v5837 = vunpack.c.l.b16 %v5801
        %v5838 = vpack.c.b16 %v5821, %v5820
        %v5839 = vpack.c.b16 %v5823, %v5822
        %v5840 = vpack.c.b16 %v5825, %v5824
        %v5841 = vpack.c.b16 %v5827, %v5826
        %v5842 = vpack.c.b16 %v5829, %v5828
        %v5843 = vpack.c.b16 %v5831, %v5830
        %v5844 = vpack.c.b16 %v5833, %v5832
        %v5845 = vpack.c.b16 %v5835, %v5834
        %v5846 = vpack.c.b16 %v5837, %v5836
        %v5857 = vsel %vm5377, %v5297, 0
        %5859 = vmatprep.subr.bf16.mxu0 0
        %5860 = vmatpush1.bf16.msra.mxu0 %v5838
        %5861 = vmatprep.subr.bf16.mxu0 0
        %5862 = vmatpush1.bf16.msra.mxu0 %v5839
        %5863 = vmatprep.subr.bf16.mxu0 0
        %5864 = vmatpush1.bf16.msra.mxu0 %v5840
        %5865 = vmatprep.subr.bf16.mxu0 0
        %5866 = vmatpush1.bf16.msra.mxu0 %v5841
        %5867 = vmatprep.subr.bf16.mxu0 0
        %5868 = vmatpush1.bf16.msra.mxu0 %v5842
        %5869 = vmatprep.subr.bf16.mxu0 0
        %5870 = vmatpush1.bf16.msra.mxu0 %v5843
        %5871 = vmatprep.subr.bf16.mxu0 0
        %5872 = vmatpush1.bf16.msra.mxu0 %v5844
        %5873 = vmatprep.subr.bf16.mxu0 0
        %5874 = vmatpush1.bf16.msra.mxu0 %v5845
        %5875 = vmatprep.subr.bf16.mxu0 0
        %5876 = vmatpush1.bf16.msra.mxu0 %v5846
        %5877 = vmatprep.subr.bf16.mxu0 0
        %5878 = vmatpush1.bf16.msra.mxu0 0
        %5879 = vmatprep.subr.bf16.mxu0 0
        %5880 = vmatpush1.bf16.msra.mxu0 0
        %5881 = vmatprep.subr.bf16.mxu0 0
        %5882 = vmatpush1.bf16.msra.mxu0 0
        %5883 = vmatprep.subr.bf16.mxu0 0
        %5884 = vmatpush1.bf16.msra.mxu0 0
        %5885 = vmatprep.subr.bf16.mxu0 0
        %5886 = vmatpush1.bf16.msra.mxu0 0
        %5887 = vmatprep.subr.bf16.mxu0 0
        %5888 = vmatpush1.bf16.msra.mxu0 0
        %5889 = vmatprep.subr.bf16.mxu0 0
        %5890 = vmatpush1.bf16.msra.mxu0 0
        %5891 = vmatprep.mubr.bf16.mxu0 %v5857
        %5892 = vmatmul.mubr.bf16.gmra.mrb[0].mxu0 %v5296
        %v5893 = vpop.f32.mrb[0].mxu0
        %v5894 = vadd.f32 0.0, %v5893
        %v5895 = vpop.f32.mrb[0].mxu0
        %v5896 = vpop.f32.mrb[0].mxu0
        %v5897 = vpop.f32.mrb[0].mxu0
        %5898 = vdwg.mxu0
        %v5899 = vadd.f32 %v5782, %v5894
        %v5900 = vmax.f32 %v5899, 0.0
        %v5901 = vpack.c.bf16 %v5900, %v5900
        %v5902 = vld [vmem:[%s9] sm:$0xf]
        %v5903 = vld [vmem:[%s9 + $0x4] sm:$0xf]
        %v5904 = vld [vmem:[%s9 + $0x8] sm:$0xf]
        %v5905 = vld [vmem:[%s9 + $0xc] sm:$0xf]
        %v5906 = vld [vmem:[%s9 + $0x10] sm:$0xf]
        %v5907 = vld [vmem:[%s9 + $0x14] sm:$0xf]
        %v5908 = vld [vmem:[%s9 + $0x18] sm:$0xf]
        %v5909 = vld [vmem:[%s9 + $0x1c] sm:$0xf]
        %v5910 = vld [vmem:[%s9 + $0x20] sm:$0xf]
        %v5911 = vld [vmem:[%s9 + $0x24] sm:$0xf]
        %v5912 = vld [vmem:[%s9 + $0x28] sm:$0xf]
        %v5913 = vld [vmem:[%s9 + $0x2c] sm:$0xf]
        %v5914 = vld [vmem:[%s9 + $0x30] sm:$0xf]
        %v5915 = vld [vmem:[%s9 + $0x34] sm:$0xf]
        %v5916 = vld [vmem:[%s9 + $0x38] sm:$0xf]
        %v5917 = vld [vmem:[%s9 + $0x3c] sm:$0xf]
        %v5918 = vld [vmem:[%s10] sm:$0x1]
        %v5920 = vlaneseq
        %v5921 = vshrl.u32 %v5920, 7
        %v5922 = vsub.s32 0, %v5921
        %v5923 = vrot.slane %v5918, %v5922
        %v5941 = vunpack.c.l.b16 %v5902
        %v5942 = vunpack.c.l.b16 %v5903
        %v5943 = vunpack.c.l.b16 %v5904
        %v5944 = vunpack.c.l.b16 %v5905
        %v5945 = vunpack.c.l.b16 %v5906
        %v5946 = vunpack.c.l.b16 %v5907
        %v5947 = vunpack.c.l.b16 %v5908
        %v5948 = vunpack.c.l.b16 %v5909
        %v5949 = vunpack.c.l.b16 %v5910
        %v5950 = vunpack.c.l.b16 %v5911
        %v5951 = vunpack.c.l.b16 %v5912
        %v5952 = vunpack.c.l.b16 %v5913
        %v5953 = vunpack.c.l.b16 %v5914
        %v5954 = vunpack.c.l.b16 %v5915
        %v5955 = vunpack.c.l.b16 %v5916
        %v5956 = vunpack.c.l.b16 %v5917
        %v5957 = vpack.c.b16 %v5942, %v5941
        %v5958 = vpack.c.b16 %v5944, %v5943
        %v5959 = vpack.c.b16 %v5946, %v5945
        %v5960 = vpack.c.b16 %v5948, %v5947
        %v5961 = vpack.c.b16 %v5950, %v5949
        %v5962 = vpack.c.b16 %v5952, %v5951
        %v5963 = vpack.c.b16 %v5954, %v5953
        %v5964 = vpack.c.b16 %v5956, %v5955
        %5973 = vmatprep.subr.bf16.mxu0 0
        %5974 = vmatpush1.bf16.msra.mxu0 %v5957
        %5975 = vmatprep.subr.bf16.mxu0 0
        %5976 = vmatpush1.bf16.msra.mxu0 %v5958
        %5977 = vmatprep.subr.bf16.mxu0 0
        %5978 = vmatpush1.bf16.msra.mxu0 %v5959
        %5979 = vmatprep.subr.bf16.mxu0 0
        %5980 = vmatpush1.bf16.msra.mxu0 %v5960
        %5981 = vmatprep.subr.bf16.mxu0 0
        %5982 = vmatpush1.bf16.msra.mxu0 %v5961
        %5983 = vmatprep.subr.bf16.mxu0 0
        %5984 = vmatpush1.bf16.msra.mxu0 %v5962
        %5985 = vmatprep.subr.bf16.mxu0 0
        %5986 = vmatpush1.bf16.msra.mxu0 %v5963
        %5987 = vmatprep.subr.bf16.mxu0 0
        %5988 = vmatpush1.bf16.msra.mxu0 %v5964
        %5989 = vmatprep.subr.bf16.mxu0 0
        %5990 = vmatpush1.bf16.msra.mxu0 0
        %5991 = vmatprep.subr.bf16.mxu0 0
        %5992 = vmatpush1.bf16.msra.mxu0 0
        %5993 = vmatprep.subr.bf16.mxu0 0
        %5994 = vmatpush1.bf16.msra.mxu0 0
        %5995 = vmatprep.subr.bf16.mxu0 0
        %5996 = vmatpush1.bf16.msra.mxu0 0
        %5997 = vmatprep.subr.bf16.mxu0 0
        %5998 = vmatpush1.bf16.msra.mxu0 0
        %5999 = vmatprep.subr.bf16.mxu0 0
        %6000 = vmatpush1.bf16.msra.mxu0 0
        %6001 = vmatprep.subr.bf16.mxu0 0
        %6002 = vmatpush1.bf16.msra.mxu0 0
        %6003 = vmatprep.subr.bf16.mxu0 0
        %6004 = vmatpush1.bf16.msra.mxu0 0
        %6005 = vmatprep.mubr.bf16.mxu0 0
        %6006 = vmatmul.mubr.bf16.gmra.mrb[0].mxu0 %v5901
        %v6007 = vpop.f32.mrb[0].mxu0
        %v6008 = vadd.f32 %v5923, %v6007
        %v6009 = vpop.f32.mrb[0].mxu0
        %v6010 = vpop.f32.mrb[0].mxu0
        %v6011 = vpop.f32.mrb[0].mxu0
        %6012 = vdwg.mxu0
        %v6013 = vmax.f32 %v6008, 0.0
        %v6014 = vpack.c.bf16 %v6013, %v6013
        %v6015 = vld [vmem:[%s11] sm:$0xf]
        %v6016 = vld [vmem:[%s11 + $0x4] sm:$0xf]
        %v6017 = vld [vmem:[%s11 + $0x8] sm:$0xf]
        %v6018 = vld [vmem:[%s11 + $0xc] sm:$0xf]
        %v6019 = vld [vmem:[%s11 + $0x10] sm:$0xf]
        %v6020 = vld [vmem:[%s11 + $0x14] sm:$0xf]
        %v6021 = vld [vmem:[%s11 + $0x18] sm:$0xf]
        %v6022 = vld [vmem:[%s11 + $0x1c] sm:$0xf]
        %v6023 = vld [vmem:[%s11 + $0x20] sm:$0xf]
        %v6024 = vld [vmem:[%s11 + $0x24] sm:$0xf]
        %v6025 = vld [vmem:[%s11 + $0x28] sm:$0xf]
        %v6026 = vld [vmem:[%s11 + $0x2c] sm:$0xf]
        %v6027 = vld [vmem:[%s11 + $0x30] sm:$0xf]
        %v6028 = vld [vmem:[%s11 + $0x34] sm:$0xf]
        %v6029 = vld [vmem:[%s11 + $0x38] sm:$0xf]
        %v6030 = vld [vmem:[%s11 + $0x3c] sm:$0xf]
        %v6031 = vld [vmem:[%s12] sm:$0x1]
        %v6033 = vlaneseq
        %v6034 = vshrl.u32 %v6033, 7
        %v6035 = vsub.s32 0, %v6034
        %v6036 = vrot.slane %v6031, %v6035
        %v6054 = vunpack.c.l.b16 %v6015
        %v6055 = vunpack.c.l.b16 %v6016
        %v6056 = vunpack.c.l.b16 %v6017
        %v6057 = vunpack.c.l.b16 %v6018
        %v6058 = vunpack.c.l.b16 %v6019
        %v6059 = vunpack.c.l.b16 %v6020
        %v6060 = vunpack.c.l.b16 %v6021
        %v6061 = vunpack.c.l.b16 %v6022
        %v6062 = vunpack.c.l.b16 %v6023
        %v6063 = vunpack.c.l.b16 %v6024
        %v6064 = vunpack.c.l.b16 %v6025
        %v6065 = vunpack.c.l.b16 %v6026
        %v6066 = vunpack.c.l.b16 %v6027
        %v6067 = vunpack.c.l.b16 %v6028
        %v6068 = vunpack.c.l.b16 %v6029
        %v6069 = vunpack.c.l.b16 %v6030
        %v6070 = vpack.c.b16 %v6055, %v6054
        %v6071 = vpack.c.b16 %v6057, %v6056
        %v6072 = vpack.c.b16 %v6059, %v6058
        %v6073 = vpack.c.b16 %v6061, %v6060
        %v6074 = vpack.c.b16 %v6063, %v6062
        %v6075 = vpack.c.b16 %v6065, %v6064
        %v6076 = vpack.c.b16 %v6067, %v6066
        %v6077 = vpack.c.b16 %v6069, %v6068
        %6086 = vmatprep.subr.bf16.mxu0 0
        %6087 = vmatpush1.bf16.msra.mxu0 %v6070
        %6088 = vmatprep.subr.bf16.mxu0 0
        %6089 = vmatpush1.bf16.msra.mxu0 %v6071
        %6090 = vmatprep.subr.bf16.mxu0 0
        %6091 = vmatpush1.bf16.msra.mxu0 %v6072
        %6092 = vmatprep.subr.bf16.mxu0 0
        %6093 = vmatpush1.bf16.msra.mxu0 %v6073
        %6094 = vmatprep.subr.bf16.mxu0 0
        %6095 = vmatpush1.bf16.msra.mxu0 %v6074
        %6096 = vmatprep.subr.bf16.mxu0 0
        %6097 = vmatpush1.bf16.msra.mxu0 %v6075
        %6098 = vmatprep.subr.bf16.mxu0 0
        %6099 = vmatpush1.bf16.msra.mxu0 %v6076
        %6100 = vmatprep.subr.bf16.mxu0 0
        %6101 = vmatpush1.bf16.msra.mxu0 %v6077
        %6102 = vmatprep.subr.bf16.mxu0 0
        %6103 = vmatpush1.bf16.msra.mxu0 0
        %6104 = vmatprep.subr.bf16.mxu0 0
        %6105 = vmatpush1.bf16.msra.mxu0 0
        %6106 = vmatprep.subr.bf16.mxu0 0
        %6107 = vmatpush1.bf16.msra.mxu0 0
        %6108 = vmatprep.subr.bf16.mxu0 0
        %6109 = vmatpush1.bf16.msra.mxu0 0
        %6110 = vmatprep.subr.bf16.mxu0 0
        %6111 = vmatpush1.bf16.msra.mxu0 0
        %6112 = vmatprep.subr.bf16.mxu0 0
        %6113 = vmatpush1.bf16.msra.mxu0 0
        %6114 = vmatprep.subr.bf16.mxu0 0
        %6115 = vmatpush1.bf16.msra.mxu0 0
        %6116 = vmatprep.subr.bf16.mxu0 0
        %6117 = vmatpush1.bf16.msra.mxu0 0
        %6118 = vmatprep.mubr.bf16.mxu0 0
        %6119 = vmatmul.mubr.bf16.gmra.mrb[0].mxu0 %v6014
        %v6120 = vpop.f32.mrb[0].mxu0
        %v6121 = vadd.f32 %v6036, %v6120
        %v6122 = vpop.f32.mrb[0].mxu0
        %v6123 = vpop.f32.mrb[0].mxu0
        %v6124 = vpop.f32.mrb[0].mxu0
        %6125 = vdwg.mxu0
        %6126 = vst [vmem:[%s434] sm:$0xff] %v6121
        %s6127 = sand.u32 %s313, 1
        %s6128 = scalar_lea.sflag [#allocation3], %s6127
        %s6129 = sand.u32 %s313, 1
        %s6130 = smul.addr %s6129, 8
        %s6131 = scalar_lea.vmem [#allocation2], %s6130
        // Predicated region
        $region73: #{net_forward.1} parent=71 // pred_check
          %p6132 = pneg %p323
        $region74: #{net_forward.1} parent=71 // pred_check_branch
          %6134 = sbr.rel (%p6132) target = $region76
        $region75: #{net_forward.1} parent=71 // pred_region
          %s6136 = ssub.s32 128, 128
          %6137 = vsyncadd %s6128, %s6136
          %s6138 = smul.addr %s27, 128
          %s6139 = scalar_lea.hbm %s13, %s6138
          %s6141 = sshll.u32 %s6131, 4
          %s6142 = int_to_ptr.vmem [resolvable:$true] %s6141
          %6144 = dma.vmem_to_hbm [thread:$0]  %s6142, 128, %s6139, %s6128
        $region76: #{net_forward.1} parent=71 // pred_fallthru
          _
      $region72: #{net_forward.1} parent=5 // pred_fallthru
        _
      %p6145 = scmp.le.s32.totalorder 2, %s22
      // Predicated region
      $region77: #{net_forward.1} parent=5 // pred_check
        %p6146 = pneg %p6145
      $region78: #{net_forward.1} parent=5 // pred_check_branch
        %6148 = sbr.rel (%p6146) target = $region80
      $region79: #{net_forward.1} parent=5 // pred_region
        %s6149 = ssub.s32 %s22, 2
        // Predicated region
        $region81: #{net_forward.1} parent=79 // pred_check
          %p6150 = pneg %p329
        $region82: #{net_forward.1} parent=79 // pred_check_branch
          %6152 = sbr.rel (%p6150) target = $region84
        $region83: #{net_forward.1} parent=79 // pred_region
          %s6153 = sand.u32 %s314, 1
          %s6154 = scalar_lea.sflag [#allocation3], %s6153
          %s6155 = sand.u32 %s314, 1
          %s6156 = smul.addr %s6155, 8
          %s6157 = scalar_lea.vmem [#allocation2], %s6156
          %6158 = dma.done %s6154, 128
        $region84: #{net_forward.1} parent=79 // pred_fallthru
          _
      $region80: #{net_forward.1} parent=5 // pred_fallthru
        _
    $region6: #{net_forward.1} parent=1 // loop_footer
      %s26 = sadd.s32 1, %s22
    $region7: #{net_forward.1} parent=1 // loop_footer_branch
      %21 = sbr.rel target = $region3
    $region8: #{net_forward.1} parent=1 // loop_exit
      _
    %6159 = vsyncpa [#allocation3], 1
    %s6160 = scalar_lea.sflag [#allocation3], 1
    %6161 = vsyncpa %s6160, 1

</llo_original>
